<compile_context>
chip_gen: v7x
topology: tpu7x:2x2x1
jax: 0.10.0
libtpu: 0.0.40
codegen_flags: <defaults>
</compile_context>

<pallas_src>
import jax
import jax.numpy as jnp
import numpy as np
from jax import lax
from jax.experimental import pallas as pl
from jax.experimental.pallas import tpu as pltpu

EPS = 1e-5


def _make_conv_stats_kernel(block_d, H, W, c_in, c_out, with_shortcut):
    """3x3x3 conv (padding handled by pre-padded input) as one im2col matmul per tile,
    plus per-block BN statistics and an optional fused 1x1x1 shortcut conv."""
    Mblk = block_d * H * W

    def kernel(*refs):
        if with_shortcut:
            (x_ref, w_ref, wsc_ref, bsc_ref,
             y_ref, stats_ref, sc_ref, col_ref) = refs
        else:
            x_ref, w_ref, y_ref, stats_ref, col_ref = refs
            wsc_ref = bsc_ref = sc_ref = None

        db = pl.program_id(1)
        d0 = pl.multiple_of(db * block_d, block_d)
        # (block_d + 2, H + 2, W + 2, c_in) window of the pre-padded input (halo of 1 in D/H/W).
        xw = x_ref[pl.ds(d0, block_d + 2)]

        # ---- im2col: build the (Mblk, 27 * c_in) slab once ----
        t = 0
        for kd in range(3):
            for kh in range(3):
                for kw in range(3):
                    tap = xw[kd:kd + block_d, kh:kh + H, kw:kw + W, :]
                    col_ref[:, t * c_in:(t + 1) * c_in] = tap.reshape(Mblk, c_in)
                    t += 1
        cols = col_ref[...]

        # ---- conv as a single large-K matmul (K = 27 * c_in) ----
        acc = jnp.dot(cols, w_ref[...], preferred_element_type=jnp.float32)   # (Mblk, c_out) f32
        y_ref[...] = acc

        # ---- BN statistics from the in-VMEM accumulator (block-partial; reduced in wrapper) ----
        stats_ref[0, 0:1, :] = jnp.sum(acc, axis=0, keepdims=True)
        stats_ref[0, 1:2, :] = jnp.sum(acc * acc, axis=0, keepdims=True)

        # ---- fused 1x1x1 shortcut conv: the center tap is column slab 13 of the im2col ----
        if with_shortcut:
            xc = cols[:, 13 * c_in:14 * c_in]
            sc_ref[...] = (jnp.dot(xc, wsc_ref[...], preferred_element_type=jnp.float32)
                           + bsc_ref[...])

    return kernel


def _conv_bn_stats_pass(x_pad, w_flat, wsc=None, bsc=None, *, block_d, compute_dtype):
    """One gridded conv + BN-stats Pallas pass.

    x_pad:  (N, D+2, H+2, W+2, C_in) spatially pre-padded, channels-last, compute_dtype
    w_flat: (27*C_in, C_out)
    Returns y (N*D*H*W, C_out) f32, stats (N*NDB, 2, C_out) f32, [sc (N*D*H*W, C_out) f32].
    """
    N, Dp, Hp, Wp, c_in = x_pad.shape
    D, H, W = Dp - 2, Hp - 2, Wp - 2
    c_out = w_flat.shape[-1]
    with_shortcut = wsc is not None

    assert D % block_d == 0
    ndb = D // block_d
    mblk = block_d * H * W
    m_total = N * D * H * W

    # Merge (N, Dp) so the kernel only deals with rank-4 blocks.
    x_rows = x_pad.reshape(N * Dp, Hp, Wp, c_in)

    kernel = _make_conv_stats_kernel(block_d, H, W, c_in, c_out, with_shortcut)

    in_specs = [
        pl.BlockSpec((Dp, Hp, Wp, c_in), lambda n, db: (n, 0, 0, 0)),
        pl.BlockSpec((27 * c_in, c_out), lambda n, db: (0, 0)),
    ]
    inputs = [x_rows, w_flat]
    if with_shortcut:
        in_specs += [pl.BlockSpec((c_in, c_out), lambda n, db: (0, 0)),
                     pl.BlockSpec((1, c_out), lambda n, db: (0, 0))]
        inputs += [wsc, bsc]

    out_shapes = [jax.ShapeDtypeStruct((m_total, c_out), jnp.float32),
                  jax.ShapeDtypeStruct((N * ndb, 2, c_out), jnp.float32)]
    out_specs = [pl.BlockSpec((mblk, c_out), lambda n, db: (n * ndb + db, 0)),
                 pl.BlockSpec((1, 2, c_out), lambda n, db: (n * ndb + db, 0, 0))]
    if with_shortcut:
        out_shapes.append(jax.ShapeDtypeStruct((m_total, c_out), jnp.float32))
        out_specs.append(pl.BlockSpec((mblk, c_out), lambda n, db: (n * ndb + db, 0)))

    # --- explicit VMEM budget: double-buffered blocks + im2col scratch + temporaries,
    #     2x headroom, capped well below v7x's 64 MiB physical VMEM ---
    isz = jnp.dtype(compute_dtype).itemsize
    est = (2 * Dp * Hp * Wp * c_in * isz                   # pipelined input block
           + 2 * 27 * c_in * c_out * isz                   # weights
           + mblk * 27 * c_in * isz                        # im2col scratch
           + (block_d + 2) * Hp * Wp * c_in * isz          # window temporary
           + (3 + int(with_shortcut)) * 2 * mblk * c_out * 4)  # acc / y / sc blocks
    vmem_limit = int(min(max(2 * est + (4 << 20), 16 << 20), 48 << 20))

    grid_spec = pltpu.PrefetchScalarGridSpec(
        num_scalar_prefetch=0,
        grid=(N, ndb),
        in_specs=in_specs,
        out_specs=tuple(out_specs),
        scratch_shapes=[pltpu.VMEM((mblk, 27 * c_in), compute_dtype)],
    )
    return pl.pallas_call(
        kernel,
        out_shape=tuple(out_shapes),
        grid_spec=grid_spec,
        compiler_params=pltpu.CompilerParams(
            dimension_semantics=("parallel", "parallel"),   # megacore: both TCs on v7x
            vmem_limit_bytes=vmem_limit),
    )(*inputs)


def _bn_scale_shift(stats, count, gamma, beta):
    """Fold training-mode BatchNorm into y * scale + shift (biased variance, eps=1e-5)."""
    s = jnp.sum(stats, axis=0)                            # (2, C): [sum, sum of squares]
    mean = s[0] / count
    var = jnp.maximum(s[1] / count - mean * mean, 0.0)    # guard f32 cancellation
    scale = gamma * lax.rsqrt(var + EPS)
    shift = beta - mean * scale
    return scale, shift


def _largest_divisor_leq(n, k):
    k = max(1, min(n, k))
    for d in range(k, 0, -1):
        if n % d == 0:
            return d
    return 1


def resblock_forward(x_ncdhw, w1, b1, g1, be1, w2, b2, g2, be2, wsc, bsc,
                     *, block_d=None, compute_dtype=jnp.float32):
    """ResBlock forward.  x_ncdhw: (N, Cin, D, H, W); conv weights in DHWIO layout.

    * b1/b2 feed directly into training-mode BatchNorm and are cancelled by the mean
      subtraction, so they are intentionally unused.
    * compute_dtype=jnp.bfloat16 halves HBM traffic and runs the MXU at its bf16 rate on
      v6e/v7x (accumulation and BN stay f32); default stays f32 so the check below is tight.
    """
    del b1, b2  # cancelled by training-mode BatchNorm (see docstring)
    N, Cin, D, H, W = x_ncdhw.shape
    Cout = w1.shape[-1]
    M = N * D * H * W

    if block_d is None:
        # biggest divisor of D whose im2col slab stays around <= 4 MiB
        budget = 4 * 1024 * 1024
        block_d = 1
        for cand in range(1, D + 1):
            if D % cand == 0 and cand * H * W * 27 * max(Cin, Cout) * 4 <= budget:
                block_d = cand
    else:
        block_d = _largest_divisor_leq(D, block_d)

    x = jnp.transpose(x_ncdhw, (0, 2, 3, 4, 1)).astype(jnp.float32)          # NDHWC
    pad3 = ((0, 0), (1, 1), (1, 1), (1, 1), (0, 0))
    x_pad = jnp.pad(x, pad3).astype(compute_dtype)

    w1k = w1.reshape(27 * Cin, Cout).astype(compute_dtype)
    w2k = w2.reshape(27 * Cout, Cout).astype(compute_dtype)

    use_shortcut = (Cin != Cout)
    if use_shortcut:
        wsck = wsc.reshape(Cin, Cout).astype(compute_dtype)
        bsck = bsc.reshape(1, Cout).astype(jnp.float32)
        y1, stats1, identity = _conv_bn_stats_pass(
            x_pad, w1k, wsck, bsck, block_d=block_d, compute_dtype=compute_dtype)
    else:
        y1, stats1 = _conv_bn_stats_pass(
            x_pad, w1k, block_d=block_d, compute_dtype=compute_dtype)
        identity = x.reshape(M, Cin)                       # identity path (Cin == Cout)

    # BN1 (batch stats) folded into scale+shift, then ReLU; re-pad for conv2.
    scale1, shift1 = _bn_scale_shift(stats1, M, g1.astype(jnp.float32), be1.astype(jnp.float32))
    h1 = jnp.maximum(y1 * scale1 + shift1, 0.0)
    h1_pad = jnp.pad(h1.reshape(N, D, H, W, Cout), pad3).astype(compute_dtype)

    y2, stats2 = _conv_bn_stats_pass(h1_pad, w2k, block_d=block_d, compute_dtype=compute_dtype)

    scale2, shift2 = _bn_scale_shift(stats2, M, g2.astype(jnp.float32), be2.astype(jnp.float32))
    out = jnp.maximum(y2 * scale2 + shift2, 0.0) + identity

    out = out.reshape(N, D, H, W, Cout)
    return jnp.transpose(out, (0, 4, 1, 2, 3))                               # back to NCDHW


def ref_forward(x_ncdhw, w1, b1, g1, be1, w2, b2, g2, be2, wsc, bsc):
    """Pure-JAX/XLA reference with exact PyTorch ResBlock semantics (training-mode BN)."""
    N, Cin, D, H, W = x_ncdhw.shape
    Cout = w1.shape[-1]
    x = jnp.transpose(x_ncdhw, (0, 2, 3, 4, 1)).astype(jnp.float32)
    dn = ('NDHWC', 'DHWIO', 'NDHWC')

    def conv3(h, w, b, pad):
        y = lax.conv_general_dilated(h, w, window_strides=(1, 1, 1), padding=pad,
                                     dimension_numbers=dn, precision=lax.Precision.HIGHEST)
        return y + b

    def bn(h, g, be):
        m = jnp.mean(h, axis=(0, 1, 2, 3), keepdims=True)
        v = jnp.mean((h - m) ** 2, axis=(0, 1, 2, 3), keepdims=True)
        return (h - m) * lax.rsqrt(v + EPS) * g + be

    same = ((1, 1), (1, 1), (1, 1))
    h = jax.nn.relu(bn(conv3(x, w1, b1, same), g1, be1))
    h = jax.nn.relu(bn(conv3(h, w2, b2, same), g2, be2))
    identity = conv3(x, wsc, bsc, 'VALID') if Cin != Cout else x
    out = h + identity
    return jnp.transpose(out, (0, 4, 1, 2, 3))


if __name__ == "__main__":
    def make_params(key, cin, cout):
        ks = jax.random.split(key, 10)
        w1 = 0.1 * jax.random.normal(ks[0], (3, 3, 3, cin, cout), jnp.float32)   # DHWIO
        b1 = 0.1 * jax.random.normal(ks[1], (cout,), jnp.float32)
        g1 = 1.0 + 0.1 * jax.random.normal(ks[2], (cout,), jnp.float32)
        be1 = 0.1 * jax.random.normal(ks[3], (cout,), jnp.float32)
        w2 = 0.1 * jax.random.normal(ks[4], (3, 3, 3, cout, cout), jnp.float32)
        b2 = 0.1 * jax.random.normal(ks[5], (cout,), jnp.float32)
        g2 = 1.0 + 0.1 * jax.random.normal(ks[6], (cout,), jnp.float32)
        be2 = 0.1 * jax.random.normal(ks[7], (cout,), jnp.float32)
        wsc = 0.1 * jax.random.normal(ks[8], (1, 1, 1, cin, cout), jnp.float32)  # 1x1x1 shortcut
        bsc = 0.1 * jax.random.normal(ks[9], (cout,), jnp.float32)
        return (w1, b1, g1, be1, w2, b2, g2, be2, wsc, bsc)

    key = jax.random.PRNGKey(0)
    k_x1, k_p1, k_x2, k_p2 = jax.random.split(key, 4)

    # Case 1: in_channels != out_channels -> 1x1x1 conv shortcut (fused into the conv1 kernel).
    N, Cin, Cout, D, H, W = 2, 4, 8, 8, 8, 8
    x1 = jax.random.normal(k_x1, (N, Cin, D, H, W), jnp.float32)
    p1 = make_params(k_p1, Cin, Cout)
    out1 = jax.block_until_ready(resblock_forward(x1, *p1, block_d=4))   # exercises D tiling
    ref1 = ref_forward(x1, *p1)
    np.testing.assert_allclose(np.asarray(out1), np.asarray(ref1), rtol=5e-3, atol=5e-3)

    # Case 2: in_channels == out_channels -> identity shortcut (matches the PyTorch module).
    Cin2 = Cout2 = 8
    x2 = jax.random.normal(k_x2, (N, Cin2, D, H, W), jnp.float32)
    p2 = make_params(k_p2, Cin2, Cout2)
    out2 = jax.block_until_ready(resblock_forward(x2, *p2))
    ref2 = ref_forward(x2, *p2)
    np.testing.assert_allclose(np.asarray(out2), np.asarray(ref2), rtol=5e-3, atol=5e-3)

    print("KERNEL_OK")
</pallas_src>

<mosaic_0001>
module attributes {stable_mosaic.version = 11 : i64} {
  func.func @kernel(%arg0: i32, %arg1: i32, %arg2: memref<10x10x10x4xf32, #tpu.memory_space<vmem>>, %arg3: memref<108x8xf32, #tpu.memory_space<vmem>>, %arg4: memref<4x8xf32, #tpu.memory_space<vmem>>, %arg5: memref<1x8xf32, #tpu.memory_space<vmem>>, %arg6: memref<256x8xf32, #tpu.memory_space<vmem>>, %arg7: memref<1x2x8xf32, #tpu.memory_space<vmem>>, %arg8: memref<256x8xf32, #tpu.memory_space<vmem>>, %arg9: memref<256x108xf32, #tpu.memory_space<vmem>>) attributes {dimension_semantics = [#tpu.dimension_semantics<parallel>, #tpu.dimension_semantics<parallel>], iteration_bounds = array<i64: 2, 2>, scalar_prefetch = 0 : i64, scratch_operands = 1 : i64, tpu.core_type = #tpu.core_type<tc>, window_params = [{transform_indices = @transform_0, window_bounds = array<i64: 10, 10, 10, 4>}, {pipeline_mode = #tpu.pipeline_mode<synchronous>, transform_indices = @transform_1, window_bounds = array<i64: 108, 8>}, {pipeline_mode = #tpu.pipeline_mode<synchronous>, transform_indices = @transform_2, window_bounds = array<i64: 4, 8>}, {pipeline_mode = #tpu.pipeline_mode<synchronous>, transform_indices = @transform_3, window_bounds = array<i64: 1, 8>}, {transform_indices = @transform_4, window_bounds = array<i64: 256, 8>}, {transform_indices = @transform_5, window_bounds = array<i64: 1, 2, 8>}, {transform_indices = @transform_6, window_bounds = array<i64: 256, 8>}]} {
    %c4_i32 = arith.constant 4 : i32
    %0 = arith.muli %arg1, %c4_i32 : i32
    %1 = tpu.assume_multiple %0, 4 : i32
    %2 = arith.index_cast %1 : i32 to index
    %c0 = arith.constant 0 : index
    %c0_0 = arith.constant 0 : index
    %c0_1 = arith.constant 0 : index
    %3 = vector.load %arg2[%2, %c0, %c0_0, %c0_1] : memref<10x10x10x4xf32, #tpu.memory_space<vmem>>, vector<6x10x10x4xf32>
    %4 = vector.extract_strided_slice %3 {offsets = [0, 0, 0, 0], sizes = [4, 8, 8, 4], strides = [1, 1, 1, 1]} : vector<6x10x10x4xf32> to vector<4x8x8x4xf32>
    %5 = vector.shape_cast %4 : vector<4x8x8x4xf32> to vector<256x4xf32>
    %c0_2 = arith.constant 0 : index
    %c0_3 = arith.constant 0 : index
    %6 = vector.load %arg9[%c0_2, %c0_3] : memref<256x108xf32, #tpu.memory_space<vmem>>, vector<256x4xf32>
    tpu.vector_store %arg9[%c0_2, %c0_3], %5 {strides = array<i32>} : memref<256x108xf32, #tpu.memory_space<vmem>>, vector<256x4xf32>,
    %7 = vector.extract_strided_slice %3 {offsets = [0, 0, 1, 0], sizes = [4, 8, 8, 4], strides = [1, 1, 1, 1]} : vector<6x10x10x4xf32> to vector<4x8x8x4xf32>
    %8 = vector.shape_cast %7 : vector<4x8x8x4xf32> to vector<256x4xf32>
    %c0_4 = arith.constant 0 : index
    %c4 = arith.constant 4 : index
    %9 = vector.load %arg9[%c0_4, %c4] : memref<256x108xf32, #tpu.memory_space<vmem>>, vector<256x4xf32>
    tpu.vector_store %arg9[%c0_4, %c4], %8 {strides = array<i32>} : memref<256x108xf32, #tpu.memory_space<vmem>>, vector<256x4xf32>,
    %10 = vector.extract_strided_slice %3 {offsets = [0, 0, 2, 0], sizes = [4, 8, 8, 4], strides = [1, 1, 1, 1]} : vector<6x10x10x4xf32> to vector<4x8x8x4xf32>
    %11 = vector.shape_cast %10 : vector<4x8x8x4xf32> to vector<256x4xf32>
    %c0_5 = arith.constant 0 : index
    %c8 = arith.constant 8 : index
    %12 = vector.load %arg9[%c0_5, %c8] : memref<256x108xf32, #tpu.memory_space<vmem>>, vector<256x4xf32>
    tpu.vector_store %arg9[%c0_5, %c8], %11 {strides = array<i32>} : memref<256x108xf32, #tpu.memory_space<vmem>>, vector<256x4xf32>,
    %13 = vector.extract_strided_slice %3 {offsets = [0, 1, 0, 0], sizes = [4, 8, 8, 4], strides = [1, 1, 1, 1]} : vector<6x10x10x4xf32> to vector<4x8x8x4xf32>
    %14 = vector.shape_cast %13 : vector<4x8x8x4xf32> to vector<256x4xf32>
    %c0_6 = arith.constant 0 : index
    %c12 = arith.constant 12 : index
    %15 = vector.load %arg9[%c0_6, %c12] : memref<256x108xf32, #tpu.memory_space<vmem>>, vector<256x4xf32>
    tpu.vector_store %arg9[%c0_6, %c12], %14 {strides = array<i32>} : memref<256x108xf32, #tpu.memory_space<vmem>>, vector<256x4xf32>,
    %16 = vector.extract_strided_slice %3 {offsets = [0, 1, 1, 0], sizes = [4, 8, 8, 4], strides = [1, 1, 1, 1]} : vector<6x10x10x4xf32> to vector<4x8x8x4xf32>
    %17 = vector.shape_cast %16 : vector<4x8x8x4xf32> to vector<256x4xf32>
    %c0_7 = arith.constant 0 : index
    %c16 = arith.constant 16 : index
    %18 = vector.load %arg9[%c0_7, %c16] : memref<256x108xf32, #tpu.memory_space<vmem>>, vector<256x4xf32>
    tpu.vector_store %arg9[%c0_7, %c16], %17 {strides = array<i32>} : memref<256x108xf32, #tpu.memory_space<vmem>>, vector<256x4xf32>,
    %19 = vector.extract_strided_slice %3 {offsets = [0, 1, 2, 0], sizes = [4, 8, 8, 4], strides = [1, 1, 1, 1]} : vector<6x10x10x4xf32> to vector<4x8x8x4xf32>
    %20 = vector.shape_cast %19 : vector<4x8x8x4xf32> to vector<256x4xf32>
    %c0_8 = arith.constant 0 : index
    %c20 = arith.constant 20 : index
    %21 = vector.load %arg9[%c0_8, %c20] : memref<256x108xf32, #tpu.memory_space<vmem>>, vector<256x4xf32>
    tpu.vector_store %arg9[%c0_8, %c20], %20 {strides = array<i32>} : memref<256x108xf32, #tpu.memory_space<vmem>>, vector<256x4xf32>,
    %22 = vector.extract_strided_slice %3 {offsets = [0, 2, 0, 0], sizes = [4, 8, 8, 4], strides = [1, 1, 1, 1]} : vector<6x10x10x4xf32> to vector<4x8x8x4xf32>
    %23 = vector.shape_cast %22 : vector<4x8x8x4xf32> to vector<256x4xf32>
    %c0_9 = arith.constant 0 : index
    %c24 = arith.constant 24 : index
    %24 = vector.load %arg9[%c0_9, %c24] : memref<256x108xf32, #tpu.memory_space<vmem>>, vector<256x4xf32>
    tpu.vector_store %arg9[%c0_9, %c24], %23 {strides = array<i32>} : memref<256x108xf32, #tpu.memory_space<vmem>>, vector<256x4xf32>,
    %25 = vector.extract_strided_slice %3 {offsets = [0, 2, 1, 0], sizes = [4, 8, 8, 4], strides = [1, 1, 1, 1]} : vector<6x10x10x4xf32> to vector<4x8x8x4xf32>
    %26 = vector.shape_cast %25 : vector<4x8x8x4xf32> to vector<256x4xf32>
    %c0_10 = arith.constant 0 : index
    %c28 = arith.constant 28 : index
    %27 = vector.load %arg9[%c0_10, %c28] : memref<256x108xf32, #tpu.memory_space<vmem>>, vector<256x4xf32>
    tpu.vector_store %arg9[%c0_10, %c28], %26 {strides = array<i32>} : memref<256x108xf32, #tpu.memory_space<vmem>>, vector<256x4xf32>,
    %28 = vector.extract_strided_slice %3 {offsets = [0, 2, 2, 0], sizes = [4, 8, 8, 4], strides = [1, 1, 1, 1]} : vector<6x10x10x4xf32> to vector<4x8x8x4xf32>
    %29 = vector.shape_cast %28 : vector<4x8x8x4xf32> to vector<256x4xf32>
    %c0_11 = arith.constant 0 : index
    %c32 = arith.constant 32 : index
    %30 = vector.load %arg9[%c0_11, %c32] : memref<256x108xf32, #tpu.memory_space<vmem>>, vector<256x4xf32>
    tpu.vector_store %arg9[%c0_11, %c32], %29 {strides = array<i32>} : memref<256x108xf32, #tpu.memory_space<vmem>>, vector<256x4xf32>,
    %31 = vector.extract_strided_slice %3 {offsets = [1, 0, 0, 0], sizes = [4, 8, 8, 4], strides = [1, 1, 1, 1]} : vector<6x10x10x4xf32> to vector<4x8x8x4xf32>
    %32 = vector.shape_cast %31 : vector<4x8x8x4xf32> to vector<256x4xf32>
    %c0_12 = arith.constant 0 : index
    %c36 = arith.constant 36 : index
    %33 = vector.load %arg9[%c0_12, %c36] : memref<256x108xf32, #tpu.memory_space<vmem>>, vector<256x4xf32>
    tpu.vector_store %arg9[%c0_12, %c36], %32 {strides = array<i32>} : memref<256x108xf32, #tpu.memory_space<vmem>>, vector<256x4xf32>,
    %34 = vector.extract_strided_slice %3 {offsets = [1, 0, 1, 0], sizes = [4, 8, 8, 4], strides = [1, 1, 1, 1]} : vector<6x10x10x4xf32> to vector<4x8x8x4xf32>
    %35 = vector.shape_cast %34 : vector<4x8x8x4xf32> to vector<256x4xf32>
    %c0_13 = arith.constant 0 : index
    %c40 = arith.constant 40 : index
    %36 = vector.load %arg9[%c0_13, %c40] : memref<256x108xf32, #tpu.memory_space<vmem>>, vector<256x4xf32>
    tpu.vector_store %arg9[%c0_13, %c40], %35 {strides = array<i32>} : memref<256x108xf32, #tpu.memory_space<vmem>>, vector<256x4xf32>,
    %37 = vector.extract_strided_slice %3 {offsets = [1, 0, 2, 0], sizes = [4, 8, 8, 4], strides = [1, 1, 1, 1]} : vector<6x10x10x4xf32> to vector<4x8x8x4xf32>
    %38 = vector.shape_cast %37 : vector<4x8x8x4xf32> to vector<256x4xf32>
    %c0_14 = arith.constant 0 : index
    %c44 = arith.constant 44 : index
    %39 = vector.load %arg9[%c0_14, %c44] : memref<256x108xf32, #tpu.memory_space<vmem>>, vector<256x4xf32>
    tpu.vector_store %arg9[%c0_14, %c44], %38 {strides = array<i32>} : memref<256x108xf32, #tpu.memory_space<vmem>>, vector<256x4xf32>,
    %40 = vector.extract_strided_slice %3 {offsets = [1, 1, 0, 0], sizes = [4, 8, 8, 4], strides = [1, 1, 1, 1]} : vector<6x10x10x4xf32> to vector<4x8x8x4xf32>
    %41 = vector.shape_cast %40 : vector<4x8x8x4xf32> to vector<256x4xf32>
    %c0_15 = arith.constant 0 : index
    %c48 = arith.constant 48 : index
    %42 = vector.load %arg9[%c0_15, %c48] : memref<256x108xf32, #tpu.memory_space<vmem>>, vector<256x4xf32>
    tpu.vector_store %arg9[%c0_15, %c48], %41 {strides = array<i32>} : memref<256x108xf32, #tpu.memory_space<vmem>>, vector<256x4xf32>,
    %43 = vector.extract_strided_slice %3 {offsets = [1, 1, 1, 0], sizes = [4, 8, 8, 4], strides = [1, 1, 1, 1]} : vector<6x10x10x4xf32> to vector<4x8x8x4xf32>
    %44 = vector.shape_cast %43 : vector<4x8x8x4xf32> to vector<256x4xf32>
    %c0_16 = arith.constant 0 : index
    %c52 = arith.constant 52 : index
    %45 = vector.load %arg9[%c0_16, %c52] : memref<256x108xf32, #tpu.memory_space<vmem>>, vector<256x4xf32>
    tpu.vector_store %arg9[%c0_16, %c52], %44 {strides = array<i32>} : memref<256x108xf32, #tpu.memory_space<vmem>>, vector<256x4xf32>,
    %46 = vector.extract_strided_slice %3 {offsets = [1, 1, 2, 0], sizes = [4, 8, 8, 4], strides = [1, 1, 1, 1]} : vector<6x10x10x4xf32> to vector<4x8x8x4xf32>
    %47 = vector.shape_cast %46 : vector<4x8x8x4xf32> to vector<256x4xf32>
    %c0_17 = arith.constant 0 : index
    %c56 = arith.constant 56 : index
    %48 = vector.load %arg9[%c0_17, %c56] : memref<256x108xf32, #tpu.memory_space<vmem>>, vector<256x4xf32>
    tpu.vector_store %arg9[%c0_17, %c56], %47 {strides = array<i32>} : memref<256x108xf32, #tpu.memory_space<vmem>>, vector<256x4xf32>,
    %49 = vector.extract_strided_slice %3 {offsets = [1, 2, 0, 0], sizes = [4, 8, 8, 4], strides = [1, 1, 1, 1]} : vector<6x10x10x4xf32> to vector<4x8x8x4xf32>
    %50 = vector.shape_cast %49 : vector<4x8x8x4xf32> to vector<256x4xf32>
    %c0_18 = arith.constant 0 : index
    %c60 = arith.constant 60 : index
    %51 = vector.load %arg9[%c0_18, %c60] : memref<256x108xf32, #tpu.memory_space<vmem>>, vector<256x4xf32>
    tpu.vector_store %arg9[%c0_18, %c60], %50 {strides = array<i32>} : memref<256x108xf32, #tpu.memory_space<vmem>>, vector<256x4xf32>,
    %52 = vector.extract_strided_slice %3 {offsets = [1, 2, 1, 0], sizes = [4, 8, 8, 4], strides = [1, 1, 1, 1]} : vector<6x10x10x4xf32> to vector<4x8x8x4xf32>
    %53 = vector.shape_cast %52 : vector<4x8x8x4xf32> to vector<256x4xf32>
    %c0_19 = arith.constant 0 : index
    %c64 = arith.constant 64 : index
    %54 = vector.load %arg9[%c0_19, %c64] : memref<256x108xf32, #tpu.memory_space<vmem>>, vector<256x4xf32>
    tpu.vector_store %arg9[%c0_19, %c64], %53 {strides = array<i32>} : memref<256x108xf32, #tpu.memory_space<vmem>>, vector<256x4xf32>,
    %55 = vector.extract_strided_slice %3 {offsets = [1, 2, 2, 0], sizes = [4, 8, 8, 4], strides = [1, 1, 1, 1]} : vector<6x10x10x4xf32> to vector<4x8x8x4xf32>
    %56 = vector.shape_cast %55 : vector<4x8x8x4xf32> to vector<256x4xf32>
    %c0_20 = arith.constant 0 : index
    %c68 = arith.constant 68 : index
    %57 = vector.load %arg9[%c0_20, %c68] : memref<256x108xf32, #tpu.memory_space<vmem>>, vector<256x4xf32>
    tpu.vector_store %arg9[%c0_20, %c68], %56 {strides = array<i32>} : memref<256x108xf32, #tpu.memory_space<vmem>>, vector<256x4xf32>,
    %58 = vector.extract_strided_slice %3 {offsets = [2, 0, 0, 0], sizes = [4, 8, 8, 4], strides = [1, 1, 1, 1]} : vector<6x10x10x4xf32> to vector<4x8x8x4xf32>
    %59 = vector.shape_cast %58 : vector<4x8x8x4xf32> to vector<256x4xf32>
    %c0_21 = arith.constant 0 : index
    %c72 = arith.constant 72 : index
    %60 = vector.load %arg9[%c0_21, %c72] : memref<256x108xf32, #tpu.memory_space<vmem>>, vector<256x4xf32>
    tpu.vector_store %arg9[%c0_21, %c72], %59 {strides = array<i32>} : memref<256x108xf32, #tpu.memory_space<vmem>>, vector<256x4xf32>,
    %61 = vector.extract_strided_slice %3 {offsets = [2, 0, 1, 0], sizes = [4, 8, 8, 4], strides = [1, 1, 1, 1]} : vector<6x10x10x4xf32> to vector<4x8x8x4xf32>
    %62 = vector.shape_cast %61 : vector<4x8x8x4xf32> to vector<256x4xf32>
    %c0_22 = arith.constant 0 : index
    %c76 = arith.constant 76 : index
    %63 = vector.load %arg9[%c0_22, %c76] : memref<256x108xf32, #tpu.memory_space<vmem>>, vector<256x4xf32>
    tpu.vector_store %arg9[%c0_22, %c76], %62 {strides = array<i32>} : memref<256x108xf32, #tpu.memory_space<vmem>>, vector<256x4xf32>,
    %64 = vector.extract_strided_slice %3 {offsets = [2, 0, 2, 0], sizes = [4, 8, 8, 4], strides = [1, 1, 1, 1]} : vector<6x10x10x4xf32> to vector<4x8x8x4xf32>
    %65 = vector.shape_cast %64 : vector<4x8x8x4xf32> to vector<256x4xf32>
    %c0_23 = arith.constant 0 : index
    %c80 = arith.constant 80 : index
    %66 = vector.load %arg9[%c0_23, %c80] : memref<256x108xf32, #tpu.memory_space<vmem>>, vector<256x4xf32>
    tpu.vector_store %arg9[%c0_23, %c80], %65 {strides = array<i32>} : memref<256x108xf32, #tpu.memory_space<vmem>>, vector<256x4xf32>,
    %67 = vector.extract_strided_slice %3 {offsets = [2, 1, 0, 0], sizes = [4, 8, 8, 4], strides = [1, 1, 1, 1]} : vector<6x10x10x4xf32> to vector<4x8x8x4xf32>
    %68 = vector.shape_cast %67 : vector<4x8x8x4xf32> to vector<256x4xf32>
    %c0_24 = arith.constant 0 : index
    %c84 = arith.constant 84 : index
    %69 = vector.load %arg9[%c0_24, %c84] : memref<256x108xf32, #tpu.memory_space<vmem>>, vector<256x4xf32>
    tpu.vector_store %arg9[%c0_24, %c84], %68 {strides = array<i32>} : memref<256x108xf32, #tpu.memory_space<vmem>>, vector<256x4xf32>,
    %70 = vector.extract_strided_slice %3 {offsets = [2, 1, 1, 0], sizes = [4, 8, 8, 4], strides = [1, 1, 1, 1]} : vector<6x10x10x4xf32> to vector<4x8x8x4xf32>
    %71 = vector.shape_cast %70 : vector<4x8x8x4xf32> to vector<256x4xf32>
    %c0_25 = arith.constant 0 : index
    %c88 = arith.constant 88 : index
    %72 = vector.load %arg9[%c0_25, %c88] : memref<256x108xf32, #tpu.memory_space<vmem>>, vector<256x4xf32>
    tpu.vector_store %arg9[%c0_25, %c88], %71 {strides = array<i32>} : memref<256x108xf32, #tpu.memory_space<vmem>>, vector<256x4xf32>,
    %73 = vector.extract_strided_slice %3 {offsets = [2, 1, 2, 0], sizes = [4, 8, 8, 4], strides = [1, 1, 1, 1]} : vector<6x10x10x4xf32> to vector<4x8x8x4xf32>
    %74 = vector.shape_cast %73 : vector<4x8x8x4xf32> to vector<256x4xf32>
    %c0_26 = arith.constant 0 : index
    %c92 = arith.constant 92 : index
    %75 = vector.load %arg9[%c0_26, %c92] : memref<256x108xf32, #tpu.memory_space<vmem>>, vector<256x4xf32>
    tpu.vector_store %arg9[%c0_26, %c92], %74 {strides = array<i32>} : memref<256x108xf32, #tpu.memory_space<vmem>>, vector<256x4xf32>,
    %76 = vector.extract_strided_slice %3 {offsets = [2, 2, 0, 0], sizes = [4, 8, 8, 4], strides = [1, 1, 1, 1]} : vector<6x10x10x4xf32> to vector<4x8x8x4xf32>
    %77 = vector.shape_cast %76 : vector<4x8x8x4xf32> to vector<256x4xf32>
    %c0_27 = arith.constant 0 : index
    %c96 = arith.constant 96 : index
    %78 = vector.load %arg9[%c0_27, %c96] : memref<256x108xf32, #tpu.memory_space<vmem>>, vector<256x4xf32>
    tpu.vector_store %arg9[%c0_27, %c96], %77 {strides = array<i32>} : memref<256x108xf32, #tpu.memory_space<vmem>>, vector<256x4xf32>,
    %79 = vector.extract_strided_slice %3 {offsets = [2, 2, 1, 0], sizes = [4, 8, 8, 4], strides = [1, 1, 1, 1]} : vector<6x10x10x4xf32> to vector<4x8x8x4xf32>
    %80 = vector.shape_cast %79 : vector<4x8x8x4xf32> to vector<256x4xf32>
    %c0_28 = arith.constant 0 : index
    %c100 = arith.constant 100 : index
    %81 = vector.load %arg9[%c0_28, %c100] : memref<256x108xf32, #tpu.memory_space<vmem>>, vector<256x4xf32>
    tpu.vector_store %arg9[%c0_28, %c100], %80 {strides = array<i32>} : memref<256x108xf32, #tpu.memory_space<vmem>>, vector<256x4xf32>,
    %82 = vector.extract_strided_slice %3 {offsets = [2, 2, 2, 0], sizes = [4, 8, 8, 4], strides = [1, 1, 1, 1]} : vector<6x10x10x4xf32> to vector<4x8x8x4xf32>
    %83 = vector.shape_cast %82 : vector<4x8x8x4xf32> to vector<256x4xf32>
    %c0_29 = arith.constant 0 : index
    %c104 = arith.constant 104 : index
    %84 = vector.load %arg9[%c0_29, %c104] : memref<256x108xf32, #tpu.memory_space<vmem>>, vector<256x4xf32>
    tpu.vector_store %arg9[%c0_29, %c104], %83 {strides = array<i32>} : memref<256x108xf32, #tpu.memory_space<vmem>>, vector<256x4xf32>,
    %c0_30 = arith.constant 0 : index
    %c0_31 = arith.constant 0 : index
    %85 = vector.load %arg9[%c0_30, %c0_31] : memref<256x108xf32, #tpu.memory_space<vmem>>, vector<256x108xf32>
    %c0_32 = arith.constant 0 : index
    %c0_33 = arith.constant 0 : index
    %86 = vector.load %arg3[%c0_32, %c0_33] : memref<108x8xf32, #tpu.memory_space<vmem>>, vector<108x8xf32>
    %cst = arith.constant dense<0.000000e+00> : vector<256x8xf32>
    %87 = tpu.matmul %85, %86, %cst {dimension_numbers = #tpu.dot_dimension_numbers<[1], [0], [0], [1], [0, 0, 1, 1], [], []>} : vector<256x108xf32>, vector<108x8xf32>, vector<256x8xf32> -> vector<256x8xf32>
    %c0_34 = arith.constant 0 : index
    %c0_35 = arith.constant 0 : index
    %88 = vector.load %arg6[%c0_34, %c0_35] : memref<256x8xf32, #tpu.memory_space<vmem>>, vector<256x8xf32>
    tpu.vector_store %arg6[%c0_34, %c0_35], %87 {strides = array<i32>} : memref<256x8xf32, #tpu.memory_space<vmem>>, vector<256x8xf32>,
    %cst_36 = arith.constant dense<0.000000e+00> : vector<8xf32>
    %89 = vector.multi_reduction <add>, %87, %cst_36 [0] : vector<256x8xf32> to vector<8xf32>
    %90 = vector.shape_cast %89 : vector<8xf32> to vector<1x8xf32>
    %c0_37 = arith.constant 0 : index
    %c0_38 = arith.constant 0 : index
    %c0_39 = arith.constant 0 : index
    %91 = vector.load %arg7[%c0_37, %c0_38, %c0_39] : memref<1x2x8xf32, #tpu.memory_space<vmem>>, vector<1x1x8xf32>
    %92 = vector.shape_cast %91 : vector<1x1x8xf32> to vector<1x8xf32>
    %93 = vector.shape_cast %90 : vector<1x8xf32> to vector<1x1x8xf32>
    tpu.vector_store %arg7[%c0_37, %c0_38, %c0_39], %93 {strides = array<i32>} : memref<1x2x8xf32, #tpu.memory_space<vmem>>, vector<1x1x8xf32>,
    %94 = arith.mulf %87, %87 : vector<256x8xf32>
    %cst_40 = arith.constant dense<0.000000e+00> : vector<8xf32>
    %95 = vector.multi_reduction <add>, %94, %cst_40 [0] : vector<256x8xf32> to vector<8xf32>
    %96 = vector.shape_cast %95 : vector<8xf32> to vector<1x8xf32>
    %c0_41 = arith.constant 0 : index
    %c1 = arith.constant 1 : index
    %c0_42 = arith.constant 0 : index
    %97 = vector.load %arg7[%c0_41, %c1, %c0_42] : memref<1x2x8xf32, #tpu.memory_space<vmem>>, vector<1x1x8xf32>
    %98 = vector.shape_cast %97 : vector<1x1x8xf32> to vector<1x8xf32>
    %99 = vector.shape_cast %96 : vector<1x8xf32> to vector<1x1x8xf32>
    tpu.vector_store %arg7[%c0_41, %c1, %c0_42], %99 {strides = array<i32>} : memref<1x2x8xf32, #tpu.memory_space<vmem>>, vector<1x1x8xf32>,
    %100 = vector.extract_strided_slice %85 {offsets = [0, 52], sizes = [256, 4], strides = [1, 1]} : vector<256x108xf32> to vector<256x4xf32>
    %c0_43 = arith.constant 0 : index
    %c0_44 = arith.constant 0 : index
    %101 = vector.load %arg4[%c0_43, %c0_44] : memref<4x8xf32, #tpu.memory_space<vmem>>, vector<4x8xf32>
    %cst_45 = arith.constant dense<0.000000e+00> : vector<256x8xf32>
    %102 = tpu.matmul %100, %101, %cst_45 {dimension_numbers = #tpu.dot_dimension_numbers<[1], [0], [0], [1], [0, 0, 1, 1], [], []>} : vector<256x4xf32>, vector<4x8xf32>, vector<256x8xf32> -> vector<256x8xf32>
    %c0_46 = arith.constant 0 : index
    %c0_47 = arith.constant 0 : index
    %103 = vector.load %arg5[%c0_46, %c0_47] : memref<1x8xf32, #tpu.memory_space<vmem>>, vector<1x8xf32>
    %104 = vector.broadcast %103 : vector<1x8xf32> to vector<256x8xf32>
    %105 = arith.addf %102, %104 : vector<256x8xf32>
    %c0_48 = arith.constant 0 : index
    %c0_49 = arith.constant 0 : index
    %106 = vector.load %arg8[%c0_48, %c0_49] : memref<256x8xf32, #tpu.memory_space<vmem>>, vector<256x8xf32>
    tpu.vector_store %arg8[%c0_48, %c0_49], %105 {strides = array<i32>} : memref<256x8xf32, #tpu.memory_space<vmem>>, vector<256x8xf32>,
    return
  }
  func.func @transform_0(%arg0: i32, %arg1: i32) -> (i32, i32, i32, i32) {
    %c0_i32 = arith.constant 0 : i32
    %c0_i32_0 = arith.constant 0 : i32
    %c0_i32_1 = arith.constant 0 : i32
    %c0_i32_2 = arith.constant 0 : i32
    return %arg0, %c0_i32, %c0_i32_0, %c0_i32_1 : i32, i32, i32, i32
  }
  func.func @transform_1(%arg0: i32, %arg1: i32) -> (i32, i32) {
    %c0_i32 = arith.constant 0 : i32
    %c0_i32_0 = arith.constant 0 : i32
    %c0_i32_1 = arith.constant 0 : i32
    return %c0_i32, %c0_i32_0 : i32, i32
  }
  func.func @transform_2(%arg0: i32, %arg1: i32) -> (i32, i32) {
    %c0_i32 = arith.constant 0 : i32
    %c0_i32_0 = arith.constant 0 : i32
    %c0_i32_1 = arith.constant 0 : i32
    return %c0_i32, %c0_i32_0 : i32, i32
  }
  func.func @transform_3(%arg0: i32, %arg1: i32) -> (i32, i32) {
    %c0_i32 = arith.constant 0 : i32
    %c0_i32_0 = arith.constant 0 : i32
    %c0_i32_1 = arith.constant 0 : i32
    return %c0_i32, %c0_i32_0 : i32, i32
  }
  func.func @transform_4(%arg0: i32, %arg1: i32) -> (i32, i32) {
    %c2_i32 = arith.constant 2 : i32
    %0 = arith.muli %arg0, %c2_i32 : i32
    %1 = arith.addi %0, %arg1 : i32
    %c0_i32 = arith.constant 0 : i32
    %c0_i32_0 = arith.constant 0 : i32
    return %1, %c0_i32 : i32, i32
  }
  func.func @transform_5(%arg0: i32, %arg1: i32) -> (i32, i32, i32) {
    %c2_i32 = arith.constant 2 : i32
    %0 = arith.muli %arg0, %c2_i32 : i32
    %1 = arith.addi %0, %arg1 : i32
    %c0_i32 = arith.constant 0 : i32
    %c0_i32_0 = arith.constant 0 : i32
    %c0_i32_1 = arith.constant 0 : i32
    return %1, %c0_i32, %c0_i32_0 : i32, i32, i32
  }
  func.func @transform_6(%arg0: i32, %arg1: i32) -> (i32, i32) {
    %c2_i32 = arith.constant 2 : i32
    %0 = arith.muli %arg0, %c2_i32 : i32
    %1 = arith.addi %0, %arg1 : i32
    %c0_i32 = arith.constant 0 : i32
    %c0_i32_0 = arith.constant 0 : i32
    return %1, %c0_i32 : i32, i32
  }
}

</mosaic_0001>

<llo_original>
// kernel: tpu_custom_call.1
$region0: #{tpu_custom_call.1}
  #allocation0 [shape = 'u32[]', space=smem, size = 0x4, offset = 0x4, fixed_abs, tag = 'smem constant byte address 0x4 - core index']
  #allocation1 [shape = 'u32[144,128]{1,0:T(1,128)}', space=vmem, size = 0x12000, scoped, tag = 'internal scratch']
  #allocation2 [shape = 'f32[256,108]{1,0:T(8,128)}', space=vmem, size = 0x20000, scoped, tag = 'scratch operand']
  %s0 = inlined_call_operand.vmem [shape: f32[20,10,10,4], index: 0, kind: input, shape index: {}]
  %s1 = inlined_call_operand.vmem [shape: f32[108,8], index: 1, kind: input, shape index: {}]
  %s2 = inlined_call_operand.vmem [shape: f32[4,8], index: 2, kind: input, shape index: {}]
  %s3 = inlined_call_operand.vmem [shape: f32[1,8], index: 3, kind: input, shape index: {}]
  %s4 = inlined_call_operand.vmem [shape: f32[1024,8], index: 4, kind: output, shape index: {0}]
  %s5 = inlined_call_operand.hbm [shape: f32[4,2,8], index: 5, kind: output, shape index: {1}]
  %s6 = inlined_call_operand.vmem [shape: f32[1024,8], index: 6, kind: output, shape index: {2}]
  %7 = xla_tuple %s4, %s5, %s6
  %s8 = sld [smem:[#allocation0]]
  $region65: #{tpu_custom_call.1} parent=0
    _
  %s10 = ssub.s32 1, %s8
  %s11 = scalar_select 0, %s10, %s8
  $region1: #{tpu_custom_call.1} parent=0
    #allocation3 [shape = 'u8[2048]{0}', space=vmem, size = 0x800, scoped, tag = 'output window, operand 1']
    #allocation4 [shape = 's32[2]{0}', space=sflag, size = 0x8, scoped, tag = 'scoped memory for tpu_custom_call.1']
    %12 = vsyncpa [#allocation4], 0
    %s13 = scalar_lea.sflag [#allocation4], 1
    %14 = vsyncpa %s13, 0
    loop: start=0, step=1, limit=6
    $region2: #{tpu_custom_call.1} parent=1 // loop_pre_header
      _
    $region3: #{tpu_custom_call.1} parent=1 // loop_header
      %s16 = sphi 0, %s20
      %p17 = scmp.ge.s32.totalorder %s16, 6
      %s23 = sphi 0, %s35
      %s24 = sphi 0, %s31
      %s25 = sphi 0, %s23
      %s26 = sphi 0, %s24
      %s27 = sphi 0, %s25
      %s28 = sphi 0, %s26
      %s38 = sphi 0, %s40
      %s41 = sphi 0, %s38
      %s42 = sphi 0, %s41
      %s58 = sphi 0, %s42
      %s62 = sphi 0, %s62
      %s64 = sphi 0, %s62
      %s65 = sphi 0, %s64
      %s79 = sphi 0, %s65
      %s83 = sphi 0, %s83
      %s85 = sphi 0, %s83
      %s86 = sphi 0, %s85
      %s100 = sphi 0, %s86
      %s104 = sphi 0, %s104
      %s106 = sphi 0, %s104
      %s107 = sphi 0, %s106
      %s121 = sphi 0, %s107
      %s131 = sphi 0, %s133
      %s134 = sphi 0, %s131
      %s135 = sphi 0, %s134
      %s151 = sphi 0, %s135
      %s161 = sphi 0, %s163
      %s164 = sphi 0, %s161
      %s165 = sphi 0, %s164
      %s181 = sphi 0, %s165
      %s191 = sphi 0, %s193
      %s194 = sphi 0, %s191
      %s195 = sphi 0, %s194
      %s211 = sphi 0, %s195
    $region4: #{tpu_custom_call.1} parent=1 // loop_header_branch
      %19 = sbr.rel (%p17) target = $region8
    $region5: #{tpu_custom_call.1} parent=1 // loop_body
      %s21 = ssub.s32 %s16, 1
      %s22 = ssub.s32 %s16, 2
      %s29 = sadd.s32 1, %s24
      %p30 = scmp.ge.s32.totalorder %s29, 2
      %s31 = scalar_select %p30, 0, %s29
      %s32 = sadd.s32 1, %s23
      %s33 = scalar_select %p30, %s32, %s23
      %p34 = scmp.ge.s32.totalorder %s33, 2
      %s35 = scalar_select %p34, 0, %s33
      %s36 = ssub.s32 %s23, %s35
      %p37 = scmp.eq.s32.totalorder %s36, 0
      %s39 = sadd.s32 %s38, 1
      %s40 = scalar_select %p37, %s38, %s39
      %p43 = pneg %p37
      %p44 = scmp.eq.s32.totalorder %s16, 3
      %p45 = por %p43, %p44
      %p46 = scmp.ne.s32.totalorder %s38, %s41
      %p47 = scmp.eq.s32.totalorder %s16, 0
      %p48 = por %p46, %p47
      %p49 = scmp.ne.s32.totalorder %s38, %s41
      %p50 = scmp.eq.s32.totalorder %s21, 3
      %p51 = por %p49, %p50
      %p52 = scmp.ne.s32.totalorder %s41, %s42
      %p53 = scmp.eq.s32.totalorder %s21, 0
      %p54 = por %p52, %p53
      %p55 = scmp.ne.s32.totalorder %s41, %s42
      %p56 = scmp.eq.s32.totalorder %s22, 3
      %p57 = por %p55, %p56
      %p59 = scmp.ne.s32.totalorder %s42, %s58
      %p60 = scmp.eq.s32.totalorder %s22, 0
      %p61 = por %p59, %p60
      %s63 = sadd.s32 %s62, 1
      %p66 = scmp.eq.s32.totalorder %s16, 3
      %p67 = scmp.ne.s32.totalorder %s62, %s64
      %p68 = scmp.eq.s32.totalorder %s16, 0
      %p69 = por %p67, %p68
      %p70 = scmp.ne.s32.totalorder %s62, %s64
      %p71 = scmp.eq.s32.totalorder %s21, 3
      %p72 = por %p70, %p71
      %p73 = scmp.ne.s32.totalorder %s64, %s65
      %p74 = scmp.eq.s32.totalorder %s21, 0
      %p75 = por %p73, %p74
      %p76 = scmp.ne.s32.totalorder %s64, %s65
      %p77 = scmp.eq.s32.totalorder %s22, 3
      %p78 = por %p76, %p77
      %p80 = scmp.ne.s32.totalorder %s65, %s79
      %p81 = scmp.eq.s32.totalorder %s22, 0
      %p82 = por %p80, %p81
      %s84 = sadd.s32 %s83, 1
      %p87 = scmp.eq.s32.totalorder %s16, 3
      %p88 = scmp.ne.s32.totalorder %s83, %s85
      %p89 = scmp.eq.s32.totalorder %s16, 0
      %p90 = por %p88, %p89
      %p91 = scmp.ne.s32.totalorder %s83, %s85
      %p92 = scmp.eq.s32.totalorder %s21, 3
      %p93 = por %p91, %p92
      %p94 = scmp.ne.s32.totalorder %s85, %s86
      %p95 = scmp.eq.s32.totalorder %s21, 0
      %p96 = por %p94, %p95
      %p97 = scmp.ne.s32.totalorder %s85, %s86
      %p98 = scmp.eq.s32.totalorder %s22, 3
      %p99 = por %p97, %p98
      %p101 = scmp.ne.s32.totalorder %s86, %s100
      %p102 = scmp.eq.s32.totalorder %s22, 0
      %p103 = por %p101, %p102
      %s105 = sadd.s32 %s104, 1
      %p108 = scmp.eq.s32.totalorder %s16, 3
      %p109 = scmp.ne.s32.totalorder %s104, %s106
      %p110 = scmp.eq.s32.totalorder %s16, 0
      %p111 = por %p109, %p110
      %p112 = scmp.ne.s32.totalorder %s104, %s106
      %p113 = scmp.eq.s32.totalorder %s21, 3
      %p114 = por %p112, %p113
      %p115 = scmp.ne.s32.totalorder %s106, %s107
      %p116 = scmp.eq.s32.totalorder %s21, 0
      %p117 = por %p115, %p116
      %p118 = scmp.ne.s32.totalorder %s106, %s107
      %p119 = scmp.eq.s32.totalorder %s22, 3
      %p120 = por %p118, %p119
      %p122 = scmp.ne.s32.totalorder %s107, %s121
      %p123 = scmp.eq.s32.totalorder %s22, 0
      %p124 = por %p122, %p123
      %s125 = smul.u32 %s23, 2
      %s126 = sadd.s32 %s125, %s24
      %s127 = smul.u32 %s35, 2
      %s128 = sadd.s32 %s127, %s31
      %s129 = ssub.s32 %s126, %s128
      %p130 = scmp.eq.s32.totalorder %s129, 0
      %s132 = sadd.s32 %s131, 1
      %s133 = scalar_select %p130, %s131, %s132
      %p136 = pneg %p130
      %p137 = scmp.eq.s32.totalorder %s16, 3
      %p138 = por %p136, %p137
      %p139 = scmp.ne.s32.totalorder %s131, %s134
      %p140 = scmp.eq.s32.totalorder %s16, 0
      %p141 = por %p139, %p140
      %p142 = scmp.ne.s32.totalorder %s131, %s134
      %p143 = scmp.eq.s32.totalorder %s21, 3
      %p144 = por %p142, %p143
      %p145 = scmp.ne.s32.totalorder %s134, %s135
      %p146 = scmp.eq.s32.totalorder %s21, 0
      %p147 = por %p145, %p146
      %p148 = scmp.ne.s32.totalorder %s134, %s135
      %p149 = scmp.eq.s32.totalorder %s22, 3
      %p150 = por %p148, %p149
      %p152 = scmp.ne.s32.totalorder %s135, %s151
      %p153 = scmp.eq.s32.totalorder %s22, 0
      %p154 = por %p152, %p153
      %s155 = smul.u32 %s23, 2
      %s156 = sadd.s32 %s155, %s24
      %s157 = smul.u32 %s35, 2
      %s158 = sadd.s32 %s157, %s31
      %s159 = ssub.s32 %s156, %s158
      %p160 = scmp.eq.s32.totalorder %s159, 0
      %s162 = sadd.s32 %s161, 1
      %s163 = scalar_select %p160, %s161, %s162
      %p166 = pneg %p160
      %p167 = scmp.eq.s32.totalorder %s16, 3
      %p168 = por %p166, %p167
      %p169 = scmp.ne.s32.totalorder %s161, %s164
      %p170 = scmp.eq.s32.totalorder %s16, 0
      %p171 = por %p169, %p170
      %p172 = scmp.ne.s32.totalorder %s161, %s164
      %p173 = scmp.eq.s32.totalorder %s21, 3
      %p174 = por %p172, %p173
      %p175 = scmp.ne.s32.totalorder %s164, %s165
      %p176 = scmp.eq.s32.totalorder %s21, 0
      %p177 = por %p175, %p176
      %p178 = scmp.ne.s32.totalorder %s164, %s165
      %p179 = scmp.eq.s32.totalorder %s22, 3
      %p180 = por %p178, %p179
      %p182 = scmp.ne.s32.totalorder %s165, %s181
      %p183 = scmp.eq.s32.totalorder %s22, 0
      %p184 = por %p182, %p183
      %s185 = smul.u32 %s23, 2
      %s186 = sadd.s32 %s185, %s24
      %s187 = smul.u32 %s35, 2
      %s188 = sadd.s32 %s187, %s31
      %s189 = ssub.s32 %s186, %s188
      %p190 = scmp.eq.s32.totalorder %s189, 0
      %s192 = sadd.s32 %s191, 1
      %s193 = scalar_select %p190, %s191, %s192
      %p196 = pneg %p190
      %p197 = scmp.eq.s32.totalorder %s16, 3
      %p198 = por %p196, %p197
      %p199 = scmp.ne.s32.totalorder %s191, %s194
      %p200 = scmp.eq.s32.totalorder %s16, 0
      %p201 = por %p199, %p200
      %p202 = scmp.ne.s32.totalorder %s191, %s194
      %p203 = scmp.eq.s32.totalorder %s21, 3
      %p204 = por %p202, %p203
      %p205 = scmp.ne.s32.totalorder %s194, %s195
      %p206 = scmp.eq.s32.totalorder %s21, 0
      %p207 = por %p205, %p206
      %p208 = scmp.ne.s32.totalorder %s194, %s195
      %p209 = scmp.eq.s32.totalorder %s22, 3
      %p210 = por %p208, %p209
      %p212 = scmp.ne.s32.totalorder %s195, %s211
      %p213 = scmp.eq.s32.totalorder %s22, 0
      %p214 = por %p212, %p213
      %p215 = scmp.le.s32.totalorder 1, %s16
      %p216 = scmp.lt.s32.totalorder %s16, 5
      %p217 = pnand %p215, %p216
      %p218 = pneg %p217
      // Predicated region
      $region9: #{tpu_custom_call.1} parent=5 // pred_check
        _
      $region10: #{tpu_custom_call.1} parent=5 // pred_check_branch
        %220 = sbr.rel (%p217) target = $region12
      $region11: #{tpu_custom_call.1} parent=5 // pred_region
        %s221 = ssub.s32 %s16, 1
        // Predicated region
        $region13: #{tpu_custom_call.1} parent=11 // pred_check
          %p222 = pneg %p75
        $region14: #{tpu_custom_call.1} parent=11 // pred_check_branch
          %224 = sbr.rel (%p222) target = $region16
        $region15: #{tpu_custom_call.1} parent=11 // pred_region
          _
        $region16: #{tpu_custom_call.1} parent=11 // pred_fallthru
          _
        // Predicated region
        $region17: #{tpu_custom_call.1} parent=11 // pred_check
          %p225 = pneg %p96
        $region18: #{tpu_custom_call.1} parent=11 // pred_check_branch
          %227 = sbr.rel (%p225) target = $region20
        $region19: #{tpu_custom_call.1} parent=11 // pred_region
          _
        $region20: #{tpu_custom_call.1} parent=11 // pred_fallthru
          _
        // Predicated region
        $region21: #{tpu_custom_call.1} parent=11 // pred_check
          %p228 = pneg %p117
        $region22: #{tpu_custom_call.1} parent=11 // pred_check_branch
          %230 = sbr.rel (%p228) target = $region24
        $region23: #{tpu_custom_call.1} parent=11 // pred_region
          _
        $region24: #{tpu_custom_call.1} parent=11 // pred_fallthru
          _
      $region12: #{tpu_custom_call.1} parent=5 // pred_fallthru
        _
      %p231 = scmp.lt.s32.totalorder %s16, 4
      // Predicated region
      $region25: #{tpu_custom_call.1} parent=5 // pred_check
        %p232 = pneg %p231
      $region26: #{tpu_custom_call.1} parent=5 // pred_check_branch
        %234 = sbr.rel (%p232) target = $region28
      $region27: #{tpu_custom_call.1} parent=5 // pred_region
        // Predicated region
        $region29: #{tpu_custom_call.1} parent=27 // pred_check
          %p235 = pneg %p48
        $region30: #{tpu_custom_call.1} parent=27 // pred_check_branch
          %237 = sbr.rel (%p235) target = $region32
        $region31: #{tpu_custom_call.1} parent=27 // pred_region
          %s238 = smul.u32 10, %s23
          %p239 = scmp.lt.s32.totalorder %s238, 19
          %s240 = scalar_select %p239, %s238, 19
          %s241 = smul.addr %s240, 20
          %s242 = smul.addr %s241, 8
          %s243 = scalar_lea.vmem %s0, %s242
          %s244 = smul.u32 10, %s23
        $region32: #{tpu_custom_call.1} parent=27 // pred_fallthru
          _
      $region28: #{tpu_custom_call.1} parent=5 // pred_fallthru
        _
      %p245 = scmp.le.s32.totalorder 1, %s16
      %p246 = scmp.lt.s32.totalorder %s16, 5
      %p247 = pnand %p245, %p246
      %p248 = pneg %p247
      // Predicated region
      $region33: #{tpu_custom_call.1} parent=5 // pred_check
        _
      $region34: #{tpu_custom_call.1} parent=5 // pred_check_branch
        %250 = sbr.rel (%p247) target = $region36
      $region35: #{tpu_custom_call.1} parent=5 // pred_region
        %s251 = ssub.s32 %s16, 1
        %s252 = smul.u32 10, %s25
        %p253 = scmp.lt.s32.totalorder %s252, 19
        %s254 = scalar_select %p253, %s252, 19
        %s255 = smul.addr %s254, 20
        %s256 = smul.addr %s255, 8
        %s257 = scalar_lea.vmem %s0, %s256
        %p258 = pneg %p54
        %p259 = pneg %p51
        %p260 = pneg %p75
        %p261 = pneg %p72
        %p262 = pneg %p96
        %p263 = pneg %p93
        %p264 = pneg %p117
        %p265 = pneg %p114
        %p266 = pneg %p147
        %p267 = pneg %p144
        %s268 = smul.u32 %s25, 2
        %s269 = sadd.s32 %s268, %s26
        %s270 = smul.u32 32, %s269
        %p271 = scmp.lt.s32.totalorder %s270, 127
        %s272 = scalar_select %p271, %s270, 127
        %s273 = smul.addr %s272, 8
        %s274 = scalar_lea.vmem %s4, %s273
        %p275 = pneg %p177
        %p276 = pneg %p174
        %s277 = sand.u32 %s164, 1
        %s278 = scalar_lea.sflag [#allocation4], %s277
        %s279 = sand.u32 %s164, 1
        %s280 = smul.addr %s279, 2
        %s281 = scalar_lea.vmem [#allocation3], %s280
        %p282 = pneg %p207
        %p283 = pneg %p204
        %s284 = smul.u32 %s25, 2
        %s285 = sadd.s32 %s284, %s26
        %s286 = smul.u32 32, %s285
        %p287 = scmp.lt.s32.totalorder %s286, 127
        %s288 = scalar_select %p287, %s286, 127
        %s289 = smul.addr %s288, 8
        %s290 = scalar_lea.vmem %s6, %s289
        %s291 = smul.u32 10, %s25
        %p292 = scmp.lt.s32.totalorder %s291, 19
        %s293 = scalar_select %p292, %s291, 19
        %s294 = smul.addr %s293, 20
        %s295 = smul.addr %s294, 8
        %s296 = scalar_lea.vmem %s0, %s295
        %s297 = smul.u32 10, %s25
        %s298 = smul.u32 %s25, 2
        %s299 = sadd.s32 %s298, %s26
        %s300 = smul.u32 32, %s299
        %p301 = scmp.lt.s32.totalorder %s300, 127
        %s302 = scalar_select %p301, %s300, 127
        %s303 = smul.addr %s302, 8
        %s304 = scalar_lea.vmem %s4, %s303
        %s305 = smul.u32 %s25, 2
        %s306 = sadd.s32 %s305, %s26
        %s307 = smul.u32 32, %s306
        %s308 = smul.u32 %s25, 2
        %s309 = sadd.s32 %s308, %s26
        %s310 = smul.u32 %s25, 2
        %s311 = sadd.s32 %s310, %s26
        %s312 = smul.u32 32, %s311
        %p313 = scmp.lt.s32.totalorder %s312, 127
        %s314 = scalar_select %p313, %s312, 127
        %s315 = smul.addr %s314, 8
        %s316 = scalar_lea.vmem %s6, %s315
        %s317 = smul.u32 %s25, 2
        %s318 = sadd.s32 %s317, %s26
        %s319 = smul.u32 32, %s318
        %s320 = smul.u32 %s26, 4
        %s321 = smul.u32 %s320, 160
        %s322 = scalar_lea.vmem %s296, %s321
        %v323 = vld [vmem:[%s322] sm:$0xff]
        %v324 = vld [vmem:[%s322 + $0x8] sm:$0x3]
        %v325 = vld [vmem:[%s322 + $0x10] sm:$0xff]
        %v326 = vld [vmem:[%s322 + $0x18] sm:$0x3]
        %v327 = vld [vmem:[%s322 + $0x20] sm:$0xff]
        %v328 = vld [vmem:[%s322 + $0x28] sm:$0x3]
        %v329 = vld [vmem:[%s322 + $0x30] sm:$0xff]
        %v330 = vld [vmem:[%s322 + $0x38] sm:$0x3]
        %v331 = vld [vmem:[%s322 + $0x40] sm:$0xff]
        %v332 = vld [vmem:[%s322 + $0x48] sm:$0x3]
        %v333 = vld [vmem:[%s322 + $0x50] sm:$0xff]
        %v334 = vld [vmem:[%s322 + $0x58] sm:$0x3]
        %v335 = vld [vmem:[%s322 + $0x60] sm:$0xff]
        %v336 = vld [vmem:[%s322 + $0x68] sm:$0x3]
        %v337 = vld [vmem:[%s322 + $0x70] sm:$0xff]
        %v338 = vld [vmem:[%s322 + $0x78] sm:$0x3]
        %v339 = vld [vmem:[%s322 + $0x80] sm:$0xff]
        %v340 = vld [vmem:[%s322 + $0x88] sm:$0x3]
        %v341 = vld [vmem:[%s322 + $0x90] sm:$0xff]
        %v342 = vld [vmem:[%s322 + $0x98] sm:$0x3]
        %v343 = vld [vmem:[%s322 + $0xa0] sm:$0xff]
        %v344 = vld [vmem:[%s322 + $0xa8] sm:$0x3]
        %v345 = vld [vmem:[%s322 + $0xb0] sm:$0xff]
        %v346 = vld [vmem:[%s322 + $0xb8] sm:$0x3]
        %v347 = vld [vmem:[%s322 + $0xc0] sm:$0xff]
        %v348 = vld [vmem:[%s322 + $0xc8] sm:$0x3]
        %v349 = vld [vmem:[%s322 + $0xd0] sm:$0xff]
        %v350 = vld [vmem:[%s322 + $0xd8] sm:$0x3]
        %v351 = vld [vmem:[%s322 + $0xe0] sm:$0xff]
        %v352 = vld [vmem:[%s322 + $0xe8] sm:$0x3]
        %v353 = vld [vmem:[%s322 + $0xf0] sm:$0xff]
        %v354 = vld [vmem:[%s322 + $0xf8] sm:$0x3]
        %v355 = vld [vmem:[%s322 + $0x100] sm:$0xff]
        %v356 = vld [vmem:[%s322 + $0x108] sm:$0x3]
        %v357 = vld [vmem:[%s322 + $0x110] sm:$0xff]
        %v358 = vld [vmem:[%s322 + $0x118] sm:$0x3]
        %v359 = vld [vmem:[%s322 + $0x120] sm:$0xff]
        %v360 = vld [vmem:[%s322 + $0x128] sm:$0x3]
        %v361 = vld [vmem:[%s322 + $0x130] sm:$0xff]
        %v362 = vld [vmem:[%s322 + $0x138] sm:$0x3]
        %v363 = vld [vmem:[%s322 + $0x140] sm:$0xff]
        %v364 = vld [vmem:[%s322 + $0x148] sm:$0x3]
        %v365 = vld [vmem:[%s322 + $0x150] sm:$0xff]
        %v366 = vld [vmem:[%s322 + $0x158] sm:$0x3]
        %v367 = vld [vmem:[%s322 + $0x160] sm:$0xff]
        %v368 = vld [vmem:[%s322 + $0x168] sm:$0x3]
        %v369 = vld [vmem:[%s322 + $0x170] sm:$0xff]
        %v370 = vld [vmem:[%s322 + $0x178] sm:$0x3]
        %v371 = vld [vmem:[%s322 + $0x180] sm:$0xff]
        %v372 = vld [vmem:[%s322 + $0x188] sm:$0x3]
        %v373 = vld [vmem:[%s322 + $0x190] sm:$0xff]
        %v374 = vld [vmem:[%s322 + $0x198] sm:$0x3]
        %v375 = vld [vmem:[%s322 + $0x1a0] sm:$0xff]
        %v376 = vld [vmem:[%s322 + $0x1a8] sm:$0x3]
        %v377 = vld [vmem:[%s322 + $0x1b0] sm:$0xff]
        %v378 = vld [vmem:[%s322 + $0x1b8] sm:$0x3]
        %v379 = vld [vmem:[%s322 + $0x1c0] sm:$0xff]
        %v380 = vld [vmem:[%s322 + $0x1c8] sm:$0x3]
        %v381 = vld [vmem:[%s322 + $0x1d0] sm:$0xff]
        %v382 = vld [vmem:[%s322 + $0x1d8] sm:$0x3]
        %v383 = vld [vmem:[%s322 + $0x1e0] sm:$0xff]
        %v384 = vld [vmem:[%s322 + $0x1e8] sm:$0x3]
        %v385 = vld [vmem:[%s322 + $0x1f0] sm:$0xff]
        %v386 = vld [vmem:[%s322 + $0x1f8] sm:$0x3]
        %v387 = vld [vmem:[%s322 + $0x200] sm:$0xff]
        %v388 = vld [vmem:[%s322 + $0x208] sm:$0x3]
        %v389 = vld [vmem:[%s322 + $0x210] sm:$0xff]
        %v390 = vld [vmem:[%s322 + $0x218] sm:$0x3]
        %v391 = vld [vmem:[%s322 + $0x220] sm:$0xff]
        %v392 = vld [vmem:[%s322 + $0x228] sm:$0x3]
        %v393 = vld [vmem:[%s322 + $0x230] sm:$0xff]
        %v394 = vld [vmem:[%s322 + $0x238] sm:$0x3]
        %v395 = vld [vmem:[%s322 + $0x240] sm:$0xff]
        %v396 = vld [vmem:[%s322 + $0x248] sm:$0x3]
        %v397 = vld [vmem:[%s322 + $0x250] sm:$0xff]
        %v398 = vld [vmem:[%s322 + $0x258] sm:$0x3]
        %v399 = vld [vmem:[%s322 + $0x260] sm:$0xff]
        %v400 = vld [vmem:[%s322 + $0x268] sm:$0x3]
        %v401 = vld [vmem:[%s322 + $0x270] sm:$0xff]
        %v402 = vld [vmem:[%s322 + $0x278] sm:$0x3]
        %v403 = vld [vmem:[%s322 + $0x280] sm:$0xff]
        %v404 = vld [vmem:[%s322 + $0x288] sm:$0x3]
        %v405 = vld [vmem:[%s322 + $0x290] sm:$0xff]
        %v406 = vld [vmem:[%s322 + $0x298] sm:$0x3]
        %v407 = vld [vmem:[%s322 + $0x2a0] sm:$0xff]
        %v408 = vld [vmem:[%s322 + $0x2a8] sm:$0x3]
        %v409 = vld [vmem:[%s322 + $0x2b0] sm:$0xff]
        %v410 = vld [vmem:[%s322 + $0x2b8] sm:$0x3]
        %v411 = vld [vmem:[%s322 + $0x2c0] sm:$0xff]
        %v412 = vld [vmem:[%s322 + $0x2c8] sm:$0x3]
        %v413 = vld [vmem:[%s322 + $0x2d0] sm:$0xff]
        %v414 = vld [vmem:[%s322 + $0x2d8] sm:$0x3]
        %v415 = vld [vmem:[%s322 + $0x2e0] sm:$0xff]
        %v416 = vld [vmem:[%s322 + $0x2e8] sm:$0x3]
        %v417 = vld [vmem:[%s322 + $0x2f0] sm:$0xff]
        %v418 = vld [vmem:[%s322 + $0x2f8] sm:$0x3]
        %v419 = vld [vmem:[%s322 + $0x300] sm:$0xff]
        %v420 = vld [vmem:[%s322 + $0x308] sm:$0x3]
        %v421 = vld [vmem:[%s322 + $0x310] sm:$0xff]
        %v422 = vld [vmem:[%s322 + $0x318] sm:$0x3]
        %v423 = vld [vmem:[%s322 + $0x320] sm:$0xff]
        %v424 = vld [vmem:[%s322 + $0x328] sm:$0x3]
        %v425 = vld [vmem:[%s322 + $0x330] sm:$0xff]
        %v426 = vld [vmem:[%s322 + $0x338] sm:$0x3]
        %v427 = vld [vmem:[%s322 + $0x340] sm:$0xff]
        %v428 = vld [vmem:[%s322 + $0x348] sm:$0x3]
        %v429 = vld [vmem:[%s322 + $0x350] sm:$0xff]
        %v430 = vld [vmem:[%s322 + $0x358] sm:$0x3]
        %v431 = vld [vmem:[%s322 + $0x360] sm:$0xff]
        %v432 = vld [vmem:[%s322 + $0x368] sm:$0x3]
        %v433 = vld [vmem:[%s322 + $0x370] sm:$0xff]
        %v434 = vld [vmem:[%s322 + $0x378] sm:$0x3]
        %v435 = vld [vmem:[%s322 + $0x380] sm:$0xff]
        %v436 = vld [vmem:[%s322 + $0x388] sm:$0x3]
        %v437 = vld [vmem:[%s322 + $0x390] sm:$0xff]
        %v438 = vld [vmem:[%s322 + $0x398] sm:$0x3]
        %v439 = vld [vmem:[%s322 + $0x3a0] sm:$0xff]
        %v440 = vld [vmem:[%s322 + $0x3a8] sm:$0x3]
        %v441 = vld [vmem:[%s322 + $0x3b0] sm:$0xff]
        %v442 = vld [vmem:[%s322 + $0x3b8] sm:$0x3]
        %vm443 = vcmask 31744
        %444 = vst.msk [vmem:[#allocation2] sm:$0xff] %vm443, %v323
        %445 = vst.msk [vmem:[#allocation2 + $0x8] sm:$0xff] %vm443, %v325
        %446 = vst.msk [vmem:[#allocation2 + $0x10] sm:$0xff] %vm443, %v327
        %447 = vst.msk [vmem:[#allocation2 + $0x18] sm:$0xff] %vm443, %v329
        %448 = vst.msk [vmem:[#allocation2 + $0x20] sm:$0xff] %vm443, %v331
        %449 = vst.msk [vmem:[#allocation2 + $0x28] sm:$0xff] %vm443, %v333
        %450 = vst.msk [vmem:[#allocation2 + $0x30] sm:$0xff] %vm443, %v335
        %451 = vst.msk [vmem:[#allocation2 + $0x38] sm:$0xff] %vm443, %v337
        %452 = vst.msk [vmem:[#allocation2 + $0x40] sm:$0xff] %vm443, %v343
        %453 = vst.msk [vmem:[#allocation2 + $0x48] sm:$0xff] %vm443, %v345
        %454 = vst.msk [vmem:[#allocation2 + $0x50] sm:$0xff] %vm443, %v347
        %455 = vst.msk [vmem:[#allocation2 + $0x58] sm:$0xff] %vm443, %v349
        %456 = vst.msk [vmem:[#allocation2 + $0x60] sm:$0xff] %vm443, %v351
        %457 = vst.msk [vmem:[#allocation2 + $0x68] sm:$0xff] %vm443, %v353
        %458 = vst.msk [vmem:[#allocation2 + $0x70] sm:$0xff] %vm443, %v355
        %459 = vst.msk [vmem:[#allocation2 + $0x78] sm:$0xff] %vm443, %v357
        %460 = vst.msk [vmem:[#allocation2 + $0x80] sm:$0xff] %vm443, %v363
        %461 = vst.msk [vmem:[#allocation2 + $0x88] sm:$0xff] %vm443, %v365
        %462 = vst.msk [vmem:[#allocation2 + $0x90] sm:$0xff] %vm443, %v367
        %463 = vst.msk [vmem:[#allocation2 + $0x98] sm:$0xff] %vm443, %v369
        %464 = vst.msk [vmem:[#allocation2 + $0xa0] sm:$0xff] %vm443, %v371
        %465 = vst.msk [vmem:[#allocation2 + $0xa8] sm:$0xff] %vm443, %v373
        %466 = vst.msk [vmem:[#allocation2 + $0xb0] sm:$0xff] %vm443, %v375
        %467 = vst.msk [vmem:[#allocation2 + $0xb8] sm:$0xff] %vm443, %v377
        %468 = vst.msk [vmem:[#allocation2 + $0xc0] sm:$0xff] %vm443, %v383
        %469 = vst.msk [vmem:[#allocation2 + $0xc8] sm:$0xff] %vm443, %v385
        %470 = vst.msk [vmem:[#allocation2 + $0xd0] sm:$0xff] %vm443, %v387
        %471 = vst.msk [vmem:[#allocation2 + $0xd8] sm:$0xff] %vm443, %v389
        %472 = vst.msk [vmem:[#allocation2 + $0xe0] sm:$0xff] %vm443, %v391
        %473 = vst.msk [vmem:[#allocation2 + $0xe8] sm:$0xff] %vm443, %v393
        %474 = vst.msk [vmem:[#allocation2 + $0xf0] sm:$0xff] %vm443, %v395
        %475 = vst.msk [vmem:[#allocation2 + $0xf8] sm:$0xff] %vm443, %v397
        %vm540 = vcmask 1046528
        %v541 = vrot.slane %v323, 1
        %v542 = vrot.slane %v324, 1
        %v543 = vsel %vm540, %v541, %v542
        %v544 = vrot.slane %v325, 1
        %v545 = vrot.slane %v326, 1
        %v546 = vsel %vm540, %v544, %v545
        %v547 = vrot.slane %v327, 1
        %v548 = vrot.slane %v328, 1
        %v549 = vsel %vm540, %v547, %v548
        %v550 = vrot.slane %v329, 1
        %v551 = vrot.slane %v330, 1
        %v552 = vsel %vm540, %v550, %v551
        %v553 = vrot.slane %v331, 1
        %v554 = vrot.slane %v332, 1
        %v555 = vsel %vm540, %v553, %v554
        %v556 = vrot.slane %v333, 1
        %v557 = vrot.slane %v334, 1
        %v558 = vsel %vm540, %v556, %v557
        %v559 = vrot.slane %v335, 1
        %v560 = vrot.slane %v336, 1
        %v561 = vsel %vm540, %v559, %v560
        %v562 = vrot.slane %v337, 1
        %v563 = vrot.slane %v338, 1
        %v564 = vsel %vm540, %v562, %v563
        %v565 = vrot.slane %v343, 1
        %v566 = vrot.slane %v344, 1
        %v567 = vsel %vm540, %v565, %v566
        %v568 = vrot.slane %v345, 1
        %v569 = vrot.slane %v346, 1
        %v570 = vsel %vm540, %v568, %v569
        %v571 = vrot.slane %v347, 1
        %v572 = vrot.slane %v348, 1
        %v573 = vsel %vm540, %v571, %v572
        %v574 = vrot.slane %v349, 1
        %v575 = vrot.slane %v350, 1
        %v576 = vsel %vm540, %v574, %v575
        %v577 = vrot.slane %v351, 1
        %v578 = vrot.slane %v352, 1
        %v579 = vsel %vm540, %v577, %v578
        %v580 = vrot.slane %v353, 1
        %v581 = vrot.slane %v354, 1
        %v582 = vsel %vm540, %v580, %v581
        %v583 = vrot.slane %v355, 1
        %v584 = vrot.slane %v356, 1
        %v585 = vsel %vm540, %v583, %v584
        %v586 = vrot.slane %v357, 1
        %v587 = vrot.slane %v358, 1
        %v588 = vsel %vm540, %v586, %v587
        %v589 = vrot.slane %v363, 1
        %v590 = vrot.slane %v364, 1
        %v591 = vsel %vm540, %v589, %v590
        %v592 = vrot.slane %v365, 1
        %v593 = vrot.slane %v366, 1
        %v594 = vsel %vm540, %v592, %v593
        %v595 = vrot.slane %v367, 1
        %v596 = vrot.slane %v368, 1
        %v597 = vsel %vm540, %v595, %v596
        %v598 = vrot.slane %v369, 1
        %v599 = vrot.slane %v370, 1
        %v600 = vsel %vm540, %v598, %v599
        %v601 = vrot.slane %v371, 1
        %v602 = vrot.slane %v372, 1
        %v603 = vsel %vm540, %v601, %v602
        %v604 = vrot.slane %v373, 1
        %v605 = vrot.slane %v374, 1
        %v606 = vsel %vm540, %v604, %v605
        %v607 = vrot.slane %v375, 1
        %v608 = vrot.slane %v376, 1
        %v609 = vsel %vm540, %v607, %v608
        %v610 = vrot.slane %v377, 1
        %v611 = vrot.slane %v378, 1
        %v612 = vsel %vm540, %v610, %v611
        %v613 = vrot.slane %v383, 1
        %v614 = vrot.slane %v384, 1
        %v615 = vsel %vm540, %v613, %v614
        %v616 = vrot.slane %v385, 1
        %v617 = vrot.slane %v386, 1
        %v618 = vsel %vm540, %v616, %v617
        %v619 = vrot.slane %v387, 1
        %v620 = vrot.slane %v388, 1
        %v621 = vsel %vm540, %v619, %v620
        %v622 = vrot.slane %v389, 1
        %v623 = vrot.slane %v390, 1
        %v624 = vsel %vm540, %v622, %v623
        %v625 = vrot.slane %v391, 1
        %v626 = vrot.slane %v392, 1
        %v627 = vsel %vm540, %v625, %v626
        %v628 = vrot.slane %v393, 1
        %v629 = vrot.slane %v394, 1
        %v630 = vsel %vm540, %v628, %v629
        %v631 = vrot.slane %v395, 1
        %v632 = vrot.slane %v396, 1
        %v633 = vsel %vm540, %v631, %v632
        %v634 = vrot.slane %v397, 1
        %v635 = vrot.slane %v398, 1
        %v636 = vsel %vm540, %v634, %v635
        %637 = vrot.lane.b32.xlu0 %v543, 4
        %v638 = vpop.permute.xlu0 %637
        %639 = vrot.lane.b32.xlu0 %v546, 4
        %v640 = vpop.permute.xlu0 %639
        %641 = vrot.lane.b32.xlu0 %v549, 4
        %v642 = vpop.permute.xlu0 %641
        %643 = vrot.lane.b32.xlu0 %v552, 4
        %v644 = vpop.permute.xlu0 %643
        %645 = vrot.lane.b32.xlu0 %v555, 4
        %v646 = vpop.permute.xlu0 %645
        %647 = vrot.lane.b32.xlu0 %v558, 4
        %v648 = vpop.permute.xlu0 %647
        %649 = vrot.lane.b32.xlu0 %v561, 4
        %v650 = vpop.permute.xlu0 %649
        %651 = vrot.lane.b32.xlu0 %v564, 4
        %v652 = vpop.permute.xlu0 %651
        %653 = vrot.lane.b32.xlu0 %v567, 4
        %v654 = vpop.permute.xlu0 %653
        %655 = vrot.lane.b32.xlu0 %v570, 4
        %v656 = vpop.permute.xlu0 %655
        %657 = vrot.lane.b32.xlu0 %v573, 4
        %v658 = vpop.permute.xlu0 %657
        %659 = vrot.lane.b32.xlu0 %v576, 4
        %v660 = vpop.permute.xlu0 %659
        %661 = vrot.lane.b32.xlu0 %v579, 4
        %v662 = vpop.permute.xlu0 %661
        %663 = vrot.lane.b32.xlu0 %v582, 4
        %v664 = vpop.permute.xlu0 %663
        %665 = vrot.lane.b32.xlu0 %v585, 4
        %v666 = vpop.permute.xlu0 %665
        %667 = vrot.lane.b32.xlu0 %v588, 4
        %v668 = vpop.permute.xlu0 %667
        %669 = vrot.lane.b32.xlu0 %v591, 4
        %v670 = vpop.permute.xlu0 %669
        %671 = vrot.lane.b32.xlu0 %v594, 4
        %v672 = vpop.permute.xlu0 %671
        %673 = vrot.lane.b32.xlu0 %v597, 4
        %v674 = vpop.permute.xlu0 %673
        %675 = vrot.lane.b32.xlu0 %v600, 4
        %v676 = vpop.permute.xlu0 %675
        %677 = vrot.lane.b32.xlu0 %v603, 4
        %v678 = vpop.permute.xlu0 %677
        %679 = vrot.lane.b32.xlu0 %v606, 4
        %v680 = vpop.permute.xlu0 %679
        %681 = vrot.lane.b32.xlu0 %v609, 4
        %v682 = vpop.permute.xlu0 %681
        %683 = vrot.lane.b32.xlu0 %v612, 4
        %v684 = vpop.permute.xlu0 %683
        %685 = vrot.lane.b32.xlu0 %v615, 4
        %v686 = vpop.permute.xlu0 %685
        %687 = vrot.lane.b32.xlu0 %v618, 4
        %v688 = vpop.permute.xlu0 %687
        %689 = vrot.lane.b32.xlu0 %v621, 4
        %v690 = vpop.permute.xlu0 %689
        %691 = vrot.lane.b32.xlu0 %v624, 4
        %v692 = vpop.permute.xlu0 %691
        %693 = vrot.lane.b32.xlu0 %v627, 4
        %v694 = vpop.permute.xlu0 %693
        %695 = vrot.lane.b32.xlu0 %v630, 4
        %v696 = vpop.permute.xlu0 %695
        %697 = vrot.lane.b32.xlu0 %v633, 4
        %v698 = vpop.permute.xlu0 %697
        %699 = vrot.lane.b32.xlu0 %v636, 4
        %v700 = vpop.permute.xlu0 %699
        %vm733 = vcmask 64544
        %734 = vst.msk [vmem:[#allocation2] sm:$0xff] %vm733, %v638
        %735 = vst.msk [vmem:[#allocation2 + $0x8] sm:$0xff] %vm733, %v640
        %736 = vst.msk [vmem:[#allocation2 + $0x10] sm:$0xff] %vm733, %v642
        %737 = vst.msk [vmem:[#allocation2 + $0x18] sm:$0xff] %vm733, %v644
        %738 = vst.msk [vmem:[#allocation2 + $0x20] sm:$0xff] %vm733, %v646
        %739 = vst.msk [vmem:[#allocation2 + $0x28] sm:$0xff] %vm733, %v648
        %740 = vst.msk [vmem:[#allocation2 + $0x30] sm:$0xff] %vm733, %v650
        %741 = vst.msk [vmem:[#allocation2 + $0x38] sm:$0xff] %vm733, %v652
        %742 = vst.msk [vmem:[#allocation2 + $0x40] sm:$0xff] %vm733, %v654
        %743 = vst.msk [vmem:[#allocation2 + $0x48] sm:$0xff] %vm733, %v656
        %744 = vst.msk [vmem:[#allocation2 + $0x50] sm:$0xff] %vm733, %v658
        %745 = vst.msk [vmem:[#allocation2 + $0x58] sm:$0xff] %vm733, %v660
        %746 = vst.msk [vmem:[#allocation2 + $0x60] sm:$0xff] %vm733, %v662
        %747 = vst.msk [vmem:[#allocation2 + $0x68] sm:$0xff] %vm733, %v664
        %748 = vst.msk [vmem:[#allocation2 + $0x70] sm:$0xff] %vm733, %v666
        %749 = vst.msk [vmem:[#allocation2 + $0x78] sm:$0xff] %vm733, %v668
        %750 = vst.msk [vmem:[#allocation2 + $0x80] sm:$0xff] %vm733, %v670
        %751 = vst.msk [vmem:[#allocation2 + $0x88] sm:$0xff] %vm733, %v672
        %752 = vst.msk [vmem:[#allocation2 + $0x90] sm:$0xff] %vm733, %v674
        %753 = vst.msk [vmem:[#allocation2 + $0x98] sm:$0xff] %vm733, %v676
        %754 = vst.msk [vmem:[#allocation2 + $0xa0] sm:$0xff] %vm733, %v678
        %755 = vst.msk [vmem:[#allocation2 + $0xa8] sm:$0xff] %vm733, %v680
        %756 = vst.msk [vmem:[#allocation2 + $0xb0] sm:$0xff] %vm733, %v682
        %757 = vst.msk [vmem:[#allocation2 + $0xb8] sm:$0xff] %vm733, %v684
        %758 = vst.msk [vmem:[#allocation2 + $0xc0] sm:$0xff] %vm733, %v686
        %759 = vst.msk [vmem:[#allocation2 + $0xc8] sm:$0xff] %vm733, %v688
        %760 = vst.msk [vmem:[#allocation2 + $0xd0] sm:$0xff] %vm733, %v690
        %761 = vst.msk [vmem:[#allocation2 + $0xd8] sm:$0xff] %vm733, %v692
        %762 = vst.msk [vmem:[#allocation2 + $0xe0] sm:$0xff] %vm733, %v694
        %763 = vst.msk [vmem:[#allocation2 + $0xe8] sm:$0xff] %vm733, %v696
        %764 = vst.msk [vmem:[#allocation2 + $0xf0] sm:$0xff] %vm733, %v698
        %765 = vst.msk [vmem:[#allocation2 + $0xf8] sm:$0xff] %vm733, %v700
        %vm766 = vcmask 1045504
        %v767 = vrot.slane %v323, 2
        %v768 = vrot.slane %v324, 2
        %v769 = vsel %vm766, %v767, %v768
        %v770 = vrot.slane %v325, 2
        %v771 = vrot.slane %v326, 2
        %v772 = vsel %vm766, %v770, %v771
        %v773 = vrot.slane %v327, 2
        %v774 = vrot.slane %v328, 2
        %v775 = vsel %vm766, %v773, %v774
        %v776 = vrot.slane %v329, 2
        %v777 = vrot.slane %v330, 2
        %v778 = vsel %vm766, %v776, %v777
        %v779 = vrot.slane %v331, 2
        %v780 = vrot.slane %v332, 2
        %v781 = vsel %vm766, %v779, %v780
        %v782 = vrot.slane %v333, 2
        %v783 = vrot.slane %v334, 2
        %v784 = vsel %vm766, %v782, %v783
        %v785 = vrot.slane %v335, 2
        %v786 = vrot.slane %v336, 2
        %v787 = vsel %vm766, %v785, %v786
        %v788 = vrot.slane %v337, 2
        %v789 = vrot.slane %v338, 2
        %v790 = vsel %vm766, %v788, %v789
        %v791 = vrot.slane %v343, 2
        %v792 = vrot.slane %v344, 2
        %v793 = vsel %vm766, %v791, %v792
        %v794 = vrot.slane %v345, 2
        %v795 = vrot.slane %v346, 2
        %v796 = vsel %vm766, %v794, %v795
        %v797 = vrot.slane %v347, 2
        %v798 = vrot.slane %v348, 2
        %v799 = vsel %vm766, %v797, %v798
        %v800 = vrot.slane %v349, 2
        %v801 = vrot.slane %v350, 2
        %v802 = vsel %vm766, %v800, %v801
        %v803 = vrot.slane %v351, 2
        %v804 = vrot.slane %v352, 2
        %v805 = vsel %vm766, %v803, %v804
        %v806 = vrot.slane %v353, 2
        %v807 = vrot.slane %v354, 2
        %v808 = vsel %vm766, %v806, %v807
        %v809 = vrot.slane %v355, 2
        %v810 = vrot.slane %v356, 2
        %v811 = vsel %vm766, %v809, %v810
        %v812 = vrot.slane %v357, 2
        %v813 = vrot.slane %v358, 2
        %v814 = vsel %vm766, %v812, %v813
        %v815 = vrot.slane %v363, 2
        %v816 = vrot.slane %v364, 2
        %v817 = vsel %vm766, %v815, %v816
        %v818 = vrot.slane %v365, 2
        %v819 = vrot.slane %v366, 2
        %v820 = vsel %vm766, %v818, %v819
        %v821 = vrot.slane %v367, 2
        %v822 = vrot.slane %v368, 2
        %v823 = vsel %vm766, %v821, %v822
        %v824 = vrot.slane %v369, 2
        %v825 = vrot.slane %v370, 2
        %v826 = vsel %vm766, %v824, %v825
        %v827 = vrot.slane %v371, 2
        %v828 = vrot.slane %v372, 2
        %v829 = vsel %vm766, %v827, %v828
        %v830 = vrot.slane %v373, 2
        %v831 = vrot.slane %v374, 2
        %v832 = vsel %vm766, %v830, %v831
        %v833 = vrot.slane %v375, 2
        %v834 = vrot.slane %v376, 2
        %v835 = vsel %vm766, %v833, %v834
        %v836 = vrot.slane %v377, 2
        %v837 = vrot.slane %v378, 2
        %v838 = vsel %vm766, %v836, %v837
        %v839 = vrot.slane %v383, 2
        %v840 = vrot.slane %v384, 2
        %v841 = vsel %vm766, %v839, %v840
        %v842 = vrot.slane %v385, 2
        %v843 = vrot.slane %v386, 2
        %v844 = vsel %vm766, %v842, %v843
        %v845 = vrot.slane %v387, 2
        %v846 = vrot.slane %v388, 2
        %v847 = vsel %vm766, %v845, %v846
        %v848 = vrot.slane %v389, 2
        %v849 = vrot.slane %v390, 2
        %v850 = vsel %vm766, %v848, %v849
        %v851 = vrot.slane %v391, 2
        %v852 = vrot.slane %v392, 2
        %v853 = vsel %vm766, %v851, %v852
        %v854 = vrot.slane %v393, 2
        %v855 = vrot.slane %v394, 2
        %v856 = vsel %vm766, %v854, %v855
        %v857 = vrot.slane %v395, 2
        %v858 = vrot.slane %v396, 2
        %v859 = vsel %vm766, %v857, %v858
        %v860 = vrot.slane %v397, 2
        %v861 = vrot.slane %v398, 2
        %v862 = vsel %vm766, %v860, %v861
        %863 = vrot.lane.b32.xlu0 %v769, 8
        %v864 = vpop.permute.xlu0 %863
        %865 = vrot.lane.b32.xlu0 %v772, 8
        %v866 = vpop.permute.xlu0 %865
        %867 = vrot.lane.b32.xlu0 %v775, 8
        %v868 = vpop.permute.xlu0 %867
        %869 = vrot.lane.b32.xlu0 %v778, 8
        %v870 = vpop.permute.xlu0 %869
        %871 = vrot.lane.b32.xlu0 %v781, 8
        %v872 = vpop.permute.xlu0 %871
        %873 = vrot.lane.b32.xlu0 %v784, 8
        %v874 = vpop.permute.xlu0 %873
        %875 = vrot.lane.b32.xlu0 %v787, 8
        %v876 = vpop.permute.xlu0 %875
        %877 = vrot.lane.b32.xlu0 %v790, 8
        %v878 = vpop.permute.xlu0 %877
        %879 = vrot.lane.b32.xlu0 %v793, 8
        %v880 = vpop.permute.xlu0 %879
        %881 = vrot.lane.b32.xlu0 %v796, 8
        %v882 = vpop.permute.xlu0 %881
        %883 = vrot.lane.b32.xlu0 %v799, 8
        %v884 = vpop.permute.xlu0 %883
        %885 = vrot.lane.b32.xlu0 %v802, 8
        %v886 = vpop.permute.xlu0 %885
        %887 = vrot.lane.b32.xlu0 %v805, 8
        %v888 = vpop.permute.xlu0 %887
        %889 = vrot.lane.b32.xlu0 %v808, 8
        %v890 = vpop.permute.xlu0 %889
        %891 = vrot.lane.b32.xlu0 %v811, 8
        %v892 = vpop.permute.xlu0 %891
        %893 = vrot.lane.b32.xlu0 %v814, 8
        %v894 = vpop.permute.xlu0 %893
        %895 = vrot.lane.b32.xlu0 %v817, 8
        %v896 = vpop.permute.xlu0 %895
        %897 = vrot.lane.b32.xlu0 %v820, 8
        %v898 = vpop.permute.xlu0 %897
        %899 = vrot.lane.b32.xlu0 %v823, 8
        %v900 = vpop.permute.xlu0 %899
        %901 = vrot.lane.b32.xlu0 %v826, 8
        %v902 = vpop.permute.xlu0 %901
        %903 = vrot.lane.b32.xlu0 %v829, 8
        %v904 = vpop.permute.xlu0 %903
        %905 = vrot.lane.b32.xlu0 %v832, 8
        %v906 = vpop.permute.xlu0 %905
        %907 = vrot.lane.b32.xlu0 %v835, 8
        %v908 = vpop.permute.xlu0 %907
        %909 = vrot.lane.b32.xlu0 %v838, 8
        %v910 = vpop.permute.xlu0 %909
        %911 = vrot.lane.b32.xlu0 %v841, 8
        %v912 = vpop.permute.xlu0 %911
        %913 = vrot.lane.b32.xlu0 %v844, 8
        %v914 = vpop.permute.xlu0 %913
        %915 = vrot.lane.b32.xlu0 %v847, 8
        %v916 = vpop.permute.xlu0 %915
        %917 = vrot.lane.b32.xlu0 %v850, 8
        %v918 = vpop.permute.xlu0 %917
        %919 = vrot.lane.b32.xlu0 %v853, 8
        %v920 = vpop.permute.xlu0 %919
        %921 = vrot.lane.b32.xlu0 %v856, 8
        %v922 = vpop.permute.xlu0 %921
        %923 = vrot.lane.b32.xlu0 %v859, 8
        %v924 = vpop.permute.xlu0 %923
        %925 = vrot.lane.b32.xlu0 %v862, 8
        %v926 = vpop.permute.xlu0 %925
        %vm959 = vcmask 97344
        %960 = vst.msk [vmem:[#allocation2] sm:$0xff] %vm959, %v864
        %961 = vst.msk [vmem:[#allocation2 + $0x8] sm:$0xff] %vm959, %v866
        %962 = vst.msk [vmem:[#allocation2 + $0x10] sm:$0xff] %vm959, %v868
        %963 = vst.msk [vmem:[#allocation2 + $0x18] sm:$0xff] %vm959, %v870
        %964 = vst.msk [vmem:[#allocation2 + $0x20] sm:$0xff] %vm959, %v872
        %965 = vst.msk [vmem:[#allocation2 + $0x28] sm:$0xff] %vm959, %v874
        %966 = vst.msk [vmem:[#allocation2 + $0x30] sm:$0xff] %vm959, %v876
        %967 = vst.msk [vmem:[#allocation2 + $0x38] sm:$0xff] %vm959, %v878
        %968 = vst.msk [vmem:[#allocation2 + $0x40] sm:$0xff] %vm959, %v880
        %969 = vst.msk [vmem:[#allocation2 + $0x48] sm:$0xff] %vm959, %v882
        %970 = vst.msk [vmem:[#allocation2 + $0x50] sm:$0xff] %vm959, %v884
        %971 = vst.msk [vmem:[#allocation2 + $0x58] sm:$0xff] %vm959, %v886
        %972 = vst.msk [vmem:[#allocation2 + $0x60] sm:$0xff] %vm959, %v888
        %973 = vst.msk [vmem:[#allocation2 + $0x68] sm:$0xff] %vm959, %v890
        %974 = vst.msk [vmem:[#allocation2 + $0x70] sm:$0xff] %vm959, %v892
        %975 = vst.msk [vmem:[#allocation2 + $0x78] sm:$0xff] %vm959, %v894
        %976 = vst.msk [vmem:[#allocation2 + $0x80] sm:$0xff] %vm959, %v896
        %977 = vst.msk [vmem:[#allocation2 + $0x88] sm:$0xff] %vm959, %v898
        %978 = vst.msk [vmem:[#allocation2 + $0x90] sm:$0xff] %vm959, %v900
        %979 = vst.msk [vmem:[#allocation2 + $0x98] sm:$0xff] %vm959, %v902
        %980 = vst.msk [vmem:[#allocation2 + $0xa0] sm:$0xff] %vm959, %v904
        %981 = vst.msk [vmem:[#allocation2 + $0xa8] sm:$0xff] %vm959, %v906
        %982 = vst.msk [vmem:[#allocation2 + $0xb0] sm:$0xff] %vm959, %v908
        %983 = vst.msk [vmem:[#allocation2 + $0xb8] sm:$0xff] %vm959, %v910
        %984 = vst.msk [vmem:[#allocation2 + $0xc0] sm:$0xff] %vm959, %v912
        %985 = vst.msk [vmem:[#allocation2 + $0xc8] sm:$0xff] %vm959, %v914
        %986 = vst.msk [vmem:[#allocation2 + $0xd0] sm:$0xff] %vm959, %v916
        %987 = vst.msk [vmem:[#allocation2 + $0xd8] sm:$0xff] %vm959, %v918
        %988 = vst.msk [vmem:[#allocation2 + $0xe0] sm:$0xff] %vm959, %v920
        %989 = vst.msk [vmem:[#allocation2 + $0xe8] sm:$0xff] %vm959, %v922
        %990 = vst.msk [vmem:[#allocation2 + $0xf0] sm:$0xff] %vm959, %v924
        %991 = vst.msk [vmem:[#allocation2 + $0xf8] sm:$0xff] %vm959, %v926
        %996 = vrot.lane.b32.xlu0 %v325, 12
        %v997 = vpop.permute.xlu0 %996
        %998 = vrot.lane.b32.xlu0 %v327, 12
        %v999 = vpop.permute.xlu0 %998
        %1000 = vrot.lane.b32.xlu0 %v329, 12
        %v1001 = vpop.permute.xlu0 %1000
        %1002 = vrot.lane.b32.xlu0 %v331, 12
        %v1003 = vpop.permute.xlu0 %1002
        %1004 = vrot.lane.b32.xlu0 %v333, 12
        %v1005 = vpop.permute.xlu0 %1004
        %1006 = vrot.lane.b32.xlu0 %v335, 12
        %v1007 = vpop.permute.xlu0 %1006
        %1008 = vrot.lane.b32.xlu0 %v337, 12
        %v1009 = vpop.permute.xlu0 %1008
        %1010 = vrot.lane.b32.xlu0 %v339, 12
        %v1011 = vpop.permute.xlu0 %1010
        %1012 = vrot.lane.b32.xlu0 %v345, 12
        %v1013 = vpop.permute.xlu0 %1012
        %1014 = vrot.lane.b32.xlu0 %v347, 12
        %v1015 = vpop.permute.xlu0 %1014
        %1016 = vrot.lane.b32.xlu0 %v349, 12
        %v1017 = vpop.permute.xlu0 %1016
        %1018 = vrot.lane.b32.xlu0 %v351, 12
        %v1019 = vpop.permute.xlu0 %1018
        %1020 = vrot.lane.b32.xlu0 %v353, 12
        %v1021 = vpop.permute.xlu0 %1020
        %1022 = vrot.lane.b32.xlu0 %v355, 12
        %v1023 = vpop.permute.xlu0 %1022
        %1024 = vrot.lane.b32.xlu0 %v357, 12
        %v1025 = vpop.permute.xlu0 %1024
        %1026 = vrot.lane.b32.xlu0 %v359, 12
        %v1027 = vpop.permute.xlu0 %1026
        %1028 = vrot.lane.b32.xlu0 %v365, 12
        %v1029 = vpop.permute.xlu0 %1028
        %1030 = vrot.lane.b32.xlu0 %v367, 12
        %v1031 = vpop.permute.xlu0 %1030
        %1032 = vrot.lane.b32.xlu0 %v369, 12
        %v1033 = vpop.permute.xlu0 %1032
        %1034 = vrot.lane.b32.xlu0 %v371, 12
        %v1035 = vpop.permute.xlu0 %1034
        %1036 = vrot.lane.b32.xlu0 %v373, 12
        %v1037 = vpop.permute.xlu0 %1036
        %1038 = vrot.lane.b32.xlu0 %v375, 12
        %v1039 = vpop.permute.xlu0 %1038
        %1040 = vrot.lane.b32.xlu0 %v377, 12
        %v1041 = vpop.permute.xlu0 %1040
        %1042 = vrot.lane.b32.xlu0 %v379, 12
        %v1043 = vpop.permute.xlu0 %1042
        %1044 = vrot.lane.b32.xlu0 %v385, 12
        %v1045 = vpop.permute.xlu0 %1044
        %1046 = vrot.lane.b32.xlu0 %v387, 12
        %v1047 = vpop.permute.xlu0 %1046
        %1048 = vrot.lane.b32.xlu0 %v389, 12
        %v1049 = vpop.permute.xlu0 %1048
        %1050 = vrot.lane.b32.xlu0 %v391, 12
        %v1051 = vpop.permute.xlu0 %1050
        %1052 = vrot.lane.b32.xlu0 %v393, 12
        %v1053 = vpop.permute.xlu0 %1052
        %1054 = vrot.lane.b32.xlu0 %v395, 12
        %v1055 = vpop.permute.xlu0 %1054
        %1056 = vrot.lane.b32.xlu0 %v397, 12
        %v1057 = vpop.permute.xlu0 %1056
        %1058 = vrot.lane.b32.xlu0 %v399, 12
        %v1059 = vpop.permute.xlu0 %1058
        %vm1092 = vcmask 130144
        %1093 = vst.msk [vmem:[#allocation2] sm:$0xff] %vm1092, %v997
        %1094 = vst.msk [vmem:[#allocation2 + $0x8] sm:$0xff] %vm1092, %v999
        %1095 = vst.msk [vmem:[#allocation2 + $0x10] sm:$0xff] %vm1092, %v1001
        %1096 = vst.msk [vmem:[#allocation2 + $0x18] sm:$0xff] %vm1092, %v1003
        %1097 = vst.msk [vmem:[#allocation2 + $0x20] sm:$0xff] %vm1092, %v1005
        %1098 = vst.msk [vmem:[#allocation2 + $0x28] sm:$0xff] %vm1092, %v1007
        %1099 = vst.msk [vmem:[#allocation2 + $0x30] sm:$0xff] %vm1092, %v1009
        %1100 = vst.msk [vmem:[#allocation2 + $0x38] sm:$0xff] %vm1092, %v1011
        %1101 = vst.msk [vmem:[#allocation2 + $0x40] sm:$0xff] %vm1092, %v1013
        %1102 = vst.msk [vmem:[#allocation2 + $0x48] sm:$0xff] %vm1092, %v1015
        %1103 = vst.msk [vmem:[#allocation2 + $0x50] sm:$0xff] %vm1092, %v1017
        %1104 = vst.msk [vmem:[#allocation2 + $0x58] sm:$0xff] %vm1092, %v1019
        %1105 = vst.msk [vmem:[#allocation2 + $0x60] sm:$0xff] %vm1092, %v1021
        %1106 = vst.msk [vmem:[#allocation2 + $0x68] sm:$0xff] %vm1092, %v1023
        %1107 = vst.msk [vmem:[#allocation2 + $0x70] sm:$0xff] %vm1092, %v1025
        %1108 = vst.msk [vmem:[#allocation2 + $0x78] sm:$0xff] %vm1092, %v1027
        %1109 = vst.msk [vmem:[#allocation2 + $0x80] sm:$0xff] %vm1092, %v1029
        %1110 = vst.msk [vmem:[#allocation2 + $0x88] sm:$0xff] %vm1092, %v1031
        %1111 = vst.msk [vmem:[#allocation2 + $0x90] sm:$0xff] %vm1092, %v1033
        %1112 = vst.msk [vmem:[#allocation2 + $0x98] sm:$0xff] %vm1092, %v1035
        %1113 = vst.msk [vmem:[#allocation2 + $0xa0] sm:$0xff] %vm1092, %v1037
        %1114 = vst.msk [vmem:[#allocation2 + $0xa8] sm:$0xff] %vm1092, %v1039
        %1115 = vst.msk [vmem:[#allocation2 + $0xb0] sm:$0xff] %vm1092, %v1041
        %1116 = vst.msk [vmem:[#allocation2 + $0xb8] sm:$0xff] %vm1092, %v1043
        %1117 = vst.msk [vmem:[#allocation2 + $0xc0] sm:$0xff] %vm1092, %v1045
        %1118 = vst.msk [vmem:[#allocation2 + $0xc8] sm:$0xff] %vm1092, %v1047
        %1119 = vst.msk [vmem:[#allocation2 + $0xd0] sm:$0xff] %vm1092, %v1049
        %1120 = vst.msk [vmem:[#allocation2 + $0xd8] sm:$0xff] %vm1092, %v1051
        %1121 = vst.msk [vmem:[#allocation2 + $0xe0] sm:$0xff] %vm1092, %v1053
        %1122 = vst.msk [vmem:[#allocation2 + $0xe8] sm:$0xff] %vm1092, %v1055
        %1123 = vst.msk [vmem:[#allocation2 + $0xf0] sm:$0xff] %vm1092, %v1057
        %1124 = vst.msk [vmem:[#allocation2 + $0xf8] sm:$0xff] %vm1092, %v1059
        %v1129 = vrot.slane %v339, 1
        %v1130 = vrot.slane %v340, 1
        %v1131 = vsel %vm540, %v1129, %v1130
        %v1132 = vrot.slane %v359, 1
        %v1133 = vrot.slane %v360, 1
        %v1134 = vsel %vm540, %v1132, %v1133
        %v1135 = vrot.slane %v379, 1
        %v1136 = vrot.slane %v380, 1
        %v1137 = vsel %vm540, %v1135, %v1136
        %v1138 = vrot.slane %v399, 1
        %v1139 = vrot.slane %v400, 1
        %v1140 = vsel %vm540, %v1138, %v1139
        %1141 = vrot.lane.b32.xlu0 %v546, 16
        %v1142 = vpop.permute.xlu0 %1141
        %1143 = vrot.lane.b32.xlu0 %v549, 16
        %v1144 = vpop.permute.xlu0 %1143
        %1145 = vrot.lane.b32.xlu0 %v552, 16
        %v1146 = vpop.permute.xlu0 %1145
        %1147 = vrot.lane.b32.xlu0 %v555, 16
        %v1148 = vpop.permute.xlu0 %1147
        %1149 = vrot.lane.b32.xlu0 %v558, 16
        %v1150 = vpop.permute.xlu0 %1149
        %1151 = vrot.lane.b32.xlu0 %v561, 16
        %v1152 = vpop.permute.xlu0 %1151
        %1153 = vrot.lane.b32.xlu0 %v564, 16
        %v1154 = vpop.permute.xlu0 %1153
        %1155 = vrot.lane.b32.xlu0 %v1131, 16
        %v1156 = vpop.permute.xlu0 %1155
        %1157 = vrot.lane.b32.xlu0 %v570, 16
        %v1158 = vpop.permute.xlu0 %1157
        %1159 = vrot.lane.b32.xlu0 %v573, 16
        %v1160 = vpop.permute.xlu0 %1159
        %1161 = vrot.lane.b32.xlu0 %v576, 16
        %v1162 = vpop.permute.xlu0 %1161
        %1163 = vrot.lane.b32.xlu0 %v579, 16
        %v1164 = vpop.permute.xlu0 %1163
        %1165 = vrot.lane.b32.xlu0 %v582, 16
        %v1166 = vpop.permute.xlu0 %1165
        %1167 = vrot.lane.b32.xlu0 %v585, 16
        %v1168 = vpop.permute.xlu0 %1167
        %1169 = vrot.lane.b32.xlu0 %v588, 16
        %v1170 = vpop.permute.xlu0 %1169
        %1171 = vrot.lane.b32.xlu0 %v1134, 16
        %v1172 = vpop.permute.xlu0 %1171
        %1173 = vrot.lane.b32.xlu0 %v594, 16
        %v1174 = vpop.permute.xlu0 %1173
        %1175 = vrot.lane.b32.xlu0 %v597, 16
        %v1176 = vpop.permute.xlu0 %1175
        %1177 = vrot.lane.b32.xlu0 %v600, 16
        %v1178 = vpop.permute.xlu0 %1177
        %1179 = vrot.lane.b32.xlu0 %v603, 16
        %v1180 = vpop.permute.xlu0 %1179
        %1181 = vrot.lane.b32.xlu0 %v606, 16
        %v1182 = vpop.permute.xlu0 %1181
        %1183 = vrot.lane.b32.xlu0 %v609, 16
        %v1184 = vpop.permute.xlu0 %1183
        %1185 = vrot.lane.b32.xlu0 %v612, 16
        %v1186 = vpop.permute.xlu0 %1185
        %1187 = vrot.lane.b32.xlu0 %v1137, 16
        %v1188 = vpop.permute.xlu0 %1187
        %1189 = vrot.lane.b32.xlu0 %v618, 16
        %v1190 = vpop.permute.xlu0 %1189
        %1191 = vrot.lane.b32.xlu0 %v621, 16
        %v1192 = vpop.permute.xlu0 %1191
        %1193 = vrot.lane.b32.xlu0 %v624, 16
        %v1194 = vpop.permute.xlu0 %1193
        %1195 = vrot.lane.b32.xlu0 %v627, 16
        %v1196 = vpop.permute.xlu0 %1195
        %1197 = vrot.lane.b32.xlu0 %v630, 16
        %v1198 = vpop.permute.xlu0 %1197
        %1199 = vrot.lane.b32.xlu0 %v633, 16
        %v1200 = vpop.permute.xlu0 %1199
        %1201 = vrot.lane.b32.xlu0 %v636, 16
        %v1202 = vpop.permute.xlu0 %1201
        %1203 = vrot.lane.b32.xlu0 %v1140, 16
        %v1204 = vpop.permute.xlu0 %1203
        %vm1237 = vcmask 162944
        %1238 = vst.msk [vmem:[#allocation2] sm:$0xff] %vm1237, %v1142
        %1239 = vst.msk [vmem:[#allocation2 + $0x8] sm:$0xff] %vm1237, %v1144
        %1240 = vst.msk [vmem:[#allocation2 + $0x10] sm:$0xff] %vm1237, %v1146
        %1241 = vst.msk [vmem:[#allocation2 + $0x18] sm:$0xff] %vm1237, %v1148
        %1242 = vst.msk [vmem:[#allocation2 + $0x20] sm:$0xff] %vm1237, %v1150
        %1243 = vst.msk [vmem:[#allocation2 + $0x28] sm:$0xff] %vm1237, %v1152
        %1244 = vst.msk [vmem:[#allocation2 + $0x30] sm:$0xff] %vm1237, %v1154
        %1245 = vst.msk [vmem:[#allocation2 + $0x38] sm:$0xff] %vm1237, %v1156
        %1246 = vst.msk [vmem:[#allocation2 + $0x40] sm:$0xff] %vm1237, %v1158
        %1247 = vst.msk [vmem:[#allocation2 + $0x48] sm:$0xff] %vm1237, %v1160
        %1248 = vst.msk [vmem:[#allocation2 + $0x50] sm:$0xff] %vm1237, %v1162
        %1249 = vst.msk [vmem:[#allocation2 + $0x58] sm:$0xff] %vm1237, %v1164
        %1250 = vst.msk [vmem:[#allocation2 + $0x60] sm:$0xff] %vm1237, %v1166
        %1251 = vst.msk [vmem:[#allocation2 + $0x68] sm:$0xff] %vm1237, %v1168
        %1252 = vst.msk [vmem:[#allocation2 + $0x70] sm:$0xff] %vm1237, %v1170
        %1253 = vst.msk [vmem:[#allocation2 + $0x78] sm:$0xff] %vm1237, %v1172
        %1254 = vst.msk [vmem:[#allocation2 + $0x80] sm:$0xff] %vm1237, %v1174
        %1255 = vst.msk [vmem:[#allocation2 + $0x88] sm:$0xff] %vm1237, %v1176
        %1256 = vst.msk [vmem:[#allocation2 + $0x90] sm:$0xff] %vm1237, %v1178
        %1257 = vst.msk [vmem:[#allocation2 + $0x98] sm:$0xff] %vm1237, %v1180
        %1258 = vst.msk [vmem:[#allocation2 + $0xa0] sm:$0xff] %vm1237, %v1182
        %1259 = vst.msk [vmem:[#allocation2 + $0xa8] sm:$0xff] %vm1237, %v1184
        %1260 = vst.msk [vmem:[#allocation2 + $0xb0] sm:$0xff] %vm1237, %v1186
        %1261 = vst.msk [vmem:[#allocation2 + $0xb8] sm:$0xff] %vm1237, %v1188
        %1262 = vst.msk [vmem:[#allocation2 + $0xc0] sm:$0xff] %vm1237, %v1190
        %1263 = vst.msk [vmem:[#allocation2 + $0xc8] sm:$0xff] %vm1237, %v1192
        %1264 = vst.msk [vmem:[#allocation2 + $0xd0] sm:$0xff] %vm1237, %v1194
        %1265 = vst.msk [vmem:[#allocation2 + $0xd8] sm:$0xff] %vm1237, %v1196
        %1266 = vst.msk [vmem:[#allocation2 + $0xe0] sm:$0xff] %vm1237, %v1198
        %1267 = vst.msk [vmem:[#allocation2 + $0xe8] sm:$0xff] %vm1237, %v1200
        %1268 = vst.msk [vmem:[#allocation2 + $0xf0] sm:$0xff] %vm1237, %v1202
        %1269 = vst.msk [vmem:[#allocation2 + $0xf8] sm:$0xff] %vm1237, %v1204
        %v1270 = vrot.slane %v339, 2
        %v1271 = vrot.slane %v340, 2
        %v1272 = vsel %vm766, %v1270, %v1271
        %v1273 = vrot.slane %v359, 2
        %v1274 = vrot.slane %v360, 2
        %v1275 = vsel %vm766, %v1273, %v1274
        %v1276 = vrot.slane %v379, 2
        %v1277 = vrot.slane %v380, 2
        %v1278 = vsel %vm766, %v1276, %v1277
        %v1279 = vrot.slane %v399, 2
        %v1280 = vrot.slane %v400, 2
        %v1281 = vsel %vm766, %v1279, %v1280
        %1282 = vrot.lane.b32.xlu0 %v772, 20
        %v1283 = vpop.permute.xlu0 %1282
        %1284 = vrot.lane.b32.xlu0 %v775, 20
        %v1285 = vpop.permute.xlu0 %1284
        %1286 = vrot.lane.b32.xlu0 %v778, 20
        %v1287 = vpop.permute.xlu0 %1286
        %1288 = vrot.lane.b32.xlu0 %v781, 20
        %v1289 = vpop.permute.xlu0 %1288
        %1290 = vrot.lane.b32.xlu0 %v784, 20
        %v1291 = vpop.permute.xlu0 %1290
        %1292 = vrot.lane.b32.xlu0 %v787, 20
        %v1293 = vpop.permute.xlu0 %1292
        %1294 = vrot.lane.b32.xlu0 %v790, 20
        %v1295 = vpop.permute.xlu0 %1294
        %1296 = vrot.lane.b32.xlu0 %v1272, 20
        %v1297 = vpop.permute.xlu0 %1296
        %1298 = vrot.lane.b32.xlu0 %v796, 20
        %v1299 = vpop.permute.xlu0 %1298
        %1300 = vrot.lane.b32.xlu0 %v799, 20
        %v1301 = vpop.permute.xlu0 %1300
        %1302 = vrot.lane.b32.xlu0 %v802, 20
        %v1303 = vpop.permute.xlu0 %1302
        %1304 = vrot.lane.b32.xlu0 %v805, 20
        %v1305 = vpop.permute.xlu0 %1304
        %1306 = vrot.lane.b32.xlu0 %v808, 20
        %v1307 = vpop.permute.xlu0 %1306
        %1308 = vrot.lane.b32.xlu0 %v811, 20
        %v1309 = vpop.permute.xlu0 %1308
        %1310 = vrot.lane.b32.xlu0 %v814, 20
        %v1311 = vpop.permute.xlu0 %1310
        %1312 = vrot.lane.b32.xlu0 %v1275, 20
        %v1313 = vpop.permute.xlu0 %1312
        %1314 = vrot.lane.b32.xlu0 %v820, 20
        %v1315 = vpop.permute.xlu0 %1314
        %1316 = vrot.lane.b32.xlu0 %v823, 20
        %v1317 = vpop.permute.xlu0 %1316
        %1318 = vrot.lane.b32.xlu0 %v826, 20
        %v1319 = vpop.permute.xlu0 %1318
        %1320 = vrot.lane.b32.xlu0 %v829, 20
        %v1321 = vpop.permute.xlu0 %1320
        %1322 = vrot.lane.b32.xlu0 %v832, 20
        %v1323 = vpop.permute.xlu0 %1322
        %1324 = vrot.lane.b32.xlu0 %v835, 20
        %v1325 = vpop.permute.xlu0 %1324
        %1326 = vrot.lane.b32.xlu0 %v838, 20
        %v1327 = vpop.permute.xlu0 %1326
        %1328 = vrot.lane.b32.xlu0 %v1278, 20
        %v1329 = vpop.permute.xlu0 %1328
        %1330 = vrot.lane.b32.xlu0 %v844, 20
        %v1331 = vpop.permute.xlu0 %1330
        %1332 = vrot.lane.b32.xlu0 %v847, 20
        %v1333 = vpop.permute.xlu0 %1332
        %1334 = vrot.lane.b32.xlu0 %v850, 20
        %v1335 = vpop.permute.xlu0 %1334
        %1336 = vrot.lane.b32.xlu0 %v853, 20
        %v1337 = vpop.permute.xlu0 %1336
        %1338 = vrot.lane.b32.xlu0 %v856, 20
        %v1339 = vpop.permute.xlu0 %1338
        %1340 = vrot.lane.b32.xlu0 %v859, 20
        %v1341 = vpop.permute.xlu0 %1340
        %1342 = vrot.lane.b32.xlu0 %v862, 20
        %v1343 = vpop.permute.xlu0 %1342
        %1344 = vrot.lane.b32.xlu0 %v1281, 20
        %v1345 = vpop.permute.xlu0 %1344
        %vm1378 = vcmask 195744
        %1379 = vst.msk [vmem:[#allocation2] sm:$0xff] %vm1378, %v1283
        %1380 = vst.msk [vmem:[#allocation2 + $0x8] sm:$0xff] %vm1378, %v1285
        %1381 = vst.msk [vmem:[#allocation2 + $0x10] sm:$0xff] %vm1378, %v1287
        %1382 = vst.msk [vmem:[#allocation2 + $0x18] sm:$0xff] %vm1378, %v1289
        %1383 = vst.msk [vmem:[#allocation2 + $0x20] sm:$0xff] %vm1378, %v1291
        %1384 = vst.msk [vmem:[#allocation2 + $0x28] sm:$0xff] %vm1378, %v1293
        %1385 = vst.msk [vmem:[#allocation2 + $0x30] sm:$0xff] %vm1378, %v1295
        %1386 = vst.msk [vmem:[#allocation2 + $0x38] sm:$0xff] %vm1378, %v1297
        %1387 = vst.msk [vmem:[#allocation2 + $0x40] sm:$0xff] %vm1378, %v1299
        %1388 = vst.msk [vmem:[#allocation2 + $0x48] sm:$0xff] %vm1378, %v1301
        %1389 = vst.msk [vmem:[#allocation2 + $0x50] sm:$0xff] %vm1378, %v1303
        %1390 = vst.msk [vmem:[#allocation2 + $0x58] sm:$0xff] %vm1378, %v1305
        %1391 = vst.msk [vmem:[#allocation2 + $0x60] sm:$0xff] %vm1378, %v1307
        %1392 = vst.msk [vmem:[#allocation2 + $0x68] sm:$0xff] %vm1378, %v1309
        %1393 = vst.msk [vmem:[#allocation2 + $0x70] sm:$0xff] %vm1378, %v1311
        %1394 = vst.msk [vmem:[#allocation2 + $0x78] sm:$0xff] %vm1378, %v1313
        %1395 = vst.msk [vmem:[#allocation2 + $0x80] sm:$0xff] %vm1378, %v1315
        %1396 = vst.msk [vmem:[#allocation2 + $0x88] sm:$0xff] %vm1378, %v1317
        %1397 = vst.msk [vmem:[#allocation2 + $0x90] sm:$0xff] %vm1378, %v1319
        %1398 = vst.msk [vmem:[#allocation2 + $0x98] sm:$0xff] %vm1378, %v1321
        %1399 = vst.msk [vmem:[#allocation2 + $0xa0] sm:$0xff] %vm1378, %v1323
        %1400 = vst.msk [vmem:[#allocation2 + $0xa8] sm:$0xff] %vm1378, %v1325
        %1401 = vst.msk [vmem:[#allocation2 + $0xb0] sm:$0xff] %vm1378, %v1327
        %1402 = vst.msk [vmem:[#allocation2 + $0xb8] sm:$0xff] %vm1378, %v1329
        %1403 = vst.msk [vmem:[#allocation2 + $0xc0] sm:$0xff] %vm1378, %v1331
        %1404 = vst.msk [vmem:[#allocation2 + $0xc8] sm:$0xff] %vm1378, %v1333
        %1405 = vst.msk [vmem:[#allocation2 + $0xd0] sm:$0xff] %vm1378, %v1335
        %1406 = vst.msk [vmem:[#allocation2 + $0xd8] sm:$0xff] %vm1378, %v1337
        %1407 = vst.msk [vmem:[#allocation2 + $0xe0] sm:$0xff] %vm1378, %v1339
        %1408 = vst.msk [vmem:[#allocation2 + $0xe8] sm:$0xff] %vm1378, %v1341
        %1409 = vst.msk [vmem:[#allocation2 + $0xf0] sm:$0xff] %vm1378, %v1343
        %1410 = vst.msk [vmem:[#allocation2 + $0xf8] sm:$0xff] %vm1378, %v1345
        %1415 = vrot.lane.b32.xlu0 %v327, 24
        %v1416 = vpop.permute.xlu0 %1415
        %1417 = vrot.lane.b32.xlu0 %v329, 24
        %v1418 = vpop.permute.xlu0 %1417
        %1419 = vrot.lane.b32.xlu0 %v331, 24
        %v1420 = vpop.permute.xlu0 %1419
        %1421 = vrot.lane.b32.xlu0 %v333, 24
        %v1422 = vpop.permute.xlu0 %1421
        %1423 = vrot.lane.b32.xlu0 %v335, 24
        %v1424 = vpop.permute.xlu0 %1423
        %1425 = vrot.lane.b32.xlu0 %v337, 24
        %v1426 = vpop.permute.xlu0 %1425
        %1427 = vrot.lane.b32.xlu0 %v339, 24
        %v1428 = vpop.permute.xlu0 %1427
        %1429 = vrot.lane.b32.xlu0 %v341, 24
        %v1430 = vpop.permute.xlu0 %1429
        %1431 = vrot.lane.b32.xlu0 %v347, 24
        %v1432 = vpop.permute.xlu0 %1431
        %1433 = vrot.lane.b32.xlu0 %v349, 24
        %v1434 = vpop.permute.xlu0 %1433
        %1435 = vrot.lane.b32.xlu0 %v351, 24
        %v1436 = vpop.permute.xlu0 %1435
        %1437 = vrot.lane.b32.xlu0 %v353, 24
        %v1438 = vpop.permute.xlu0 %1437
        %1439 = vrot.lane.b32.xlu0 %v355, 24
        %v1440 = vpop.permute.xlu0 %1439
        %1441 = vrot.lane.b32.xlu0 %v357, 24
        %v1442 = vpop.permute.xlu0 %1441
        %1443 = vrot.lane.b32.xlu0 %v359, 24
        %v1444 = vpop.permute.xlu0 %1443
        %1445 = vrot.lane.b32.xlu0 %v361, 24
        %v1446 = vpop.permute.xlu0 %1445
        %1447 = vrot.lane.b32.xlu0 %v367, 24
        %v1448 = vpop.permute.xlu0 %1447
        %1449 = vrot.lane.b32.xlu0 %v369, 24
        %v1450 = vpop.permute.xlu0 %1449
        %1451 = vrot.lane.b32.xlu0 %v371, 24
        %v1452 = vpop.permute.xlu0 %1451
        %1453 = vrot.lane.b32.xlu0 %v373, 24
        %v1454 = vpop.permute.xlu0 %1453
        %1455 = vrot.lane.b32.xlu0 %v375, 24
        %v1456 = vpop.permute.xlu0 %1455
        %1457 = vrot.lane.b32.xlu0 %v377, 24
        %v1458 = vpop.permute.xlu0 %1457
        %1459 = vrot.lane.b32.xlu0 %v379, 24
        %v1460 = vpop.permute.xlu0 %1459
        %1461 = vrot.lane.b32.xlu0 %v381, 24
        %v1462 = vpop.permute.xlu0 %1461
        %1463 = vrot.lane.b32.xlu0 %v387, 24
        %v1464 = vpop.permute.xlu0 %1463
        %1465 = vrot.lane.b32.xlu0 %v389, 24
        %v1466 = vpop.permute.xlu0 %1465
        %1467 = vrot.lane.b32.xlu0 %v391, 24
        %v1468 = vpop.permute.xlu0 %1467
        %1469 = vrot.lane.b32.xlu0 %v393, 24
        %v1470 = vpop.permute.xlu0 %1469
        %1471 = vrot.lane.b32.xlu0 %v395, 24
        %v1472 = vpop.permute.xlu0 %1471
        %1473 = vrot.lane.b32.xlu0 %v397, 24
        %v1474 = vpop.permute.xlu0 %1473
        %1475 = vrot.lane.b32.xlu0 %v399, 24
        %v1476 = vpop.permute.xlu0 %1475
        %1477 = vrot.lane.b32.xlu0 %v401, 24
        %v1478 = vpop.permute.xlu0 %1477
        %vm1511 = vcmask 228544
        %1512 = vst.msk [vmem:[#allocation2] sm:$0xff] %vm1511, %v1416
        %1513 = vst.msk [vmem:[#allocation2 + $0x8] sm:$0xff] %vm1511, %v1418
        %1514 = vst.msk [vmem:[#allocation2 + $0x10] sm:$0xff] %vm1511, %v1420
        %1515 = vst.msk [vmem:[#allocation2 + $0x18] sm:$0xff] %vm1511, %v1422
        %1516 = vst.msk [vmem:[#allocation2 + $0x20] sm:$0xff] %vm1511, %v1424
        %1517 = vst.msk [vmem:[#allocation2 + $0x28] sm:$0xff] %vm1511, %v1426
        %1518 = vst.msk [vmem:[#allocation2 + $0x30] sm:$0xff] %vm1511, %v1428
        %1519 = vst.msk [vmem:[#allocation2 + $0x38] sm:$0xff] %vm1511, %v1430
        %1520 = vst.msk [vmem:[#allocation2 + $0x40] sm:$0xff] %vm1511, %v1432
        %1521 = vst.msk [vmem:[#allocation2 + $0x48] sm:$0xff] %vm1511, %v1434
        %1522 = vst.msk [vmem:[#allocation2 + $0x50] sm:$0xff] %vm1511, %v1436
        %1523 = vst.msk [vmem:[#allocation2 + $0x58] sm:$0xff] %vm1511, %v1438
        %1524 = vst.msk [vmem:[#allocation2 + $0x60] sm:$0xff] %vm1511, %v1440
        %1525 = vst.msk [vmem:[#allocation2 + $0x68] sm:$0xff] %vm1511, %v1442
        %1526 = vst.msk [vmem:[#allocation2 + $0x70] sm:$0xff] %vm1511, %v1444
        %1527 = vst.msk [vmem:[#allocation2 + $0x78] sm:$0xff] %vm1511, %v1446
        %1528 = vst.msk [vmem:[#allocation2 + $0x80] sm:$0xff] %vm1511, %v1448
        %1529 = vst.msk [vmem:[#allocation2 + $0x88] sm:$0xff] %vm1511, %v1450
        %1530 = vst.msk [vmem:[#allocation2 + $0x90] sm:$0xff] %vm1511, %v1452
        %1531 = vst.msk [vmem:[#allocation2 + $0x98] sm:$0xff] %vm1511, %v1454
        %1532 = vst.msk [vmem:[#allocation2 + $0xa0] sm:$0xff] %vm1511, %v1456
        %1533 = vst.msk [vmem:[#allocation2 + $0xa8] sm:$0xff] %vm1511, %v1458
        %1534 = vst.msk [vmem:[#allocation2 + $0xb0] sm:$0xff] %vm1511, %v1460
        %1535 = vst.msk [vmem:[#allocation2 + $0xb8] sm:$0xff] %vm1511, %v1462
        %1536 = vst.msk [vmem:[#allocation2 + $0xc0] sm:$0xff] %vm1511, %v1464
        %1537 = vst.msk [vmem:[#allocation2 + $0xc8] sm:$0xff] %vm1511, %v1466
        %1538 = vst.msk [vmem:[#allocation2 + $0xd0] sm:$0xff] %vm1511, %v1468
        %1539 = vst.msk [vmem:[#allocation2 + $0xd8] sm:$0xff] %vm1511, %v1470
        %1540 = vst.msk [vmem:[#allocation2 + $0xe0] sm:$0xff] %vm1511, %v1472
        %1541 = vst.msk [vmem:[#allocation2 + $0xe8] sm:$0xff] %vm1511, %v1474
        %1542 = vst.msk [vmem:[#allocation2 + $0xf0] sm:$0xff] %vm1511, %v1476
        %1543 = vst.msk [vmem:[#allocation2 + $0xf8] sm:$0xff] %vm1511, %v1478
        %v1548 = vrot.slane %v341, 1
        %v1549 = vrot.slane %v342, 1
        %v1550 = vsel %vm540, %v1548, %v1549
        %v1551 = vrot.slane %v361, 1
        %v1552 = vrot.slane %v362, 1
        %v1553 = vsel %vm540, %v1551, %v1552
        %v1554 = vrot.slane %v381, 1
        %v1555 = vrot.slane %v382, 1
        %v1556 = vsel %vm540, %v1554, %v1555
        %v1557 = vrot.slane %v401, 1
        %v1558 = vrot.slane %v402, 1
        %v1559 = vsel %vm540, %v1557, %v1558
        %1560 = vrot.lane.b32.xlu0 %v549, 28
        %v1561 = vpop.permute.xlu0 %1560
        %1562 = vrot.lane.b32.xlu0 %v552, 28
        %v1563 = vpop.permute.xlu0 %1562
        %1564 = vrot.lane.b32.xlu0 %v555, 28
        %v1565 = vpop.permute.xlu0 %1564
        %1566 = vrot.lane.b32.xlu0 %v558, 28
        %v1567 = vpop.permute.xlu0 %1566
        %1568 = vrot.lane.b32.xlu0 %v561, 28
        %v1569 = vpop.permute.xlu0 %1568
        %1570 = vrot.lane.b32.xlu0 %v564, 28
        %v1571 = vpop.permute.xlu0 %1570
        %1572 = vrot.lane.b32.xlu0 %v1131, 28
        %v1573 = vpop.permute.xlu0 %1572
        %1574 = vrot.lane.b32.xlu0 %v1550, 28
        %v1575 = vpop.permute.xlu0 %1574
        %1576 = vrot.lane.b32.xlu0 %v573, 28
        %v1577 = vpop.permute.xlu0 %1576
        %1578 = vrot.lane.b32.xlu0 %v576, 28
        %v1579 = vpop.permute.xlu0 %1578
        %1580 = vrot.lane.b32.xlu0 %v579, 28
        %v1581 = vpop.permute.xlu0 %1580
        %1582 = vrot.lane.b32.xlu0 %v582, 28
        %v1583 = vpop.permute.xlu0 %1582
        %1584 = vrot.lane.b32.xlu0 %v585, 28
        %v1585 = vpop.permute.xlu0 %1584
        %1586 = vrot.lane.b32.xlu0 %v588, 28
        %v1587 = vpop.permute.xlu0 %1586
        %1588 = vrot.lane.b32.xlu0 %v1134, 28
        %v1589 = vpop.permute.xlu0 %1588
        %1590 = vrot.lane.b32.xlu0 %v1553, 28
        %v1591 = vpop.permute.xlu0 %1590
        %1592 = vrot.lane.b32.xlu0 %v597, 28
        %v1593 = vpop.permute.xlu0 %1592
        %1594 = vrot.lane.b32.xlu0 %v600, 28
        %v1595 = vpop.permute.xlu0 %1594
        %1596 = vrot.lane.b32.xlu0 %v603, 28
        %v1597 = vpop.permute.xlu0 %1596
        %1598 = vrot.lane.b32.xlu0 %v606, 28
        %v1599 = vpop.permute.xlu0 %1598
        %1600 = vrot.lane.b32.xlu0 %v609, 28
        %v1601 = vpop.permute.xlu0 %1600
        %1602 = vrot.lane.b32.xlu0 %v612, 28
        %v1603 = vpop.permute.xlu0 %1602
        %1604 = vrot.lane.b32.xlu0 %v1137, 28
        %v1605 = vpop.permute.xlu0 %1604
        %1606 = vrot.lane.b32.xlu0 %v1556, 28
        %v1607 = vpop.permute.xlu0 %1606
        %1608 = vrot.lane.b32.xlu0 %v621, 28
        %v1609 = vpop.permute.xlu0 %1608
        %1610 = vrot.lane.b32.xlu0 %v624, 28
        %v1611 = vpop.permute.xlu0 %1610
        %1612 = vrot.lane.b32.xlu0 %v627, 28
        %v1613 = vpop.permute.xlu0 %1612
        %1614 = vrot.lane.b32.xlu0 %v630, 28
        %v1615 = vpop.permute.xlu0 %1614
        %1616 = vrot.lane.b32.xlu0 %v633, 28
        %v1617 = vpop.permute.xlu0 %1616
        %1618 = vrot.lane.b32.xlu0 %v636, 28
        %v1619 = vpop.permute.xlu0 %1618
        %1620 = vrot.lane.b32.xlu0 %v1140, 28
        %v1621 = vpop.permute.xlu0 %1620
        %1622 = vrot.lane.b32.xlu0 %v1559, 28
        %v1623 = vpop.permute.xlu0 %1622
        %vm1656 = vcmask 261344
        %1657 = vst.msk [vmem:[#allocation2] sm:$0xff] %vm1656, %v1561
        %1658 = vst.msk [vmem:[#allocation2 + $0x8] sm:$0xff] %vm1656, %v1563
        %1659 = vst.msk [vmem:[#allocation2 + $0x10] sm:$0xff] %vm1656, %v1565
        %1660 = vst.msk [vmem:[#allocation2 + $0x18] sm:$0xff] %vm1656, %v1567
        %1661 = vst.msk [vmem:[#allocation2 + $0x20] sm:$0xff] %vm1656, %v1569
        %1662 = vst.msk [vmem:[#allocation2 + $0x28] sm:$0xff] %vm1656, %v1571
        %1663 = vst.msk [vmem:[#allocation2 + $0x30] sm:$0xff] %vm1656, %v1573
        %1664 = vst.msk [vmem:[#allocation2 + $0x38] sm:$0xff] %vm1656, %v1575
        %1665 = vst.msk [vmem:[#allocation2 + $0x40] sm:$0xff] %vm1656, %v1577
        %1666 = vst.msk [vmem:[#allocation2 + $0x48] sm:$0xff] %vm1656, %v1579
        %1667 = vst.msk [vmem:[#allocation2 + $0x50] sm:$0xff] %vm1656, %v1581
        %1668 = vst.msk [vmem:[#allocation2 + $0x58] sm:$0xff] %vm1656, %v1583
        %1669 = vst.msk [vmem:[#allocation2 + $0x60] sm:$0xff] %vm1656, %v1585
        %1670 = vst.msk [vmem:[#allocation2 + $0x68] sm:$0xff] %vm1656, %v1587
        %1671 = vst.msk [vmem:[#allocation2 + $0x70] sm:$0xff] %vm1656, %v1589
        %1672 = vst.msk [vmem:[#allocation2 + $0x78] sm:$0xff] %vm1656, %v1591
        %1673 = vst.msk [vmem:[#allocation2 + $0x80] sm:$0xff] %vm1656, %v1593
        %1674 = vst.msk [vmem:[#allocation2 + $0x88] sm:$0xff] %vm1656, %v1595
        %1675 = vst.msk [vmem:[#allocation2 + $0x90] sm:$0xff] %vm1656, %v1597
        %1676 = vst.msk [vmem:[#allocation2 + $0x98] sm:$0xff] %vm1656, %v1599
        %1677 = vst.msk [vmem:[#allocation2 + $0xa0] sm:$0xff] %vm1656, %v1601
        %1678 = vst.msk [vmem:[#allocation2 + $0xa8] sm:$0xff] %vm1656, %v1603
        %1679 = vst.msk [vmem:[#allocation2 + $0xb0] sm:$0xff] %vm1656, %v1605
        %1680 = vst.msk [vmem:[#allocation2 + $0xb8] sm:$0xff] %vm1656, %v1607
        %1681 = vst.msk [vmem:[#allocation2 + $0xc0] sm:$0xff] %vm1656, %v1609
        %1682 = vst.msk [vmem:[#allocation2 + $0xc8] sm:$0xff] %vm1656, %v1611
        %1683 = vst.msk [vmem:[#allocation2 + $0xd0] sm:$0xff] %vm1656, %v1613
        %1684 = vst.msk [vmem:[#allocation2 + $0xd8] sm:$0xff] %vm1656, %v1615
        %1685 = vst.msk [vmem:[#allocation2 + $0xe0] sm:$0xff] %vm1656, %v1617
        %1686 = vst.msk [vmem:[#allocation2 + $0xe8] sm:$0xff] %vm1656, %v1619
        %1687 = vst.msk [vmem:[#allocation2 + $0xf0] sm:$0xff] %vm1656, %v1621
        %1688 = vst.msk [vmem:[#allocation2 + $0xf8] sm:$0xff] %vm1656, %v1623
        %v1689 = vrot.slane %v341, 2
        %v1690 = vrot.slane %v342, 2
        %v1691 = vsel %vm766, %v1689, %v1690
        %v1692 = vrot.slane %v361, 2
        %v1693 = vrot.slane %v362, 2
        %v1694 = vsel %vm766, %v1692, %v1693
        %v1695 = vrot.slane %v381, 2
        %v1696 = vrot.slane %v382, 2
        %v1697 = vsel %vm766, %v1695, %v1696
        %v1698 = vrot.slane %v401, 2
        %v1699 = vrot.slane %v402, 2
        %v1700 = vsel %vm766, %v1698, %v1699
        %1701 = vrot.lane.b32.xlu0 %v775, 32
        %v1702 = vpop.permute.xlu0 %1701
        %1703 = vrot.lane.b32.xlu0 %v778, 32
        %v1704 = vpop.permute.xlu0 %1703
        %1705 = vrot.lane.b32.xlu0 %v781, 32
        %v1706 = vpop.permute.xlu0 %1705
        %1707 = vrot.lane.b32.xlu0 %v784, 32
        %v1708 = vpop.permute.xlu0 %1707
        %1709 = vrot.lane.b32.xlu0 %v787, 32
        %v1710 = vpop.permute.xlu0 %1709
        %1711 = vrot.lane.b32.xlu0 %v790, 32
        %v1712 = vpop.permute.xlu0 %1711
        %1713 = vrot.lane.b32.xlu0 %v1272, 32
        %v1714 = vpop.permute.xlu0 %1713
        %1715 = vrot.lane.b32.xlu0 %v1691, 32
        %v1716 = vpop.permute.xlu0 %1715
        %1717 = vrot.lane.b32.xlu0 %v799, 32
        %v1718 = vpop.permute.xlu0 %1717
        %1719 = vrot.lane.b32.xlu0 %v802, 32
        %v1720 = vpop.permute.xlu0 %1719
        %1721 = vrot.lane.b32.xlu0 %v805, 32
        %v1722 = vpop.permute.xlu0 %1721
        %1723 = vrot.lane.b32.xlu0 %v808, 32
        %v1724 = vpop.permute.xlu0 %1723
        %1725 = vrot.lane.b32.xlu0 %v811, 32
        %v1726 = vpop.permute.xlu0 %1725
        %1727 = vrot.lane.b32.xlu0 %v814, 32
        %v1728 = vpop.permute.xlu0 %1727
        %1729 = vrot.lane.b32.xlu0 %v1275, 32
        %v1730 = vpop.permute.xlu0 %1729
        %1731 = vrot.lane.b32.xlu0 %v1694, 32
        %v1732 = vpop.permute.xlu0 %1731
        %1733 = vrot.lane.b32.xlu0 %v823, 32
        %v1734 = vpop.permute.xlu0 %1733
        %1735 = vrot.lane.b32.xlu0 %v826, 32
        %v1736 = vpop.permute.xlu0 %1735
        %1737 = vrot.lane.b32.xlu0 %v829, 32
        %v1738 = vpop.permute.xlu0 %1737
        %1739 = vrot.lane.b32.xlu0 %v832, 32
        %v1740 = vpop.permute.xlu0 %1739
        %1741 = vrot.lane.b32.xlu0 %v835, 32
        %v1742 = vpop.permute.xlu0 %1741
        %1743 = vrot.lane.b32.xlu0 %v838, 32
        %v1744 = vpop.permute.xlu0 %1743
        %1745 = vrot.lane.b32.xlu0 %v1278, 32
        %v1746 = vpop.permute.xlu0 %1745
        %1747 = vrot.lane.b32.xlu0 %v1697, 32
        %v1748 = vpop.permute.xlu0 %1747
        %1749 = vrot.lane.b32.xlu0 %v847, 32
        %v1750 = vpop.permute.xlu0 %1749
        %1751 = vrot.lane.b32.xlu0 %v850, 32
        %v1752 = vpop.permute.xlu0 %1751
        %1753 = vrot.lane.b32.xlu0 %v853, 32
        %v1754 = vpop.permute.xlu0 %1753
        %1755 = vrot.lane.b32.xlu0 %v856, 32
        %v1756 = vpop.permute.xlu0 %1755
        %1757 = vrot.lane.b32.xlu0 %v859, 32
        %v1758 = vpop.permute.xlu0 %1757
        %1759 = vrot.lane.b32.xlu0 %v862, 32
        %v1760 = vpop.permute.xlu0 %1759
        %1761 = vrot.lane.b32.xlu0 %v1281, 32
        %v1762 = vpop.permute.xlu0 %1761
        %1763 = vrot.lane.b32.xlu0 %v1700, 32
        %v1764 = vpop.permute.xlu0 %1763
        %vm1797 = vcmask 294144
        %1798 = vst.msk [vmem:[#allocation2] sm:$0xff] %vm1797, %v1702
        %1799 = vst.msk [vmem:[#allocation2 + $0x8] sm:$0xff] %vm1797, %v1704
        %1800 = vst.msk [vmem:[#allocation2 + $0x10] sm:$0xff] %vm1797, %v1706
        %1801 = vst.msk [vmem:[#allocation2 + $0x18] sm:$0xff] %vm1797, %v1708
        %1802 = vst.msk [vmem:[#allocation2 + $0x20] sm:$0xff] %vm1797, %v1710
        %1803 = vst.msk [vmem:[#allocation2 + $0x28] sm:$0xff] %vm1797, %v1712
        %1804 = vst.msk [vmem:[#allocation2 + $0x30] sm:$0xff] %vm1797, %v1714
        %1805 = vst.msk [vmem:[#allocation2 + $0x38] sm:$0xff] %vm1797, %v1716
        %1806 = vst.msk [vmem:[#allocation2 + $0x40] sm:$0xff] %vm1797, %v1718
        %1807 = vst.msk [vmem:[#allocation2 + $0x48] sm:$0xff] %vm1797, %v1720
        %1808 = vst.msk [vmem:[#allocation2 + $0x50] sm:$0xff] %vm1797, %v1722
        %1809 = vst.msk [vmem:[#allocation2 + $0x58] sm:$0xff] %vm1797, %v1724
        %1810 = vst.msk [vmem:[#allocation2 + $0x60] sm:$0xff] %vm1797, %v1726
        %1811 = vst.msk [vmem:[#allocation2 + $0x68] sm:$0xff] %vm1797, %v1728
        %1812 = vst.msk [vmem:[#allocation2 + $0x70] sm:$0xff] %vm1797, %v1730
        %1813 = vst.msk [vmem:[#allocation2 + $0x78] sm:$0xff] %vm1797, %v1732
        %1814 = vst.msk [vmem:[#allocation2 + $0x80] sm:$0xff] %vm1797, %v1734
        %1815 = vst.msk [vmem:[#allocation2 + $0x88] sm:$0xff] %vm1797, %v1736
        %1816 = vst.msk [vmem:[#allocation2 + $0x90] sm:$0xff] %vm1797, %v1738
        %1817 = vst.msk [vmem:[#allocation2 + $0x98] sm:$0xff] %vm1797, %v1740
        %1818 = vst.msk [vmem:[#allocation2 + $0xa0] sm:$0xff] %vm1797, %v1742
        %1819 = vst.msk [vmem:[#allocation2 + $0xa8] sm:$0xff] %vm1797, %v1744
        %1820 = vst.msk [vmem:[#allocation2 + $0xb0] sm:$0xff] %vm1797, %v1746
        %1821 = vst.msk [vmem:[#allocation2 + $0xb8] sm:$0xff] %vm1797, %v1748
        %1822 = vst.msk [vmem:[#allocation2 + $0xc0] sm:$0xff] %vm1797, %v1750
        %1823 = vst.msk [vmem:[#allocation2 + $0xc8] sm:$0xff] %vm1797, %v1752
        %1824 = vst.msk [vmem:[#allocation2 + $0xd0] sm:$0xff] %vm1797, %v1754
        %1825 = vst.msk [vmem:[#allocation2 + $0xd8] sm:$0xff] %vm1797, %v1756
        %1826 = vst.msk [vmem:[#allocation2 + $0xe0] sm:$0xff] %vm1797, %v1758
        %1827 = vst.msk [vmem:[#allocation2 + $0xe8] sm:$0xff] %vm1797, %v1760
        %1828 = vst.msk [vmem:[#allocation2 + $0xf0] sm:$0xff] %vm1797, %v1762
        %1829 = vst.msk [vmem:[#allocation2 + $0xf8] sm:$0xff] %vm1797, %v1764
        %1838 = vrot.lane.b32.xlu0 %v343, 36
        %v1839 = vpop.permute.xlu0 %1838
        %1840 = vrot.lane.b32.xlu0 %v345, 36
        %v1841 = vpop.permute.xlu0 %1840
        %1842 = vrot.lane.b32.xlu0 %v347, 36
        %v1843 = vpop.permute.xlu0 %1842
        %1844 = vrot.lane.b32.xlu0 %v349, 36
        %v1845 = vpop.permute.xlu0 %1844
        %1846 = vrot.lane.b32.xlu0 %v351, 36
        %v1847 = vpop.permute.xlu0 %1846
        %1848 = vrot.lane.b32.xlu0 %v353, 36
        %v1849 = vpop.permute.xlu0 %1848
        %1850 = vrot.lane.b32.xlu0 %v355, 36
        %v1851 = vpop.permute.xlu0 %1850
        %1852 = vrot.lane.b32.xlu0 %v357, 36
        %v1853 = vpop.permute.xlu0 %1852
        %1854 = vrot.lane.b32.xlu0 %v363, 36
        %v1855 = vpop.permute.xlu0 %1854
        %1856 = vrot.lane.b32.xlu0 %v365, 36
        %v1857 = vpop.permute.xlu0 %1856
        %1858 = vrot.lane.b32.xlu0 %v367, 36
        %v1859 = vpop.permute.xlu0 %1858
        %1860 = vrot.lane.b32.xlu0 %v369, 36
        %v1861 = vpop.permute.xlu0 %1860
        %1862 = vrot.lane.b32.xlu0 %v371, 36
        %v1863 = vpop.permute.xlu0 %1862
        %1864 = vrot.lane.b32.xlu0 %v373, 36
        %v1865 = vpop.permute.xlu0 %1864
        %1866 = vrot.lane.b32.xlu0 %v375, 36
        %v1867 = vpop.permute.xlu0 %1866
        %1868 = vrot.lane.b32.xlu0 %v377, 36
        %v1869 = vpop.permute.xlu0 %1868
        %1870 = vrot.lane.b32.xlu0 %v383, 36
        %v1871 = vpop.permute.xlu0 %1870
        %1872 = vrot.lane.b32.xlu0 %v385, 36
        %v1873 = vpop.permute.xlu0 %1872
        %1874 = vrot.lane.b32.xlu0 %v387, 36
        %v1875 = vpop.permute.xlu0 %1874
        %1876 = vrot.lane.b32.xlu0 %v389, 36
        %v1877 = vpop.permute.xlu0 %1876
        %1878 = vrot.lane.b32.xlu0 %v391, 36
        %v1879 = vpop.permute.xlu0 %1878
        %1880 = vrot.lane.b32.xlu0 %v393, 36
        %v1881 = vpop.permute.xlu0 %1880
        %1882 = vrot.lane.b32.xlu0 %v395, 36
        %v1883 = vpop.permute.xlu0 %1882
        %1884 = vrot.lane.b32.xlu0 %v397, 36
        %v1885 = vpop.permute.xlu0 %1884
        %1886 = vrot.lane.b32.xlu0 %v403, 36
        %v1887 = vpop.permute.xlu0 %1886
        %1888 = vrot.lane.b32.xlu0 %v405, 36
        %v1889 = vpop.permute.xlu0 %1888
        %1890 = vrot.lane.b32.xlu0 %v407, 36
        %v1891 = vpop.permute.xlu0 %1890
        %1892 = vrot.lane.b32.xlu0 %v409, 36
        %v1893 = vpop.permute.xlu0 %1892
        %1894 = vrot.lane.b32.xlu0 %v411, 36
        %v1895 = vpop.permute.xlu0 %1894
        %1896 = vrot.lane.b32.xlu0 %v413, 36
        %v1897 = vpop.permute.xlu0 %1896
        %1898 = vrot.lane.b32.xlu0 %v415, 36
        %v1899 = vpop.permute.xlu0 %1898
        %1900 = vrot.lane.b32.xlu0 %v417, 36
        %v1901 = vpop.permute.xlu0 %1900
        %vm1934 = vcmask 326944
        %1935 = vst.msk [vmem:[#allocation2] sm:$0xff] %vm1934, %v1839
        %1936 = vst.msk [vmem:[#allocation2 + $0x8] sm:$0xff] %vm1934, %v1841
        %1937 = vst.msk [vmem:[#allocation2 + $0x10] sm:$0xff] %vm1934, %v1843
        %1938 = vst.msk [vmem:[#allocation2 + $0x18] sm:$0xff] %vm1934, %v1845
        %1939 = vst.msk [vmem:[#allocation2 + $0x20] sm:$0xff] %vm1934, %v1847
        %1940 = vst.msk [vmem:[#allocation2 + $0x28] sm:$0xff] %vm1934, %v1849
        %1941 = vst.msk [vmem:[#allocation2 + $0x30] sm:$0xff] %vm1934, %v1851
        %1942 = vst.msk [vmem:[#allocation2 + $0x38] sm:$0xff] %vm1934, %v1853
        %1943 = vst.msk [vmem:[#allocation2 + $0x40] sm:$0xff] %vm1934, %v1855
        %1944 = vst.msk [vmem:[#allocation2 + $0x48] sm:$0xff] %vm1934, %v1857
        %1945 = vst.msk [vmem:[#allocation2 + $0x50] sm:$0xff] %vm1934, %v1859
        %1946 = vst.msk [vmem:[#allocation2 + $0x58] sm:$0xff] %vm1934, %v1861
        %1947 = vst.msk [vmem:[#allocation2 + $0x60] sm:$0xff] %vm1934, %v1863
        %1948 = vst.msk [vmem:[#allocation2 + $0x68] sm:$0xff] %vm1934, %v1865
        %1949 = vst.msk [vmem:[#allocation2 + $0x70] sm:$0xff] %vm1934, %v1867
        %1950 = vst.msk [vmem:[#allocation2 + $0x78] sm:$0xff] %vm1934, %v1869
        %1951 = vst.msk [vmem:[#allocation2 + $0x80] sm:$0xff] %vm1934, %v1871
        %1952 = vst.msk [vmem:[#allocation2 + $0x88] sm:$0xff] %vm1934, %v1873
        %1953 = vst.msk [vmem:[#allocation2 + $0x90] sm:$0xff] %vm1934, %v1875
        %1954 = vst.msk [vmem:[#allocation2 + $0x98] sm:$0xff] %vm1934, %v1877
        %1955 = vst.msk [vmem:[#allocation2 + $0xa0] sm:$0xff] %vm1934, %v1879
        %1956 = vst.msk [vmem:[#allocation2 + $0xa8] sm:$0xff] %vm1934, %v1881
        %1957 = vst.msk [vmem:[#allocation2 + $0xb0] sm:$0xff] %vm1934, %v1883
        %1958 = vst.msk [vmem:[#allocation2 + $0xb8] sm:$0xff] %vm1934, %v1885
        %1959 = vst.msk [vmem:[#allocation2 + $0xc0] sm:$0xff] %vm1934, %v1887
        %1960 = vst.msk [vmem:[#allocation2 + $0xc8] sm:$0xff] %vm1934, %v1889
        %1961 = vst.msk [vmem:[#allocation2 + $0xd0] sm:$0xff] %vm1934, %v1891
        %1962 = vst.msk [vmem:[#allocation2 + $0xd8] sm:$0xff] %vm1934, %v1893
        %1963 = vst.msk [vmem:[#allocation2 + $0xe0] sm:$0xff] %vm1934, %v1895
        %1964 = vst.msk [vmem:[#allocation2 + $0xe8] sm:$0xff] %vm1934, %v1897
        %1965 = vst.msk [vmem:[#allocation2 + $0xf0] sm:$0xff] %vm1934, %v1899
        %1966 = vst.msk [vmem:[#allocation2 + $0xf8] sm:$0xff] %vm1934, %v1901
        %v1975 = vrot.slane %v403, 1
        %v1976 = vrot.slane %v404, 1
        %v1977 = vsel %vm540, %v1975, %v1976
        %v1978 = vrot.slane %v405, 1
        %v1979 = vrot.slane %v406, 1
        %v1980 = vsel %vm540, %v1978, %v1979
        %v1981 = vrot.slane %v407, 1
        %v1982 = vrot.slane %v408, 1
        %v1983 = vsel %vm540, %v1981, %v1982
        %v1984 = vrot.slane %v409, 1
        %v1985 = vrot.slane %v410, 1
        %v1986 = vsel %vm540, %v1984, %v1985
        %v1987 = vrot.slane %v411, 1
        %v1988 = vrot.slane %v412, 1
        %v1989 = vsel %vm540, %v1987, %v1988
        %v1990 = vrot.slane %v413, 1
        %v1991 = vrot.slane %v414, 1
        %v1992 = vsel %vm540, %v1990, %v1991
        %v1993 = vrot.slane %v415, 1
        %v1994 = vrot.slane %v416, 1
        %v1995 = vsel %vm540, %v1993, %v1994
        %v1996 = vrot.slane %v417, 1
        %v1997 = vrot.slane %v418, 1
        %v1998 = vsel %vm540, %v1996, %v1997
        %1999 = vrot.lane.b32.xlu0 %v567, 40
        %v2000 = vpop.permute.xlu0 %1999
        %2001 = vrot.lane.b32.xlu0 %v570, 40
        %v2002 = vpop.permute.xlu0 %2001
        %2003 = vrot.lane.b32.xlu0 %v573, 40
        %v2004 = vpop.permute.xlu0 %2003
        %2005 = vrot.lane.b32.xlu0 %v576, 40
        %v2006 = vpop.permute.xlu0 %2005
        %2007 = vrot.lane.b32.xlu0 %v579, 40
        %v2008 = vpop.permute.xlu0 %2007
        %2009 = vrot.lane.b32.xlu0 %v582, 40
        %v2010 = vpop.permute.xlu0 %2009
        %2011 = vrot.lane.b32.xlu0 %v585, 40
        %v2012 = vpop.permute.xlu0 %2011
        %2013 = vrot.lane.b32.xlu0 %v588, 40
        %v2014 = vpop.permute.xlu0 %2013
        %2015 = vrot.lane.b32.xlu0 %v591, 40
        %v2016 = vpop.permute.xlu0 %2015
        %2017 = vrot.lane.b32.xlu0 %v594, 40
        %v2018 = vpop.permute.xlu0 %2017
        %2019 = vrot.lane.b32.xlu0 %v597, 40
        %v2020 = vpop.permute.xlu0 %2019
        %2021 = vrot.lane.b32.xlu0 %v600, 40
        %v2022 = vpop.permute.xlu0 %2021
        %2023 = vrot.lane.b32.xlu0 %v603, 40
        %v2024 = vpop.permute.xlu0 %2023
        %2025 = vrot.lane.b32.xlu0 %v606, 40
        %v2026 = vpop.permute.xlu0 %2025
        %2027 = vrot.lane.b32.xlu0 %v609, 40
        %v2028 = vpop.permute.xlu0 %2027
        %2029 = vrot.lane.b32.xlu0 %v612, 40
        %v2030 = vpop.permute.xlu0 %2029
        %2031 = vrot.lane.b32.xlu0 %v615, 40
        %v2032 = vpop.permute.xlu0 %2031
        %2033 = vrot.lane.b32.xlu0 %v618, 40
        %v2034 = vpop.permute.xlu0 %2033
        %2035 = vrot.lane.b32.xlu0 %v621, 40
        %v2036 = vpop.permute.xlu0 %2035
        %2037 = vrot.lane.b32.xlu0 %v624, 40
        %v2038 = vpop.permute.xlu0 %2037
        %2039 = vrot.lane.b32.xlu0 %v627, 40
        %v2040 = vpop.permute.xlu0 %2039
        %2041 = vrot.lane.b32.xlu0 %v630, 40
        %v2042 = vpop.permute.xlu0 %2041
        %2043 = vrot.lane.b32.xlu0 %v633, 40
        %v2044 = vpop.permute.xlu0 %2043
        %2045 = vrot.lane.b32.xlu0 %v636, 40
        %v2046 = vpop.permute.xlu0 %2045
        %2047 = vrot.lane.b32.xlu0 %v1977, 40
        %v2048 = vpop.permute.xlu0 %2047
        %2049 = vrot.lane.b32.xlu0 %v1980, 40
        %v2050 = vpop.permute.xlu0 %2049
        %2051 = vrot.lane.b32.xlu0 %v1983, 40
        %v2052 = vpop.permute.xlu0 %2051
        %2053 = vrot.lane.b32.xlu0 %v1986, 40
        %v2054 = vpop.permute.xlu0 %2053
        %2055 = vrot.lane.b32.xlu0 %v1989, 40
        %v2056 = vpop.permute.xlu0 %2055
        %2057 = vrot.lane.b32.xlu0 %v1992, 40
        %v2058 = vpop.permute.xlu0 %2057
        %2059 = vrot.lane.b32.xlu0 %v1995, 40
        %v2060 = vpop.permute.xlu0 %2059
        %2061 = vrot.lane.b32.xlu0 %v1998, 40
        %v2062 = vpop.permute.xlu0 %2061
        %vm2095 = vcmask 359744
        %2096 = vst.msk [vmem:[#allocation2] sm:$0xff] %vm2095, %v2000
        %2097 = vst.msk [vmem:[#allocation2 + $0x8] sm:$0xff] %vm2095, %v2002
        %2098 = vst.msk [vmem:[#allocation2 + $0x10] sm:$0xff] %vm2095, %v2004
        %2099 = vst.msk [vmem:[#allocation2 + $0x18] sm:$0xff] %vm2095, %v2006
        %2100 = vst.msk [vmem:[#allocation2 + $0x20] sm:$0xff] %vm2095, %v2008
        %2101 = vst.msk [vmem:[#allocation2 + $0x28] sm:$0xff] %vm2095, %v2010
        %2102 = vst.msk [vmem:[#allocation2 + $0x30] sm:$0xff] %vm2095, %v2012
        %2103 = vst.msk [vmem:[#allocation2 + $0x38] sm:$0xff] %vm2095, %v2014
        %2104 = vst.msk [vmem:[#allocation2 + $0x40] sm:$0xff] %vm2095, %v2016
        %2105 = vst.msk [vmem:[#allocation2 + $0x48] sm:$0xff] %vm2095, %v2018
        %2106 = vst.msk [vmem:[#allocation2 + $0x50] sm:$0xff] %vm2095, %v2020
        %2107 = vst.msk [vmem:[#allocation2 + $0x58] sm:$0xff] %vm2095, %v2022
        %2108 = vst.msk [vmem:[#allocation2 + $0x60] sm:$0xff] %vm2095, %v2024
        %2109 = vst.msk [vmem:[#allocation2 + $0x68] sm:$0xff] %vm2095, %v2026
        %2110 = vst.msk [vmem:[#allocation2 + $0x70] sm:$0xff] %vm2095, %v2028
        %2111 = vst.msk [vmem:[#allocation2 + $0x78] sm:$0xff] %vm2095, %v2030
        %2112 = vst.msk [vmem:[#allocation2 + $0x80] sm:$0xff] %vm2095, %v2032
        %2113 = vst.msk [vmem:[#allocation2 + $0x88] sm:$0xff] %vm2095, %v2034
        %2114 = vst.msk [vmem:[#allocation2 + $0x90] sm:$0xff] %vm2095, %v2036
        %2115 = vst.msk [vmem:[#allocation2 + $0x98] sm:$0xff] %vm2095, %v2038
        %2116 = vst.msk [vmem:[#allocation2 + $0xa0] sm:$0xff] %vm2095, %v2040
        %2117 = vst.msk [vmem:[#allocation2 + $0xa8] sm:$0xff] %vm2095, %v2042
        %2118 = vst.msk [vmem:[#allocation2 + $0xb0] sm:$0xff] %vm2095, %v2044
        %2119 = vst.msk [vmem:[#allocation2 + $0xb8] sm:$0xff] %vm2095, %v2046
        %2120 = vst.msk [vmem:[#allocation2 + $0xc0] sm:$0xff] %vm2095, %v2048
        %2121 = vst.msk [vmem:[#allocation2 + $0xc8] sm:$0xff] %vm2095, %v2050
        %2122 = vst.msk [vmem:[#allocation2 + $0xd0] sm:$0xff] %vm2095, %v2052
        %2123 = vst.msk [vmem:[#allocation2 + $0xd8] sm:$0xff] %vm2095, %v2054
        %2124 = vst.msk [vmem:[#allocation2 + $0xe0] sm:$0xff] %vm2095, %v2056
        %2125 = vst.msk [vmem:[#allocation2 + $0xe8] sm:$0xff] %vm2095, %v2058
        %2126 = vst.msk [vmem:[#allocation2 + $0xf0] sm:$0xff] %vm2095, %v2060
        %2127 = vst.msk [vmem:[#allocation2 + $0xf8] sm:$0xff] %vm2095, %v2062
        %v2128 = vrot.slane %v403, 2
        %v2129 = vrot.slane %v404, 2
        %v2130 = vsel %vm766, %v2128, %v2129
        %v2131 = vrot.slane %v405, 2
        %v2132 = vrot.slane %v406, 2
        %v2133 = vsel %vm766, %v2131, %v2132
        %v2134 = vrot.slane %v407, 2
        %v2135 = vrot.slane %v408, 2
        %v2136 = vsel %vm766, %v2134, %v2135
        %v2137 = vrot.slane %v409, 2
        %v2138 = vrot.slane %v410, 2
        %v2139 = vsel %vm766, %v2137, %v2138
        %v2140 = vrot.slane %v411, 2
        %v2141 = vrot.slane %v412, 2
        %v2142 = vsel %vm766, %v2140, %v2141
        %v2143 = vrot.slane %v413, 2
        %v2144 = vrot.slane %v414, 2
        %v2145 = vsel %vm766, %v2143, %v2144
        %v2146 = vrot.slane %v415, 2
        %v2147 = vrot.slane %v416, 2
        %v2148 = vsel %vm766, %v2146, %v2147
        %v2149 = vrot.slane %v417, 2
        %v2150 = vrot.slane %v418, 2
        %v2151 = vsel %vm766, %v2149, %v2150
        %2152 = vrot.lane.b32.xlu0 %v793, 44
        %v2153 = vpop.permute.xlu0 %2152
        %2154 = vrot.lane.b32.xlu0 %v796, 44
        %v2155 = vpop.permute.xlu0 %2154
        %2156 = vrot.lane.b32.xlu0 %v799, 44
        %v2157 = vpop.permute.xlu0 %2156
        %2158 = vrot.lane.b32.xlu0 %v802, 44
        %v2159 = vpop.permute.xlu0 %2158
        %2160 = vrot.lane.b32.xlu0 %v805, 44
        %v2161 = vpop.permute.xlu0 %2160
        %2162 = vrot.lane.b32.xlu0 %v808, 44
        %v2163 = vpop.permute.xlu0 %2162
        %2164 = vrot.lane.b32.xlu0 %v811, 44
        %v2165 = vpop.permute.xlu0 %2164
        %2166 = vrot.lane.b32.xlu0 %v814, 44
        %v2167 = vpop.permute.xlu0 %2166
        %2168 = vrot.lane.b32.xlu0 %v817, 44
        %v2169 = vpop.permute.xlu0 %2168
        %2170 = vrot.lane.b32.xlu0 %v820, 44
        %v2171 = vpop.permute.xlu0 %2170
        %2172 = vrot.lane.b32.xlu0 %v823, 44
        %v2173 = vpop.permute.xlu0 %2172
        %2174 = vrot.lane.b32.xlu0 %v826, 44
        %v2175 = vpop.permute.xlu0 %2174
        %2176 = vrot.lane.b32.xlu0 %v829, 44
        %v2177 = vpop.permute.xlu0 %2176
        %2178 = vrot.lane.b32.xlu0 %v832, 44
        %v2179 = vpop.permute.xlu0 %2178
        %2180 = vrot.lane.b32.xlu0 %v835, 44
        %v2181 = vpop.permute.xlu0 %2180
        %2182 = vrot.lane.b32.xlu0 %v838, 44
        %v2183 = vpop.permute.xlu0 %2182
        %2184 = vrot.lane.b32.xlu0 %v841, 44
        %v2185 = vpop.permute.xlu0 %2184
        %2186 = vrot.lane.b32.xlu0 %v844, 44
        %v2187 = vpop.permute.xlu0 %2186
        %2188 = vrot.lane.b32.xlu0 %v847, 44
        %v2189 = vpop.permute.xlu0 %2188
        %2190 = vrot.lane.b32.xlu0 %v850, 44
        %v2191 = vpop.permute.xlu0 %2190
        %2192 = vrot.lane.b32.xlu0 %v853, 44
        %v2193 = vpop.permute.xlu0 %2192
        %2194 = vrot.lane.b32.xlu0 %v856, 44
        %v2195 = vpop.permute.xlu0 %2194
        %2196 = vrot.lane.b32.xlu0 %v859, 44
        %v2197 = vpop.permute.xlu0 %2196
        %2198 = vrot.lane.b32.xlu0 %v862, 44
        %v2199 = vpop.permute.xlu0 %2198
        %2200 = vrot.lane.b32.xlu0 %v2130, 44
        %v2201 = vpop.permute.xlu0 %2200
        %2202 = vrot.lane.b32.xlu0 %v2133, 44
        %v2203 = vpop.permute.xlu0 %2202
        %2204 = vrot.lane.b32.xlu0 %v2136, 44
        %v2205 = vpop.permute.xlu0 %2204
        %2206 = vrot.lane.b32.xlu0 %v2139, 44
        %v2207 = vpop.permute.xlu0 %2206
        %2208 = vrot.lane.b32.xlu0 %v2142, 44
        %v2209 = vpop.permute.xlu0 %2208
        %2210 = vrot.lane.b32.xlu0 %v2145, 44
        %v2211 = vpop.permute.xlu0 %2210
        %2212 = vrot.lane.b32.xlu0 %v2148, 44
        %v2213 = vpop.permute.xlu0 %2212
        %2214 = vrot.lane.b32.xlu0 %v2151, 44
        %v2215 = vpop.permute.xlu0 %2214
        %vm2248 = vcmask 392544
        %2249 = vst.msk [vmem:[#allocation2] sm:$0xff] %vm2248, %v2153
        %2250 = vst.msk [vmem:[#allocation2 + $0x8] sm:$0xff] %vm2248, %v2155
        %2251 = vst.msk [vmem:[#allocation2 + $0x10] sm:$0xff] %vm2248, %v2157
        %2252 = vst.msk [vmem:[#allocation2 + $0x18] sm:$0xff] %vm2248, %v2159
        %2253 = vst.msk [vmem:[#allocation2 + $0x20] sm:$0xff] %vm2248, %v2161
        %2254 = vst.msk [vmem:[#allocation2 + $0x28] sm:$0xff] %vm2248, %v2163
        %2255 = vst.msk [vmem:[#allocation2 + $0x30] sm:$0xff] %vm2248, %v2165
        %2256 = vst.msk [vmem:[#allocation2 + $0x38] sm:$0xff] %vm2248, %v2167
        %2257 = vst.msk [vmem:[#allocation2 + $0x40] sm:$0xff] %vm2248, %v2169
        %2258 = vst.msk [vmem:[#allocation2 + $0x48] sm:$0xff] %vm2248, %v2171
        %2259 = vst.msk [vmem:[#allocation2 + $0x50] sm:$0xff] %vm2248, %v2173
        %2260 = vst.msk [vmem:[#allocation2 + $0x58] sm:$0xff] %vm2248, %v2175
        %2261 = vst.msk [vmem:[#allocation2 + $0x60] sm:$0xff] %vm2248, %v2177
        %2262 = vst.msk [vmem:[#allocation2 + $0x68] sm:$0xff] %vm2248, %v2179
        %2263 = vst.msk [vmem:[#allocation2 + $0x70] sm:$0xff] %vm2248, %v2181
        %2264 = vst.msk [vmem:[#allocation2 + $0x78] sm:$0xff] %vm2248, %v2183
        %2265 = vst.msk [vmem:[#allocation2 + $0x80] sm:$0xff] %vm2248, %v2185
        %2266 = vst.msk [vmem:[#allocation2 + $0x88] sm:$0xff] %vm2248, %v2187
        %2267 = vst.msk [vmem:[#allocation2 + $0x90] sm:$0xff] %vm2248, %v2189
        %2268 = vst.msk [vmem:[#allocation2 + $0x98] sm:$0xff] %vm2248, %v2191
        %2269 = vst.msk [vmem:[#allocation2 + $0xa0] sm:$0xff] %vm2248, %v2193
        %2270 = vst.msk [vmem:[#allocation2 + $0xa8] sm:$0xff] %vm2248, %v2195
        %2271 = vst.msk [vmem:[#allocation2 + $0xb0] sm:$0xff] %vm2248, %v2197
        %2272 = vst.msk [vmem:[#allocation2 + $0xb8] sm:$0xff] %vm2248, %v2199
        %2273 = vst.msk [vmem:[#allocation2 + $0xc0] sm:$0xff] %vm2248, %v2201
        %2274 = vst.msk [vmem:[#allocation2 + $0xc8] sm:$0xff] %vm2248, %v2203
        %2275 = vst.msk [vmem:[#allocation2 + $0xd0] sm:$0xff] %vm2248, %v2205
        %2276 = vst.msk [vmem:[#allocation2 + $0xd8] sm:$0xff] %vm2248, %v2207
        %2277 = vst.msk [vmem:[#allocation2 + $0xe0] sm:$0xff] %vm2248, %v2209
        %2278 = vst.msk [vmem:[#allocation2 + $0xe8] sm:$0xff] %vm2248, %v2211
        %2279 = vst.msk [vmem:[#allocation2 + $0xf0] sm:$0xff] %vm2248, %v2213
        %2280 = vst.msk [vmem:[#allocation2 + $0xf8] sm:$0xff] %vm2248, %v2215
        %2282 = vrot.lane.b32.xlu0 %v345, 48
        %v2283 = vpop.permute.xlu0 %2282
        %2284 = vrot.lane.b32.xlu0 %v347, 48
        %v2285 = vpop.permute.xlu0 %2284
        %2286 = vrot.lane.b32.xlu0 %v349, 48
        %v2287 = vpop.permute.xlu0 %2286
        %2288 = vrot.lane.b32.xlu0 %v351, 48
        %v2289 = vpop.permute.xlu0 %2288
        %2290 = vrot.lane.b32.xlu0 %v353, 48
        %v2291 = vpop.permute.xlu0 %2290
        %2292 = vrot.lane.b32.xlu0 %v355, 48
        %v2293 = vpop.permute.xlu0 %2292
        %2294 = vrot.lane.b32.xlu0 %v357, 48
        %v2295 = vpop.permute.xlu0 %2294
        %2296 = vrot.lane.b32.xlu0 %v359, 48
        %v2297 = vpop.permute.xlu0 %2296
        %2298 = vrot.lane.b32.xlu0 %v365, 48
        %v2299 = vpop.permute.xlu0 %2298
        %2300 = vrot.lane.b32.xlu0 %v367, 48
        %v2301 = vpop.permute.xlu0 %2300
        %2302 = vrot.lane.b32.xlu0 %v369, 48
        %v2303 = vpop.permute.xlu0 %2302
        %2304 = vrot.lane.b32.xlu0 %v371, 48
        %v2305 = vpop.permute.xlu0 %2304
        %2306 = vrot.lane.b32.xlu0 %v373, 48
        %v2307 = vpop.permute.xlu0 %2306
        %2308 = vrot.lane.b32.xlu0 %v375, 48
        %v2309 = vpop.permute.xlu0 %2308
        %2310 = vrot.lane.b32.xlu0 %v377, 48
        %v2311 = vpop.permute.xlu0 %2310
        %2312 = vrot.lane.b32.xlu0 %v379, 48
        %v2313 = vpop.permute.xlu0 %2312
        %2314 = vrot.lane.b32.xlu0 %v385, 48
        %v2315 = vpop.permute.xlu0 %2314
        %2316 = vrot.lane.b32.xlu0 %v387, 48
        %v2317 = vpop.permute.xlu0 %2316
        %2318 = vrot.lane.b32.xlu0 %v389, 48
        %v2319 = vpop.permute.xlu0 %2318
        %2320 = vrot.lane.b32.xlu0 %v391, 48
        %v2321 = vpop.permute.xlu0 %2320
        %2322 = vrot.lane.b32.xlu0 %v393, 48
        %v2323 = vpop.permute.xlu0 %2322
        %2324 = vrot.lane.b32.xlu0 %v395, 48
        %v2325 = vpop.permute.xlu0 %2324
        %2326 = vrot.lane.b32.xlu0 %v397, 48
        %v2327 = vpop.permute.xlu0 %2326
        %2328 = vrot.lane.b32.xlu0 %v399, 48
        %v2329 = vpop.permute.xlu0 %2328
        %2330 = vrot.lane.b32.xlu0 %v405, 48
        %v2331 = vpop.permute.xlu0 %2330
        %2332 = vrot.lane.b32.xlu0 %v407, 48
        %v2333 = vpop.permute.xlu0 %2332
        %2334 = vrot.lane.b32.xlu0 %v409, 48
        %v2335 = vpop.permute.xlu0 %2334
        %2336 = vrot.lane.b32.xlu0 %v411, 48
        %v2337 = vpop.permute.xlu0 %2336
        %2338 = vrot.lane.b32.xlu0 %v413, 48
        %v2339 = vpop.permute.xlu0 %2338
        %2340 = vrot.lane.b32.xlu0 %v415, 48
        %v2341 = vpop.permute.xlu0 %2340
        %2342 = vrot.lane.b32.xlu0 %v417, 48
        %v2343 = vpop.permute.xlu0 %2342
        %2344 = vrot.lane.b32.xlu0 %v419, 48
        %v2345 = vpop.permute.xlu0 %2344
        %vm2378 = vcmask 425344
        %2379 = vst.msk [vmem:[#allocation2] sm:$0xff] %vm2378, %v2283
        %2380 = vst.msk [vmem:[#allocation2 + $0x8] sm:$0xff] %vm2378, %v2285
        %2381 = vst.msk [vmem:[#allocation2 + $0x10] sm:$0xff] %vm2378, %v2287
        %2382 = vst.msk [vmem:[#allocation2 + $0x18] sm:$0xff] %vm2378, %v2289
        %2383 = vst.msk [vmem:[#allocation2 + $0x20] sm:$0xff] %vm2378, %v2291
        %2384 = vst.msk [vmem:[#allocation2 + $0x28] sm:$0xff] %vm2378, %v2293
        %2385 = vst.msk [vmem:[#allocation2 + $0x30] sm:$0xff] %vm2378, %v2295
        %2386 = vst.msk [vmem:[#allocation2 + $0x38] sm:$0xff] %vm2378, %v2297
        %2387 = vst.msk [vmem:[#allocation2 + $0x40] sm:$0xff] %vm2378, %v2299
        %2388 = vst.msk [vmem:[#allocation2 + $0x48] sm:$0xff] %vm2378, %v2301
        %2389 = vst.msk [vmem:[#allocation2 + $0x50] sm:$0xff] %vm2378, %v2303
        %2390 = vst.msk [vmem:[#allocation2 + $0x58] sm:$0xff] %vm2378, %v2305
        %2391 = vst.msk [vmem:[#allocation2 + $0x60] sm:$0xff] %vm2378, %v2307
        %2392 = vst.msk [vmem:[#allocation2 + $0x68] sm:$0xff] %vm2378, %v2309
        %2393 = vst.msk [vmem:[#allocation2 + $0x70] sm:$0xff] %vm2378, %v2311
        %2394 = vst.msk [vmem:[#allocation2 + $0x78] sm:$0xff] %vm2378, %v2313
        %2395 = vst.msk [vmem:[#allocation2 + $0x80] sm:$0xff] %vm2378, %v2315
        %2396 = vst.msk [vmem:[#allocation2 + $0x88] sm:$0xff] %vm2378, %v2317
        %2397 = vst.msk [vmem:[#allocation2 + $0x90] sm:$0xff] %vm2378, %v2319
        %2398 = vst.msk [vmem:[#allocation2 + $0x98] sm:$0xff] %vm2378, %v2321
        %2399 = vst.msk [vmem:[#allocation2 + $0xa0] sm:$0xff] %vm2378, %v2323
        %2400 = vst.msk [vmem:[#allocation2 + $0xa8] sm:$0xff] %vm2378, %v2325
        %2401 = vst.msk [vmem:[#allocation2 + $0xb0] sm:$0xff] %vm2378, %v2327
        %2402 = vst.msk [vmem:[#allocation2 + $0xb8] sm:$0xff] %vm2378, %v2329
        %2403 = vst.msk [vmem:[#allocation2 + $0xc0] sm:$0xff] %vm2378, %v2331
        %2404 = vst.msk [vmem:[#allocation2 + $0xc8] sm:$0xff] %vm2378, %v2333
        %2405 = vst.msk [vmem:[#allocation2 + $0xd0] sm:$0xff] %vm2378, %v2335
        %2406 = vst.msk [vmem:[#allocation2 + $0xd8] sm:$0xff] %vm2378, %v2337
        %2407 = vst.msk [vmem:[#allocation2 + $0xe0] sm:$0xff] %vm2378, %v2339
        %2408 = vst.msk [vmem:[#allocation2 + $0xe8] sm:$0xff] %vm2378, %v2341
        %2409 = vst.msk [vmem:[#allocation2 + $0xf0] sm:$0xff] %vm2378, %v2343
        %2410 = vst.msk [vmem:[#allocation2 + $0xf8] sm:$0xff] %vm2378, %v2345
        %v2412 = vrot.slane %v419, 1
        %v2413 = vrot.slane %v420, 1
        %v2414 = vsel %vm540, %v2412, %v2413
        %2415 = vrot.lane.b32.xlu0 %v570, 52
        %v2416 = vpop.permute.xlu0 %2415
        %2417 = vrot.lane.b32.xlu0 %v573, 52
        %v2418 = vpop.permute.xlu0 %2417
        %2419 = vrot.lane.b32.xlu0 %v576, 52
        %v2420 = vpop.permute.xlu0 %2419
        %2421 = vrot.lane.b32.xlu0 %v579, 52
        %v2422 = vpop.permute.xlu0 %2421
        %2423 = vrot.lane.b32.xlu0 %v582, 52
        %v2424 = vpop.permute.xlu0 %2423
        %2425 = vrot.lane.b32.xlu0 %v585, 52
        %v2426 = vpop.permute.xlu0 %2425
        %2427 = vrot.lane.b32.xlu0 %v588, 52
        %v2428 = vpop.permute.xlu0 %2427
        %2429 = vrot.lane.b32.xlu0 %v1134, 52
        %v2430 = vpop.permute.xlu0 %2429
        %2431 = vrot.lane.b32.xlu0 %v594, 52
        %v2432 = vpop.permute.xlu0 %2431
        %2433 = vrot.lane.b32.xlu0 %v597, 52
        %v2434 = vpop.permute.xlu0 %2433
        %2435 = vrot.lane.b32.xlu0 %v600, 52
        %v2436 = vpop.permute.xlu0 %2435
        %2437 = vrot.lane.b32.xlu0 %v603, 52
        %v2438 = vpop.permute.xlu0 %2437
        %2439 = vrot.lane.b32.xlu0 %v606, 52
        %v2440 = vpop.permute.xlu0 %2439
        %2441 = vrot.lane.b32.xlu0 %v609, 52
        %v2442 = vpop.permute.xlu0 %2441
        %2443 = vrot.lane.b32.xlu0 %v612, 52
        %v2444 = vpop.permute.xlu0 %2443
        %2445 = vrot.lane.b32.xlu0 %v1137, 52
        %v2446 = vpop.permute.xlu0 %2445
        %2447 = vrot.lane.b32.xlu0 %v618, 52
        %v2448 = vpop.permute.xlu0 %2447
        %2449 = vrot.lane.b32.xlu0 %v621, 52
        %v2450 = vpop.permute.xlu0 %2449
        %2451 = vrot.lane.b32.xlu0 %v624, 52
        %v2452 = vpop.permute.xlu0 %2451
        %2453 = vrot.lane.b32.xlu0 %v627, 52
        %v2454 = vpop.permute.xlu0 %2453
        %2455 = vrot.lane.b32.xlu0 %v630, 52
        %v2456 = vpop.permute.xlu0 %2455
        %2457 = vrot.lane.b32.xlu0 %v633, 52
        %v2458 = vpop.permute.xlu0 %2457
        %2459 = vrot.lane.b32.xlu0 %v636, 52
        %v2460 = vpop.permute.xlu0 %2459
        %2461 = vrot.lane.b32.xlu0 %v1140, 52
        %v2462 = vpop.permute.xlu0 %2461
        %2463 = vrot.lane.b32.xlu0 %v1980, 52
        %v2464 = vpop.permute.xlu0 %2463
        %2465 = vrot.lane.b32.xlu0 %v1983, 52
        %v2466 = vpop.permute.xlu0 %2465
        %2467 = vrot.lane.b32.xlu0 %v1986, 52
        %v2468 = vpop.permute.xlu0 %2467
        %2469 = vrot.lane.b32.xlu0 %v1989, 52
        %v2470 = vpop.permute.xlu0 %2469
        %2471 = vrot.lane.b32.xlu0 %v1992, 52
        %v2472 = vpop.permute.xlu0 %2471
        %2473 = vrot.lane.b32.xlu0 %v1995, 52
        %v2474 = vpop.permute.xlu0 %2473
        %2475 = vrot.lane.b32.xlu0 %v1998, 52
        %v2476 = vpop.permute.xlu0 %2475
        %2477 = vrot.lane.b32.xlu0 %v2414, 52
        %v2478 = vpop.permute.xlu0 %2477
        %vm2511 = vcmask 458144
        %2512 = vst.msk [vmem:[#allocation2] sm:$0xff] %vm2511, %v2416
        %2513 = vst.msk [vmem:[#allocation2 + $0x8] sm:$0xff] %vm2511, %v2418
        %2514 = vst.msk [vmem:[#allocation2 + $0x10] sm:$0xff] %vm2511, %v2420
        %2515 = vst.msk [vmem:[#allocation2 + $0x18] sm:$0xff] %vm2511, %v2422
        %2516 = vst.msk [vmem:[#allocation2 + $0x20] sm:$0xff] %vm2511, %v2424
        %2517 = vst.msk [vmem:[#allocation2 + $0x28] sm:$0xff] %vm2511, %v2426
        %2518 = vst.msk [vmem:[#allocation2 + $0x30] sm:$0xff] %vm2511, %v2428
        %2519 = vst.msk [vmem:[#allocation2 + $0x38] sm:$0xff] %vm2511, %v2430
        %2520 = vst.msk [vmem:[#allocation2 + $0x40] sm:$0xff] %vm2511, %v2432
        %2521 = vst.msk [vmem:[#allocation2 + $0x48] sm:$0xff] %vm2511, %v2434
        %2522 = vst.msk [vmem:[#allocation2 + $0x50] sm:$0xff] %vm2511, %v2436
        %2523 = vst.msk [vmem:[#allocation2 + $0x58] sm:$0xff] %vm2511, %v2438
        %2524 = vst.msk [vmem:[#allocation2 + $0x60] sm:$0xff] %vm2511, %v2440
        %2525 = vst.msk [vmem:[#allocation2 + $0x68] sm:$0xff] %vm2511, %v2442
        %2526 = vst.msk [vmem:[#allocation2 + $0x70] sm:$0xff] %vm2511, %v2444
        %2527 = vst.msk [vmem:[#allocation2 + $0x78] sm:$0xff] %vm2511, %v2446
        %2528 = vst.msk [vmem:[#allocation2 + $0x80] sm:$0xff] %vm2511, %v2448
        %2529 = vst.msk [vmem:[#allocation2 + $0x88] sm:$0xff] %vm2511, %v2450
        %2530 = vst.msk [vmem:[#allocation2 + $0x90] sm:$0xff] %vm2511, %v2452
        %2531 = vst.msk [vmem:[#allocation2 + $0x98] sm:$0xff] %vm2511, %v2454
        %2532 = vst.msk [vmem:[#allocation2 + $0xa0] sm:$0xff] %vm2511, %v2456
        %2533 = vst.msk [vmem:[#allocation2 + $0xa8] sm:$0xff] %vm2511, %v2458
        %2534 = vst.msk [vmem:[#allocation2 + $0xb0] sm:$0xff] %vm2511, %v2460
        %2535 = vst.msk [vmem:[#allocation2 + $0xb8] sm:$0xff] %vm2511, %v2462
        %2536 = vst.msk [vmem:[#allocation2 + $0xc0] sm:$0xff] %vm2511, %v2464
        %2537 = vst.msk [vmem:[#allocation2 + $0xc8] sm:$0xff] %vm2511, %v2466
        %2538 = vst.msk [vmem:[#allocation2 + $0xd0] sm:$0xff] %vm2511, %v2468
        %2539 = vst.msk [vmem:[#allocation2 + $0xd8] sm:$0xff] %vm2511, %v2470
        %2540 = vst.msk [vmem:[#allocation2 + $0xe0] sm:$0xff] %vm2511, %v2472
        %2541 = vst.msk [vmem:[#allocation2 + $0xe8] sm:$0xff] %vm2511, %v2474
        %2542 = vst.msk [vmem:[#allocation2 + $0xf0] sm:$0xff] %vm2511, %v2476
        %2543 = vst.msk [vmem:[#allocation2 + $0xf8] sm:$0xff] %vm2511, %v2478
        %v2544 = vrot.slane %v419, 2
        %v2545 = vrot.slane %v420, 2
        %v2546 = vsel %vm766, %v2544, %v2545
        %2547 = vrot.lane.b32.xlu0 %v796, 56
        %v2548 = vpop.permute.xlu0 %2547
        %2549 = vrot.lane.b32.xlu0 %v799, 56
        %v2550 = vpop.permute.xlu0 %2549
        %2551 = vrot.lane.b32.xlu0 %v802, 56
        %v2552 = vpop.permute.xlu0 %2551
        %2553 = vrot.lane.b32.xlu0 %v805, 56
        %v2554 = vpop.permute.xlu0 %2553
        %2555 = vrot.lane.b32.xlu0 %v808, 56
        %v2556 = vpop.permute.xlu0 %2555
        %2557 = vrot.lane.b32.xlu0 %v811, 56
        %v2558 = vpop.permute.xlu0 %2557
        %2559 = vrot.lane.b32.xlu0 %v814, 56
        %v2560 = vpop.permute.xlu0 %2559
        %2561 = vrot.lane.b32.xlu0 %v1275, 56
        %v2562 = vpop.permute.xlu0 %2561
        %2563 = vrot.lane.b32.xlu0 %v820, 56
        %v2564 = vpop.permute.xlu0 %2563
        %2565 = vrot.lane.b32.xlu0 %v823, 56
        %v2566 = vpop.permute.xlu0 %2565
        %2567 = vrot.lane.b32.xlu0 %v826, 56
        %v2568 = vpop.permute.xlu0 %2567
        %2569 = vrot.lane.b32.xlu0 %v829, 56
        %v2570 = vpop.permute.xlu0 %2569
        %2571 = vrot.lane.b32.xlu0 %v832, 56
        %v2572 = vpop.permute.xlu0 %2571
        %2573 = vrot.lane.b32.xlu0 %v835, 56
        %v2574 = vpop.permute.xlu0 %2573
        %2575 = vrot.lane.b32.xlu0 %v838, 56
        %v2576 = vpop.permute.xlu0 %2575
        %2577 = vrot.lane.b32.xlu0 %v1278, 56
        %v2578 = vpop.permute.xlu0 %2577
        %2579 = vrot.lane.b32.xlu0 %v844, 56
        %v2580 = vpop.permute.xlu0 %2579
        %2581 = vrot.lane.b32.xlu0 %v847, 56
        %v2582 = vpop.permute.xlu0 %2581
        %2583 = vrot.lane.b32.xlu0 %v850, 56
        %v2584 = vpop.permute.xlu0 %2583
        %2585 = vrot.lane.b32.xlu0 %v853, 56
        %v2586 = vpop.permute.xlu0 %2585
        %2587 = vrot.lane.b32.xlu0 %v856, 56
        %v2588 = vpop.permute.xlu0 %2587
        %2589 = vrot.lane.b32.xlu0 %v859, 56
        %v2590 = vpop.permute.xlu0 %2589
        %2591 = vrot.lane.b32.xlu0 %v862, 56
        %v2592 = vpop.permute.xlu0 %2591
        %2593 = vrot.lane.b32.xlu0 %v1281, 56
        %v2594 = vpop.permute.xlu0 %2593
        %2595 = vrot.lane.b32.xlu0 %v2133, 56
        %v2596 = vpop.permute.xlu0 %2595
        %2597 = vrot.lane.b32.xlu0 %v2136, 56
        %v2598 = vpop.permute.xlu0 %2597
        %2599 = vrot.lane.b32.xlu0 %v2139, 56
        %v2600 = vpop.permute.xlu0 %2599
        %2601 = vrot.lane.b32.xlu0 %v2142, 56
        %v2602 = vpop.permute.xlu0 %2601
        %2603 = vrot.lane.b32.xlu0 %v2145, 56
        %v2604 = vpop.permute.xlu0 %2603
        %2605 = vrot.lane.b32.xlu0 %v2148, 56
        %v2606 = vpop.permute.xlu0 %2605
        %2607 = vrot.lane.b32.xlu0 %v2151, 56
        %v2608 = vpop.permute.xlu0 %2607
        %2609 = vrot.lane.b32.xlu0 %v2546, 56
        %v2610 = vpop.permute.xlu0 %2609
        %vm2643 = vcmask 490944
        %2644 = vst.msk [vmem:[#allocation2] sm:$0xff] %vm2643, %v2548
        %2645 = vst.msk [vmem:[#allocation2 + $0x8] sm:$0xff] %vm2643, %v2550
        %2646 = vst.msk [vmem:[#allocation2 + $0x10] sm:$0xff] %vm2643, %v2552
        %2647 = vst.msk [vmem:[#allocation2 + $0x18] sm:$0xff] %vm2643, %v2554
        %2648 = vst.msk [vmem:[#allocation2 + $0x20] sm:$0xff] %vm2643, %v2556
        %2649 = vst.msk [vmem:[#allocation2 + $0x28] sm:$0xff] %vm2643, %v2558
        %2650 = vst.msk [vmem:[#allocation2 + $0x30] sm:$0xff] %vm2643, %v2560
        %2651 = vst.msk [vmem:[#allocation2 + $0x38] sm:$0xff] %vm2643, %v2562
        %2652 = vst.msk [vmem:[#allocation2 + $0x40] sm:$0xff] %vm2643, %v2564
        %2653 = vst.msk [vmem:[#allocation2 + $0x48] sm:$0xff] %vm2643, %v2566
        %2654 = vst.msk [vmem:[#allocation2 + $0x50] sm:$0xff] %vm2643, %v2568
        %2655 = vst.msk [vmem:[#allocation2 + $0x58] sm:$0xff] %vm2643, %v2570
        %2656 = vst.msk [vmem:[#allocation2 + $0x60] sm:$0xff] %vm2643, %v2572
        %2657 = vst.msk [vmem:[#allocation2 + $0x68] sm:$0xff] %vm2643, %v2574
        %2658 = vst.msk [vmem:[#allocation2 + $0x70] sm:$0xff] %vm2643, %v2576
        %2659 = vst.msk [vmem:[#allocation2 + $0x78] sm:$0xff] %vm2643, %v2578
        %2660 = vst.msk [vmem:[#allocation2 + $0x80] sm:$0xff] %vm2643, %v2580
        %2661 = vst.msk [vmem:[#allocation2 + $0x88] sm:$0xff] %vm2643, %v2582
        %2662 = vst.msk [vmem:[#allocation2 + $0x90] sm:$0xff] %vm2643, %v2584
        %2663 = vst.msk [vmem:[#allocation2 + $0x98] sm:$0xff] %vm2643, %v2586
        %2664 = vst.msk [vmem:[#allocation2 + $0xa0] sm:$0xff] %vm2643, %v2588
        %2665 = vst.msk [vmem:[#allocation2 + $0xa8] sm:$0xff] %vm2643, %v2590
        %2666 = vst.msk [vmem:[#allocation2 + $0xb0] sm:$0xff] %vm2643, %v2592
        %2667 = vst.msk [vmem:[#allocation2 + $0xb8] sm:$0xff] %vm2643, %v2594
        %2668 = vst.msk [vmem:[#allocation2 + $0xc0] sm:$0xff] %vm2643, %v2596
        %2669 = vst.msk [vmem:[#allocation2 + $0xc8] sm:$0xff] %vm2643, %v2598
        %2670 = vst.msk [vmem:[#allocation2 + $0xd0] sm:$0xff] %vm2643, %v2600
        %2671 = vst.msk [vmem:[#allocation2 + $0xd8] sm:$0xff] %vm2643, %v2602
        %2672 = vst.msk [vmem:[#allocation2 + $0xe0] sm:$0xff] %vm2643, %v2604
        %2673 = vst.msk [vmem:[#allocation2 + $0xe8] sm:$0xff] %vm2643, %v2606
        %2674 = vst.msk [vmem:[#allocation2 + $0xf0] sm:$0xff] %vm2643, %v2608
        %2675 = vst.msk [vmem:[#allocation2 + $0xf8] sm:$0xff] %vm2643, %v2610
        %2677 = vrot.lane.b32.xlu0 %v347, 60
        %v2678 = vpop.permute.xlu0 %2677
        %2679 = vrot.lane.b32.xlu0 %v349, 60
        %v2680 = vpop.permute.xlu0 %2679
        %2681 = vrot.lane.b32.xlu0 %v351, 60
        %v2682 = vpop.permute.xlu0 %2681
        %2683 = vrot.lane.b32.xlu0 %v353, 60
        %v2684 = vpop.permute.xlu0 %2683
        %2685 = vrot.lane.b32.xlu0 %v355, 60
        %v2686 = vpop.permute.xlu0 %2685
        %2687 = vrot.lane.b32.xlu0 %v357, 60
        %v2688 = vpop.permute.xlu0 %2687
        %2689 = vrot.lane.b32.xlu0 %v359, 60
        %v2690 = vpop.permute.xlu0 %2689
        %2691 = vrot.lane.b32.xlu0 %v361, 60
        %v2692 = vpop.permute.xlu0 %2691
        %2693 = vrot.lane.b32.xlu0 %v367, 60
        %v2694 = vpop.permute.xlu0 %2693
        %2695 = vrot.lane.b32.xlu0 %v369, 60
        %v2696 = vpop.permute.xlu0 %2695
        %2697 = vrot.lane.b32.xlu0 %v371, 60
        %v2698 = vpop.permute.xlu0 %2697
        %2699 = vrot.lane.b32.xlu0 %v373, 60
        %v2700 = vpop.permute.xlu0 %2699
        %2701 = vrot.lane.b32.xlu0 %v375, 60
        %v2702 = vpop.permute.xlu0 %2701
        %2703 = vrot.lane.b32.xlu0 %v377, 60
        %v2704 = vpop.permute.xlu0 %2703
        %2705 = vrot.lane.b32.xlu0 %v379, 60
        %v2706 = vpop.permute.xlu0 %2705
        %2707 = vrot.lane.b32.xlu0 %v381, 60
        %v2708 = vpop.permute.xlu0 %2707
        %2709 = vrot.lane.b32.xlu0 %v387, 60
        %v2710 = vpop.permute.xlu0 %2709
        %2711 = vrot.lane.b32.xlu0 %v389, 60
        %v2712 = vpop.permute.xlu0 %2711
        %2713 = vrot.lane.b32.xlu0 %v391, 60
        %v2714 = vpop.permute.xlu0 %2713
        %2715 = vrot.lane.b32.xlu0 %v393, 60
        %v2716 = vpop.permute.xlu0 %2715
        %2717 = vrot.lane.b32.xlu0 %v395, 60
        %v2718 = vpop.permute.xlu0 %2717
        %2719 = vrot.lane.b32.xlu0 %v397, 60
        %v2720 = vpop.permute.xlu0 %2719
        %2721 = vrot.lane.b32.xlu0 %v399, 60
        %v2722 = vpop.permute.xlu0 %2721
        %2723 = vrot.lane.b32.xlu0 %v401, 60
        %v2724 = vpop.permute.xlu0 %2723
        %2725 = vrot.lane.b32.xlu0 %v407, 60
        %v2726 = vpop.permute.xlu0 %2725
        %2727 = vrot.lane.b32.xlu0 %v409, 60
        %v2728 = vpop.permute.xlu0 %2727
        %2729 = vrot.lane.b32.xlu0 %v411, 60
        %v2730 = vpop.permute.xlu0 %2729
        %2731 = vrot.lane.b32.xlu0 %v413, 60
        %v2732 = vpop.permute.xlu0 %2731
        %2733 = vrot.lane.b32.xlu0 %v415, 60
        %v2734 = vpop.permute.xlu0 %2733
        %2735 = vrot.lane.b32.xlu0 %v417, 60
        %v2736 = vpop.permute.xlu0 %2735
        %2737 = vrot.lane.b32.xlu0 %v419, 60
        %v2738 = vpop.permute.xlu0 %2737
        %2739 = vrot.lane.b32.xlu0 %v421, 60
        %v2740 = vpop.permute.xlu0 %2739
        %vm2773 = vcmask 523744
        %2774 = vst.msk [vmem:[#allocation2] sm:$0xff] %vm2773, %v2678
        %2775 = vst.msk [vmem:[#allocation2 + $0x8] sm:$0xff] %vm2773, %v2680
        %2776 = vst.msk [vmem:[#allocation2 + $0x10] sm:$0xff] %vm2773, %v2682
        %2777 = vst.msk [vmem:[#allocation2 + $0x18] sm:$0xff] %vm2773, %v2684
        %2778 = vst.msk [vmem:[#allocation2 + $0x20] sm:$0xff] %vm2773, %v2686
        %2779 = vst.msk [vmem:[#allocation2 + $0x28] sm:$0xff] %vm2773, %v2688
        %2780 = vst.msk [vmem:[#allocation2 + $0x30] sm:$0xff] %vm2773, %v2690
        %2781 = vst.msk [vmem:[#allocation2 + $0x38] sm:$0xff] %vm2773, %v2692
        %2782 = vst.msk [vmem:[#allocation2 + $0x40] sm:$0xff] %vm2773, %v2694
        %2783 = vst.msk [vmem:[#allocation2 + $0x48] sm:$0xff] %vm2773, %v2696
        %2784 = vst.msk [vmem:[#allocation2 + $0x50] sm:$0xff] %vm2773, %v2698
        %2785 = vst.msk [vmem:[#allocation2 + $0x58] sm:$0xff] %vm2773, %v2700
        %2786 = vst.msk [vmem:[#allocation2 + $0x60] sm:$0xff] %vm2773, %v2702
        %2787 = vst.msk [vmem:[#allocation2 + $0x68] sm:$0xff] %vm2773, %v2704
        %2788 = vst.msk [vmem:[#allocation2 + $0x70] sm:$0xff] %vm2773, %v2706
        %2789 = vst.msk [vmem:[#allocation2 + $0x78] sm:$0xff] %vm2773, %v2708
        %2790 = vst.msk [vmem:[#allocation2 + $0x80] sm:$0xff] %vm2773, %v2710
        %2791 = vst.msk [vmem:[#allocation2 + $0x88] sm:$0xff] %vm2773, %v2712
        %2792 = vst.msk [vmem:[#allocation2 + $0x90] sm:$0xff] %vm2773, %v2714
        %2793 = vst.msk [vmem:[#allocation2 + $0x98] sm:$0xff] %vm2773, %v2716
        %2794 = vst.msk [vmem:[#allocation2 + $0xa0] sm:$0xff] %vm2773, %v2718
        %2795 = vst.msk [vmem:[#allocation2 + $0xa8] sm:$0xff] %vm2773, %v2720
        %2796 = vst.msk [vmem:[#allocation2 + $0xb0] sm:$0xff] %vm2773, %v2722
        %2797 = vst.msk [vmem:[#allocation2 + $0xb8] sm:$0xff] %vm2773, %v2724
        %2798 = vst.msk [vmem:[#allocation2 + $0xc0] sm:$0xff] %vm2773, %v2726
        %2799 = vst.msk [vmem:[#allocation2 + $0xc8] sm:$0xff] %vm2773, %v2728
        %2800 = vst.msk [vmem:[#allocation2 + $0xd0] sm:$0xff] %vm2773, %v2730
        %2801 = vst.msk [vmem:[#allocation2 + $0xd8] sm:$0xff] %vm2773, %v2732
        %2802 = vst.msk [vmem:[#allocation2 + $0xe0] sm:$0xff] %vm2773, %v2734
        %2803 = vst.msk [vmem:[#allocation2 + $0xe8] sm:$0xff] %vm2773, %v2736
        %2804 = vst.msk [vmem:[#allocation2 + $0xf0] sm:$0xff] %vm2773, %v2738
        %2805 = vst.msk [vmem:[#allocation2 + $0xf8] sm:$0xff] %vm2773, %v2740
        %v2807 = vrot.slane %v421, 1
        %v2808 = vrot.slane %v422, 1
        %v2809 = vsel %vm540, %v2807, %v2808
        %2810 = vrot.lane.b32.xlu0 %v573, 64
        %v2811 = vpop.permute.xlu0 %2810
        %2812 = vrot.lane.b32.xlu0 %v576, 64
        %v2813 = vpop.permute.xlu0 %2812
        %2814 = vrot.lane.b32.xlu0 %v579, 64
        %v2815 = vpop.permute.xlu0 %2814
        %2816 = vrot.lane.b32.xlu0 %v582, 64
        %v2817 = vpop.permute.xlu0 %2816
        %2818 = vrot.lane.b32.xlu0 %v585, 64
        %v2819 = vpop.permute.xlu0 %2818
        %2820 = vrot.lane.b32.xlu0 %v588, 64
        %v2821 = vpop.permute.xlu0 %2820
        %2822 = vrot.lane.b32.xlu0 %v1134, 64
        %v2823 = vpop.permute.xlu0 %2822
        %2824 = vrot.lane.b32.xlu0 %v1553, 64
        %v2825 = vpop.permute.xlu0 %2824
        %2826 = vrot.lane.b32.xlu0 %v597, 64
        %v2827 = vpop.permute.xlu0 %2826
        %2828 = vrot.lane.b32.xlu0 %v600, 64
        %v2829 = vpop.permute.xlu0 %2828
        %2830 = vrot.lane.b32.xlu0 %v603, 64
        %v2831 = vpop.permute.xlu0 %2830
        %2832 = vrot.lane.b32.xlu0 %v606, 64
        %v2833 = vpop.permute.xlu0 %2832
        %2834 = vrot.lane.b32.xlu0 %v609, 64
        %v2835 = vpop.permute.xlu0 %2834
        %2836 = vrot.lane.b32.xlu0 %v612, 64
        %v2837 = vpop.permute.xlu0 %2836
        %2838 = vrot.lane.b32.xlu0 %v1137, 64
        %v2839 = vpop.permute.xlu0 %2838
        %2840 = vrot.lane.b32.xlu0 %v1556, 64
        %v2841 = vpop.permute.xlu0 %2840
        %2842 = vrot.lane.b32.xlu0 %v621, 64
        %v2843 = vpop.permute.xlu0 %2842
        %2844 = vrot.lane.b32.xlu0 %v624, 64
        %v2845 = vpop.permute.xlu0 %2844
        %2846 = vrot.lane.b32.xlu0 %v627, 64
        %v2847 = vpop.permute.xlu0 %2846
        %2848 = vrot.lane.b32.xlu0 %v630, 64
        %v2849 = vpop.permute.xlu0 %2848
        %2850 = vrot.lane.b32.xlu0 %v633, 64
        %v2851 = vpop.permute.xlu0 %2850
        %2852 = vrot.lane.b32.xlu0 %v636, 64
        %v2853 = vpop.permute.xlu0 %2852
        %2854 = vrot.lane.b32.xlu0 %v1140, 64
        %v2855 = vpop.permute.xlu0 %2854
        %2856 = vrot.lane.b32.xlu0 %v1559, 64
        %v2857 = vpop.permute.xlu0 %2856
        %2858 = vrot.lane.b32.xlu0 %v1983, 64
        %v2859 = vpop.permute.xlu0 %2858
        %2860 = vrot.lane.b32.xlu0 %v1986, 64
        %v2861 = vpop.permute.xlu0 %2860
        %2862 = vrot.lane.b32.xlu0 %v1989, 64
        %v2863 = vpop.permute.xlu0 %2862
        %2864 = vrot.lane.b32.xlu0 %v1992, 64
        %v2865 = vpop.permute.xlu0 %2864
        %2866 = vrot.lane.b32.xlu0 %v1995, 64
        %v2867 = vpop.permute.xlu0 %2866
        %2868 = vrot.lane.b32.xlu0 %v1998, 64
        %v2869 = vpop.permute.xlu0 %2868
        %2870 = vrot.lane.b32.xlu0 %v2414, 64
        %v2871 = vpop.permute.xlu0 %2870
        %2872 = vrot.lane.b32.xlu0 %v2809, 64
        %v2873 = vpop.permute.xlu0 %2872
        %vm2906 = vcmask 556544
        %2907 = vst.msk [vmem:[#allocation2] sm:$0xff] %vm2906, %v2811
        %2908 = vst.msk [vmem:[#allocation2 + $0x8] sm:$0xff] %vm2906, %v2813
        %2909 = vst.msk [vmem:[#allocation2 + $0x10] sm:$0xff] %vm2906, %v2815
        %2910 = vst.msk [vmem:[#allocation2 + $0x18] sm:$0xff] %vm2906, %v2817
        %2911 = vst.msk [vmem:[#allocation2 + $0x20] sm:$0xff] %vm2906, %v2819
        %2912 = vst.msk [vmem:[#allocation2 + $0x28] sm:$0xff] %vm2906, %v2821
        %2913 = vst.msk [vmem:[#allocation2 + $0x30] sm:$0xff] %vm2906, %v2823
        %2914 = vst.msk [vmem:[#allocation2 + $0x38] sm:$0xff] %vm2906, %v2825
        %2915 = vst.msk [vmem:[#allocation2 + $0x40] sm:$0xff] %vm2906, %v2827
        %2916 = vst.msk [vmem:[#allocation2 + $0x48] sm:$0xff] %vm2906, %v2829
        %2917 = vst.msk [vmem:[#allocation2 + $0x50] sm:$0xff] %vm2906, %v2831
        %2918 = vst.msk [vmem:[#allocation2 + $0x58] sm:$0xff] %vm2906, %v2833
        %2919 = vst.msk [vmem:[#allocation2 + $0x60] sm:$0xff] %vm2906, %v2835
        %2920 = vst.msk [vmem:[#allocation2 + $0x68] sm:$0xff] %vm2906, %v2837
        %2921 = vst.msk [vmem:[#allocation2 + $0x70] sm:$0xff] %vm2906, %v2839
        %2922 = vst.msk [vmem:[#allocation2 + $0x78] sm:$0xff] %vm2906, %v2841
        %2923 = vst.msk [vmem:[#allocation2 + $0x80] sm:$0xff] %vm2906, %v2843
        %2924 = vst.msk [vmem:[#allocation2 + $0x88] sm:$0xff] %vm2906, %v2845
        %2925 = vst.msk [vmem:[#allocation2 + $0x90] sm:$0xff] %vm2906, %v2847
        %2926 = vst.msk [vmem:[#allocation2 + $0x98] sm:$0xff] %vm2906, %v2849
        %2927 = vst.msk [vmem:[#allocation2 + $0xa0] sm:$0xff] %vm2906, %v2851
        %2928 = vst.msk [vmem:[#allocation2 + $0xa8] sm:$0xff] %vm2906, %v2853
        %2929 = vst.msk [vmem:[#allocation2 + $0xb0] sm:$0xff] %vm2906, %v2855
        %2930 = vst.msk [vmem:[#allocation2 + $0xb8] sm:$0xff] %vm2906, %v2857
        %2931 = vst.msk [vmem:[#allocation2 + $0xc0] sm:$0xff] %vm2906, %v2859
        %2932 = vst.msk [vmem:[#allocation2 + $0xc8] sm:$0xff] %vm2906, %v2861
        %2933 = vst.msk [vmem:[#allocation2 + $0xd0] sm:$0xff] %vm2906, %v2863
        %2934 = vst.msk [vmem:[#allocation2 + $0xd8] sm:$0xff] %vm2906, %v2865
        %2935 = vst.msk [vmem:[#allocation2 + $0xe0] sm:$0xff] %vm2906, %v2867
        %2936 = vst.msk [vmem:[#allocation2 + $0xe8] sm:$0xff] %vm2906, %v2869
        %2937 = vst.msk [vmem:[#allocation2 + $0xf0] sm:$0xff] %vm2906, %v2871
        %2938 = vst.msk [vmem:[#allocation2 + $0xf8] sm:$0xff] %vm2906, %v2873
        %v2939 = vrot.slane %v421, 2
        %v2940 = vrot.slane %v422, 2
        %v2941 = vsel %vm766, %v2939, %v2940
        %2942 = vrot.lane.b32.xlu0 %v799, 68
        %v2943 = vpop.permute.xlu0 %2942
        %2944 = vrot.lane.b32.xlu0 %v802, 68
        %v2945 = vpop.permute.xlu0 %2944
        %2946 = vrot.lane.b32.xlu0 %v805, 68
        %v2947 = vpop.permute.xlu0 %2946
        %2948 = vrot.lane.b32.xlu0 %v808, 68
        %v2949 = vpop.permute.xlu0 %2948
        %2950 = vrot.lane.b32.xlu0 %v811, 68
        %v2951 = vpop.permute.xlu0 %2950
        %2952 = vrot.lane.b32.xlu0 %v814, 68
        %v2953 = vpop.permute.xlu0 %2952
        %2954 = vrot.lane.b32.xlu0 %v1275, 68
        %v2955 = vpop.permute.xlu0 %2954
        %2956 = vrot.lane.b32.xlu0 %v1694, 68
        %v2957 = vpop.permute.xlu0 %2956
        %2958 = vrot.lane.b32.xlu0 %v823, 68
        %v2959 = vpop.permute.xlu0 %2958
        %2960 = vrot.lane.b32.xlu0 %v826, 68
        %v2961 = vpop.permute.xlu0 %2960
        %2962 = vrot.lane.b32.xlu0 %v829, 68
        %v2963 = vpop.permute.xlu0 %2962
        %2964 = vrot.lane.b32.xlu0 %v832, 68
        %v2965 = vpop.permute.xlu0 %2964
        %2966 = vrot.lane.b32.xlu0 %v835, 68
        %v2967 = vpop.permute.xlu0 %2966
        %2968 = vrot.lane.b32.xlu0 %v838, 68
        %v2969 = vpop.permute.xlu0 %2968
        %2970 = vrot.lane.b32.xlu0 %v1278, 68
        %v2971 = vpop.permute.xlu0 %2970
        %2972 = vrot.lane.b32.xlu0 %v1697, 68
        %v2973 = vpop.permute.xlu0 %2972
        %2974 = vrot.lane.b32.xlu0 %v847, 68
        %v2975 = vpop.permute.xlu0 %2974
        %2976 = vrot.lane.b32.xlu0 %v850, 68
        %v2977 = vpop.permute.xlu0 %2976
        %2978 = vrot.lane.b32.xlu0 %v853, 68
        %v2979 = vpop.permute.xlu0 %2978
        %2980 = vrot.lane.b32.xlu0 %v856, 68
        %v2981 = vpop.permute.xlu0 %2980
        %2982 = vrot.lane.b32.xlu0 %v859, 68
        %v2983 = vpop.permute.xlu0 %2982
        %2984 = vrot.lane.b32.xlu0 %v862, 68
        %v2985 = vpop.permute.xlu0 %2984
        %2986 = vrot.lane.b32.xlu0 %v1281, 68
        %v2987 = vpop.permute.xlu0 %2986
        %2988 = vrot.lane.b32.xlu0 %v1700, 68
        %v2989 = vpop.permute.xlu0 %2988
        %2990 = vrot.lane.b32.xlu0 %v2136, 68
        %v2991 = vpop.permute.xlu0 %2990
        %2992 = vrot.lane.b32.xlu0 %v2139, 68
        %v2993 = vpop.permute.xlu0 %2992
        %2994 = vrot.lane.b32.xlu0 %v2142, 68
        %v2995 = vpop.permute.xlu0 %2994
        %2996 = vrot.lane.b32.xlu0 %v2145, 68
        %v2997 = vpop.permute.xlu0 %2996
        %2998 = vrot.lane.b32.xlu0 %v2148, 68
        %v2999 = vpop.permute.xlu0 %2998
        %3000 = vrot.lane.b32.xlu0 %v2151, 68
        %v3001 = vpop.permute.xlu0 %3000
        %3002 = vrot.lane.b32.xlu0 %v2546, 68
        %v3003 = vpop.permute.xlu0 %3002
        %3004 = vrot.lane.b32.xlu0 %v2941, 68
        %v3005 = vpop.permute.xlu0 %3004
        %vm3038 = vcmask 589344
        %3039 = vst.msk [vmem:[#allocation2] sm:$0xff] %vm3038, %v2943
        %3040 = vst.msk [vmem:[#allocation2 + $0x8] sm:$0xff] %vm3038, %v2945
        %3041 = vst.msk [vmem:[#allocation2 + $0x10] sm:$0xff] %vm3038, %v2947
        %3042 = vst.msk [vmem:[#allocation2 + $0x18] sm:$0xff] %vm3038, %v2949
        %3043 = vst.msk [vmem:[#allocation2 + $0x20] sm:$0xff] %vm3038, %v2951
        %3044 = vst.msk [vmem:[#allocation2 + $0x28] sm:$0xff] %vm3038, %v2953
        %3045 = vst.msk [vmem:[#allocation2 + $0x30] sm:$0xff] %vm3038, %v2955
        %3046 = vst.msk [vmem:[#allocation2 + $0x38] sm:$0xff] %vm3038, %v2957
        %3047 = vst.msk [vmem:[#allocation2 + $0x40] sm:$0xff] %vm3038, %v2959
        %3048 = vst.msk [vmem:[#allocation2 + $0x48] sm:$0xff] %vm3038, %v2961
        %3049 = vst.msk [vmem:[#allocation2 + $0x50] sm:$0xff] %vm3038, %v2963
        %3050 = vst.msk [vmem:[#allocation2 + $0x58] sm:$0xff] %vm3038, %v2965
        %3051 = vst.msk [vmem:[#allocation2 + $0x60] sm:$0xff] %vm3038, %v2967
        %3052 = vst.msk [vmem:[#allocation2 + $0x68] sm:$0xff] %vm3038, %v2969
        %3053 = vst.msk [vmem:[#allocation2 + $0x70] sm:$0xff] %vm3038, %v2971
        %3054 = vst.msk [vmem:[#allocation2 + $0x78] sm:$0xff] %vm3038, %v2973
        %3055 = vst.msk [vmem:[#allocation2 + $0x80] sm:$0xff] %vm3038, %v2975
        %3056 = vst.msk [vmem:[#allocation2 + $0x88] sm:$0xff] %vm3038, %v2977
        %3057 = vst.msk [vmem:[#allocation2 + $0x90] sm:$0xff] %vm3038, %v2979
        %3058 = vst.msk [vmem:[#allocation2 + $0x98] sm:$0xff] %vm3038, %v2981
        %3059 = vst.msk [vmem:[#allocation2 + $0xa0] sm:$0xff] %vm3038, %v2983
        %3060 = vst.msk [vmem:[#allocation2 + $0xa8] sm:$0xff] %vm3038, %v2985
        %3061 = vst.msk [vmem:[#allocation2 + $0xb0] sm:$0xff] %vm3038, %v2987
        %3062 = vst.msk [vmem:[#allocation2 + $0xb8] sm:$0xff] %vm3038, %v2989
        %3063 = vst.msk [vmem:[#allocation2 + $0xc0] sm:$0xff] %vm3038, %v2991
        %3064 = vst.msk [vmem:[#allocation2 + $0xc8] sm:$0xff] %vm3038, %v2993
        %3065 = vst.msk [vmem:[#allocation2 + $0xd0] sm:$0xff] %vm3038, %v2995
        %3066 = vst.msk [vmem:[#allocation2 + $0xd8] sm:$0xff] %vm3038, %v2997
        %3067 = vst.msk [vmem:[#allocation2 + $0xe0] sm:$0xff] %vm3038, %v2999
        %3068 = vst.msk [vmem:[#allocation2 + $0xe8] sm:$0xff] %vm3038, %v3001
        %3069 = vst.msk [vmem:[#allocation2 + $0xf0] sm:$0xff] %vm3038, %v3003
        %3070 = vst.msk [vmem:[#allocation2 + $0xf8] sm:$0xff] %vm3038, %v3005
        %3079 = vrot.lane.b32.xlu0 %v363, 72
        %v3080 = vpop.permute.xlu0 %3079
        %3081 = vrot.lane.b32.xlu0 %v365, 72
        %v3082 = vpop.permute.xlu0 %3081
        %3083 = vrot.lane.b32.xlu0 %v367, 72
        %v3084 = vpop.permute.xlu0 %3083
        %3085 = vrot.lane.b32.xlu0 %v369, 72
        %v3086 = vpop.permute.xlu0 %3085
        %3087 = vrot.lane.b32.xlu0 %v371, 72
        %v3088 = vpop.permute.xlu0 %3087
        %3089 = vrot.lane.b32.xlu0 %v373, 72
        %v3090 = vpop.permute.xlu0 %3089
        %3091 = vrot.lane.b32.xlu0 %v375, 72
        %v3092 = vpop.permute.xlu0 %3091
        %3093 = vrot.lane.b32.xlu0 %v377, 72
        %v3094 = vpop.permute.xlu0 %3093
        %3095 = vrot.lane.b32.xlu0 %v383, 72
        %v3096 = vpop.permute.xlu0 %3095
        %3097 = vrot.lane.b32.xlu0 %v385, 72
        %v3098 = vpop.permute.xlu0 %3097
        %3099 = vrot.lane.b32.xlu0 %v387, 72
        %v3100 = vpop.permute.xlu0 %3099
        %3101 = vrot.lane.b32.xlu0 %v389, 72
        %v3102 = vpop.permute.xlu0 %3101
        %3103 = vrot.lane.b32.xlu0 %v391, 72
        %v3104 = vpop.permute.xlu0 %3103
        %3105 = vrot.lane.b32.xlu0 %v393, 72
        %v3106 = vpop.permute.xlu0 %3105
        %3107 = vrot.lane.b32.xlu0 %v395, 72
        %v3108 = vpop.permute.xlu0 %3107
        %3109 = vrot.lane.b32.xlu0 %v397, 72
        %v3110 = vpop.permute.xlu0 %3109
        %3111 = vrot.lane.b32.xlu0 %v403, 72
        %v3112 = vpop.permute.xlu0 %3111
        %3113 = vrot.lane.b32.xlu0 %v405, 72
        %v3114 = vpop.permute.xlu0 %3113
        %3115 = vrot.lane.b32.xlu0 %v407, 72
        %v3116 = vpop.permute.xlu0 %3115
        %3117 = vrot.lane.b32.xlu0 %v409, 72
        %v3118 = vpop.permute.xlu0 %3117
        %3119 = vrot.lane.b32.xlu0 %v411, 72
        %v3120 = vpop.permute.xlu0 %3119
        %3121 = vrot.lane.b32.xlu0 %v413, 72
        %v3122 = vpop.permute.xlu0 %3121
        %3123 = vrot.lane.b32.xlu0 %v415, 72
        %v3124 = vpop.permute.xlu0 %3123
        %3125 = vrot.lane.b32.xlu0 %v417, 72
        %v3126 = vpop.permute.xlu0 %3125
        %3127 = vrot.lane.b32.xlu0 %v423, 72
        %v3128 = vpop.permute.xlu0 %3127
        %3129 = vrot.lane.b32.xlu0 %v425, 72
        %v3130 = vpop.permute.xlu0 %3129
        %3131 = vrot.lane.b32.xlu0 %v427, 72
        %v3132 = vpop.permute.xlu0 %3131
        %3133 = vrot.lane.b32.xlu0 %v429, 72
        %v3134 = vpop.permute.xlu0 %3133
        %3135 = vrot.lane.b32.xlu0 %v431, 72
        %v3136 = vpop.permute.xlu0 %3135
        %3137 = vrot.lane.b32.xlu0 %v433, 72
        %v3138 = vpop.permute.xlu0 %3137
        %3139 = vrot.lane.b32.xlu0 %v435, 72
        %v3140 = vpop.permute.xlu0 %3139
        %3141 = vrot.lane.b32.xlu0 %v437, 72
        %v3142 = vpop.permute.xlu0 %3141
        %vm3175 = vcmask 622144
        %3176 = vst.msk [vmem:[#allocation2] sm:$0xff] %vm3175, %v3080
        %3177 = vst.msk [vmem:[#allocation2 + $0x8] sm:$0xff] %vm3175, %v3082
        %3178 = vst.msk [vmem:[#allocation2 + $0x10] sm:$0xff] %vm3175, %v3084
        %3179 = vst.msk [vmem:[#allocation2 + $0x18] sm:$0xff] %vm3175, %v3086
        %3180 = vst.msk [vmem:[#allocation2 + $0x20] sm:$0xff] %vm3175, %v3088
        %3181 = vst.msk [vmem:[#allocation2 + $0x28] sm:$0xff] %vm3175, %v3090
        %3182 = vst.msk [vmem:[#allocation2 + $0x30] sm:$0xff] %vm3175, %v3092
        %3183 = vst.msk [vmem:[#allocation2 + $0x38] sm:$0xff] %vm3175, %v3094
        %3184 = vst.msk [vmem:[#allocation2 + $0x40] sm:$0xff] %vm3175, %v3096
        %3185 = vst.msk [vmem:[#allocation2 + $0x48] sm:$0xff] %vm3175, %v3098
        %3186 = vst.msk [vmem:[#allocation2 + $0x50] sm:$0xff] %vm3175, %v3100
        %3187 = vst.msk [vmem:[#allocation2 + $0x58] sm:$0xff] %vm3175, %v3102
        %3188 = vst.msk [vmem:[#allocation2 + $0x60] sm:$0xff] %vm3175, %v3104
        %3189 = vst.msk [vmem:[#allocation2 + $0x68] sm:$0xff] %vm3175, %v3106
        %3190 = vst.msk [vmem:[#allocation2 + $0x70] sm:$0xff] %vm3175, %v3108
        %3191 = vst.msk [vmem:[#allocation2 + $0x78] sm:$0xff] %vm3175, %v3110
        %3192 = vst.msk [vmem:[#allocation2 + $0x80] sm:$0xff] %vm3175, %v3112
        %3193 = vst.msk [vmem:[#allocation2 + $0x88] sm:$0xff] %vm3175, %v3114
        %3194 = vst.msk [vmem:[#allocation2 + $0x90] sm:$0xff] %vm3175, %v3116
        %3195 = vst.msk [vmem:[#allocation2 + $0x98] sm:$0xff] %vm3175, %v3118
        %3196 = vst.msk [vmem:[#allocation2 + $0xa0] sm:$0xff] %vm3175, %v3120
        %3197 = vst.msk [vmem:[#allocation2 + $0xa8] sm:$0xff] %vm3175, %v3122
        %3198 = vst.msk [vmem:[#allocation2 + $0xb0] sm:$0xff] %vm3175, %v3124
        %3199 = vst.msk [vmem:[#allocation2 + $0xb8] sm:$0xff] %vm3175, %v3126
        %3200 = vst.msk [vmem:[#allocation2 + $0xc0] sm:$0xff] %vm3175, %v3128
        %3201 = vst.msk [vmem:[#allocation2 + $0xc8] sm:$0xff] %vm3175, %v3130
        %3202 = vst.msk [vmem:[#allocation2 + $0xd0] sm:$0xff] %vm3175, %v3132
        %3203 = vst.msk [vmem:[#allocation2 + $0xd8] sm:$0xff] %vm3175, %v3134
        %3204 = vst.msk [vmem:[#allocation2 + $0xe0] sm:$0xff] %vm3175, %v3136
        %3205 = vst.msk [vmem:[#allocation2 + $0xe8] sm:$0xff] %vm3175, %v3138
        %3206 = vst.msk [vmem:[#allocation2 + $0xf0] sm:$0xff] %vm3175, %v3140
        %3207 = vst.msk [vmem:[#allocation2 + $0xf8] sm:$0xff] %vm3175, %v3142
        %v3216 = vrot.slane %v423, 1
        %v3217 = vrot.slane %v424, 1
        %v3218 = vsel %vm540, %v3216, %v3217
        %v3219 = vrot.slane %v425, 1
        %v3220 = vrot.slane %v426, 1
        %v3221 = vsel %vm540, %v3219, %v3220
        %v3222 = vrot.slane %v427, 1
        %v3223 = vrot.slane %v428, 1
        %v3224 = vsel %vm540, %v3222, %v3223
        %v3225 = vrot.slane %v429, 1
        %v3226 = vrot.slane %v430, 1
        %v3227 = vsel %vm540, %v3225, %v3226
        %v3228 = vrot.slane %v431, 1
        %v3229 = vrot.slane %v432, 1
        %v3230 = vsel %vm540, %v3228, %v3229
        %v3231 = vrot.slane %v433, 1
        %v3232 = vrot.slane %v434, 1
        %v3233 = vsel %vm540, %v3231, %v3232
        %v3234 = vrot.slane %v435, 1
        %v3235 = vrot.slane %v436, 1
        %v3236 = vsel %vm540, %v3234, %v3235
        %v3237 = vrot.slane %v437, 1
        %v3238 = vrot.slane %v438, 1
        %v3239 = vsel %vm540, %v3237, %v3238
        %3240 = vrot.lane.b32.xlu0 %v591, 76
        %v3241 = vpop.permute.xlu0 %3240
        %3242 = vrot.lane.b32.xlu0 %v594, 76
        %v3243 = vpop.permute.xlu0 %3242
        %3244 = vrot.lane.b32.xlu0 %v597, 76
        %v3245 = vpop.permute.xlu0 %3244
        %3246 = vrot.lane.b32.xlu0 %v600, 76
        %v3247 = vpop.permute.xlu0 %3246
        %3248 = vrot.lane.b32.xlu0 %v603, 76
        %v3249 = vpop.permute.xlu0 %3248
        %3250 = vrot.lane.b32.xlu0 %v606, 76
        %v3251 = vpop.permute.xlu0 %3250
        %3252 = vrot.lane.b32.xlu0 %v609, 76
        %v3253 = vpop.permute.xlu0 %3252
        %3254 = vrot.lane.b32.xlu0 %v612, 76
        %v3255 = vpop.permute.xlu0 %3254
        %3256 = vrot.lane.b32.xlu0 %v615, 76
        %v3257 = vpop.permute.xlu0 %3256
        %3258 = vrot.lane.b32.xlu0 %v618, 76
        %v3259 = vpop.permute.xlu0 %3258
        %3260 = vrot.lane.b32.xlu0 %v621, 76
        %v3261 = vpop.permute.xlu0 %3260
        %3262 = vrot.lane.b32.xlu0 %v624, 76
        %v3263 = vpop.permute.xlu0 %3262
        %3264 = vrot.lane.b32.xlu0 %v627, 76
        %v3265 = vpop.permute.xlu0 %3264
        %3266 = vrot.lane.b32.xlu0 %v630, 76
        %v3267 = vpop.permute.xlu0 %3266
        %3268 = vrot.lane.b32.xlu0 %v633, 76
        %v3269 = vpop.permute.xlu0 %3268
        %3270 = vrot.lane.b32.xlu0 %v636, 76
        %v3271 = vpop.permute.xlu0 %3270
        %3272 = vrot.lane.b32.xlu0 %v1977, 76
        %v3273 = vpop.permute.xlu0 %3272
        %3274 = vrot.lane.b32.xlu0 %v1980, 76
        %v3275 = vpop.permute.xlu0 %3274
        %3276 = vrot.lane.b32.xlu0 %v1983, 76
        %v3277 = vpop.permute.xlu0 %3276
        %3278 = vrot.lane.b32.xlu0 %v1986, 76
        %v3279 = vpop.permute.xlu0 %3278
        %3280 = vrot.lane.b32.xlu0 %v1989, 76
        %v3281 = vpop.permute.xlu0 %3280
        %3282 = vrot.lane.b32.xlu0 %v1992, 76
        %v3283 = vpop.permute.xlu0 %3282
        %3284 = vrot.lane.b32.xlu0 %v1995, 76
        %v3285 = vpop.permute.xlu0 %3284
        %3286 = vrot.lane.b32.xlu0 %v1998, 76
        %v3287 = vpop.permute.xlu0 %3286
        %3288 = vrot.lane.b32.xlu0 %v3218, 76
        %v3289 = vpop.permute.xlu0 %3288
        %3290 = vrot.lane.b32.xlu0 %v3221, 76
        %v3291 = vpop.permute.xlu0 %3290
        %3292 = vrot.lane.b32.xlu0 %v3224, 76
        %v3293 = vpop.permute.xlu0 %3292
        %3294 = vrot.lane.b32.xlu0 %v3227, 76
        %v3295 = vpop.permute.xlu0 %3294
        %3296 = vrot.lane.b32.xlu0 %v3230, 76
        %v3297 = vpop.permute.xlu0 %3296
        %3298 = vrot.lane.b32.xlu0 %v3233, 76
        %v3299 = vpop.permute.xlu0 %3298
        %3300 = vrot.lane.b32.xlu0 %v3236, 76
        %v3301 = vpop.permute.xlu0 %3300
        %3302 = vrot.lane.b32.xlu0 %v3239, 76
        %v3303 = vpop.permute.xlu0 %3302
        %vm3336 = vcmask 654944
        %3337 = vst.msk [vmem:[#allocation2] sm:$0xff] %vm3336, %v3241
        %3338 = vst.msk [vmem:[#allocation2 + $0x8] sm:$0xff] %vm3336, %v3243
        %3339 = vst.msk [vmem:[#allocation2 + $0x10] sm:$0xff] %vm3336, %v3245
        %3340 = vst.msk [vmem:[#allocation2 + $0x18] sm:$0xff] %vm3336, %v3247
        %3341 = vst.msk [vmem:[#allocation2 + $0x20] sm:$0xff] %vm3336, %v3249
        %3342 = vst.msk [vmem:[#allocation2 + $0x28] sm:$0xff] %vm3336, %v3251
        %3343 = vst.msk [vmem:[#allocation2 + $0x30] sm:$0xff] %vm3336, %v3253
        %3344 = vst.msk [vmem:[#allocation2 + $0x38] sm:$0xff] %vm3336, %v3255
        %3345 = vst.msk [vmem:[#allocation2 + $0x40] sm:$0xff] %vm3336, %v3257
        %3346 = vst.msk [vmem:[#allocation2 + $0x48] sm:$0xff] %vm3336, %v3259
        %3347 = vst.msk [vmem:[#allocation2 + $0x50] sm:$0xff] %vm3336, %v3261
        %3348 = vst.msk [vmem:[#allocation2 + $0x58] sm:$0xff] %vm3336, %v3263
        %3349 = vst.msk [vmem:[#allocation2 + $0x60] sm:$0xff] %vm3336, %v3265
        %3350 = vst.msk [vmem:[#allocation2 + $0x68] sm:$0xff] %vm3336, %v3267
        %3351 = vst.msk [vmem:[#allocation2 + $0x70] sm:$0xff] %vm3336, %v3269
        %3352 = vst.msk [vmem:[#allocation2 + $0x78] sm:$0xff] %vm3336, %v3271
        %3353 = vst.msk [vmem:[#allocation2 + $0x80] sm:$0xff] %vm3336, %v3273
        %3354 = vst.msk [vmem:[#allocation2 + $0x88] sm:$0xff] %vm3336, %v3275
        %3355 = vst.msk [vmem:[#allocation2 + $0x90] sm:$0xff] %vm3336, %v3277
        %3356 = vst.msk [vmem:[#allocation2 + $0x98] sm:$0xff] %vm3336, %v3279
        %3357 = vst.msk [vmem:[#allocation2 + $0xa0] sm:$0xff] %vm3336, %v3281
        %3358 = vst.msk [vmem:[#allocation2 + $0xa8] sm:$0xff] %vm3336, %v3283
        %3359 = vst.msk [vmem:[#allocation2 + $0xb0] sm:$0xff] %vm3336, %v3285
        %3360 = vst.msk [vmem:[#allocation2 + $0xb8] sm:$0xff] %vm3336, %v3287
        %3361 = vst.msk [vmem:[#allocation2 + $0xc0] sm:$0xff] %vm3336, %v3289
        %3362 = vst.msk [vmem:[#allocation2 + $0xc8] sm:$0xff] %vm3336, %v3291
        %3363 = vst.msk [vmem:[#allocation2 + $0xd0] sm:$0xff] %vm3336, %v3293
        %3364 = vst.msk [vmem:[#allocation2 + $0xd8] sm:$0xff] %vm3336, %v3295
        %3365 = vst.msk [vmem:[#allocation2 + $0xe0] sm:$0xff] %vm3336, %v3297
        %3366 = vst.msk [vmem:[#allocation2 + $0xe8] sm:$0xff] %vm3336, %v3299
        %3367 = vst.msk [vmem:[#allocation2 + $0xf0] sm:$0xff] %vm3336, %v3301
        %3368 = vst.msk [vmem:[#allocation2 + $0xf8] sm:$0xff] %vm3336, %v3303
        %v3369 = vrot.slane %v423, 2
        %v3370 = vrot.slane %v424, 2
        %v3371 = vsel %vm766, %v3369, %v3370
        %v3372 = vrot.slane %v425, 2
        %v3373 = vrot.slane %v426, 2
        %v3374 = vsel %vm766, %v3372, %v3373
        %v3375 = vrot.slane %v427, 2
        %v3376 = vrot.slane %v428, 2
        %v3377 = vsel %vm766, %v3375, %v3376
        %v3378 = vrot.slane %v429, 2
        %v3379 = vrot.slane %v430, 2
        %v3380 = vsel %vm766, %v3378, %v3379
        %v3381 = vrot.slane %v431, 2
        %v3382 = vrot.slane %v432, 2
        %v3383 = vsel %vm766, %v3381, %v3382
        %v3384 = vrot.slane %v433, 2
        %v3385 = vrot.slane %v434, 2
        %v3386 = vsel %vm766, %v3384, %v3385
        %v3387 = vrot.slane %v435, 2
        %v3388 = vrot.slane %v436, 2
        %v3389 = vsel %vm766, %v3387, %v3388
        %v3390 = vrot.slane %v437, 2
        %v3391 = vrot.slane %v438, 2
        %v3392 = vsel %vm766, %v3390, %v3391
        %3393 = vrot.lane.b32.xlu0 %v817, 80
        %v3394 = vpop.permute.xlu0 %3393
        %3395 = vrot.lane.b32.xlu0 %v820, 80
        %v3396 = vpop.permute.xlu0 %3395
        %3397 = vrot.lane.b32.xlu0 %v823, 80
        %v3398 = vpop.permute.xlu0 %3397
        %3399 = vrot.lane.b32.xlu0 %v826, 80
        %v3400 = vpop.permute.xlu0 %3399
        %3401 = vrot.lane.b32.xlu0 %v829, 80
        %v3402 = vpop.permute.xlu0 %3401
        %3403 = vrot.lane.b32.xlu0 %v832, 80
        %v3404 = vpop.permute.xlu0 %3403
        %3405 = vrot.lane.b32.xlu0 %v835, 80
        %v3406 = vpop.permute.xlu0 %3405
        %3407 = vrot.lane.b32.xlu0 %v838, 80
        %v3408 = vpop.permute.xlu0 %3407
        %3409 = vrot.lane.b32.xlu0 %v841, 80
        %v3410 = vpop.permute.xlu0 %3409
        %3411 = vrot.lane.b32.xlu0 %v844, 80
        %v3412 = vpop.permute.xlu0 %3411
        %3413 = vrot.lane.b32.xlu0 %v847, 80
        %v3414 = vpop.permute.xlu0 %3413
        %3415 = vrot.lane.b32.xlu0 %v850, 80
        %v3416 = vpop.permute.xlu0 %3415
        %3417 = vrot.lane.b32.xlu0 %v853, 80
        %v3418 = vpop.permute.xlu0 %3417
        %3419 = vrot.lane.b32.xlu0 %v856, 80
        %v3420 = vpop.permute.xlu0 %3419
        %3421 = vrot.lane.b32.xlu0 %v859, 80
        %v3422 = vpop.permute.xlu0 %3421
        %3423 = vrot.lane.b32.xlu0 %v862, 80
        %v3424 = vpop.permute.xlu0 %3423
        %3425 = vrot.lane.b32.xlu0 %v2130, 80
        %v3426 = vpop.permute.xlu0 %3425
        %3427 = vrot.lane.b32.xlu0 %v2133, 80
        %v3428 = vpop.permute.xlu0 %3427
        %3429 = vrot.lane.b32.xlu0 %v2136, 80
        %v3430 = vpop.permute.xlu0 %3429
        %3431 = vrot.lane.b32.xlu0 %v2139, 80
        %v3432 = vpop.permute.xlu0 %3431
        %3433 = vrot.lane.b32.xlu0 %v2142, 80
        %v3434 = vpop.permute.xlu0 %3433
        %3435 = vrot.lane.b32.xlu0 %v2145, 80
        %v3436 = vpop.permute.xlu0 %3435
        %3437 = vrot.lane.b32.xlu0 %v2148, 80
        %v3438 = vpop.permute.xlu0 %3437
        %3439 = vrot.lane.b32.xlu0 %v2151, 80
        %v3440 = vpop.permute.xlu0 %3439
        %3441 = vrot.lane.b32.xlu0 %v3371, 80
        %v3442 = vpop.permute.xlu0 %3441
        %3443 = vrot.lane.b32.xlu0 %v3374, 80
        %v3444 = vpop.permute.xlu0 %3443
        %3445 = vrot.lane.b32.xlu0 %v3377, 80
        %v3446 = vpop.permute.xlu0 %3445
        %3447 = vrot.lane.b32.xlu0 %v3380, 80
        %v3448 = vpop.permute.xlu0 %3447
        %3449 = vrot.lane.b32.xlu0 %v3383, 80
        %v3450 = vpop.permute.xlu0 %3449
        %3451 = vrot.lane.b32.xlu0 %v3386, 80
        %v3452 = vpop.permute.xlu0 %3451
        %3453 = vrot.lane.b32.xlu0 %v3389, 80
        %v3454 = vpop.permute.xlu0 %3453
        %3455 = vrot.lane.b32.xlu0 %v3392, 80
        %v3456 = vpop.permute.xlu0 %3455
        %vm3489 = vcmask 687744
        %3490 = vst.msk [vmem:[#allocation2] sm:$0xff] %vm3489, %v3394
        %3491 = vst.msk [vmem:[#allocation2 + $0x8] sm:$0xff] %vm3489, %v3396
        %3492 = vst.msk [vmem:[#allocation2 + $0x10] sm:$0xff] %vm3489, %v3398
        %3493 = vst.msk [vmem:[#allocation2 + $0x18] sm:$0xff] %vm3489, %v3400
        %3494 = vst.msk [vmem:[#allocation2 + $0x20] sm:$0xff] %vm3489, %v3402
        %3495 = vst.msk [vmem:[#allocation2 + $0x28] sm:$0xff] %vm3489, %v3404
        %3496 = vst.msk [vmem:[#allocation2 + $0x30] sm:$0xff] %vm3489, %v3406
        %3497 = vst.msk [vmem:[#allocation2 + $0x38] sm:$0xff] %vm3489, %v3408
        %3498 = vst.msk [vmem:[#allocation2 + $0x40] sm:$0xff] %vm3489, %v3410
        %3499 = vst.msk [vmem:[#allocation2 + $0x48] sm:$0xff] %vm3489, %v3412
        %3500 = vst.msk [vmem:[#allocation2 + $0x50] sm:$0xff] %vm3489, %v3414
        %3501 = vst.msk [vmem:[#allocation2 + $0x58] sm:$0xff] %vm3489, %v3416
        %3502 = vst.msk [vmem:[#allocation2 + $0x60] sm:$0xff] %vm3489, %v3418
        %3503 = vst.msk [vmem:[#allocation2 + $0x68] sm:$0xff] %vm3489, %v3420
        %3504 = vst.msk [vmem:[#allocation2 + $0x70] sm:$0xff] %vm3489, %v3422
        %3505 = vst.msk [vmem:[#allocation2 + $0x78] sm:$0xff] %vm3489, %v3424
        %3506 = vst.msk [vmem:[#allocation2 + $0x80] sm:$0xff] %vm3489, %v3426
        %3507 = vst.msk [vmem:[#allocation2 + $0x88] sm:$0xff] %vm3489, %v3428
        %3508 = vst.msk [vmem:[#allocation2 + $0x90] sm:$0xff] %vm3489, %v3430
        %3509 = vst.msk [vmem:[#allocation2 + $0x98] sm:$0xff] %vm3489, %v3432
        %3510 = vst.msk [vmem:[#allocation2 + $0xa0] sm:$0xff] %vm3489, %v3434
        %3511 = vst.msk [vmem:[#allocation2 + $0xa8] sm:$0xff] %vm3489, %v3436
        %3512 = vst.msk [vmem:[#allocation2 + $0xb0] sm:$0xff] %vm3489, %v3438
        %3513 = vst.msk [vmem:[#allocation2 + $0xb8] sm:$0xff] %vm3489, %v3440
        %3514 = vst.msk [vmem:[#allocation2 + $0xc0] sm:$0xff] %vm3489, %v3442
        %3515 = vst.msk [vmem:[#allocation2 + $0xc8] sm:$0xff] %vm3489, %v3444
        %3516 = vst.msk [vmem:[#allocation2 + $0xd0] sm:$0xff] %vm3489, %v3446
        %3517 = vst.msk [vmem:[#allocation2 + $0xd8] sm:$0xff] %vm3489, %v3448
        %3518 = vst.msk [vmem:[#allocation2 + $0xe0] sm:$0xff] %vm3489, %v3450
        %3519 = vst.msk [vmem:[#allocation2 + $0xe8] sm:$0xff] %vm3489, %v3452
        %3520 = vst.msk [vmem:[#allocation2 + $0xf0] sm:$0xff] %vm3489, %v3454
        %3521 = vst.msk [vmem:[#allocation2 + $0xf8] sm:$0xff] %vm3489, %v3456
        %3523 = vrot.lane.b32.xlu0 %v365, 84
        %v3524 = vpop.permute.xlu0 %3523
        %3525 = vrot.lane.b32.xlu0 %v367, 84
        %v3526 = vpop.permute.xlu0 %3525
        %3527 = vrot.lane.b32.xlu0 %v369, 84
        %v3528 = vpop.permute.xlu0 %3527
        %3529 = vrot.lane.b32.xlu0 %v371, 84
        %v3530 = vpop.permute.xlu0 %3529
        %3531 = vrot.lane.b32.xlu0 %v373, 84
        %v3532 = vpop.permute.xlu0 %3531
        %3533 = vrot.lane.b32.xlu0 %v375, 84
        %v3534 = vpop.permute.xlu0 %3533
        %3535 = vrot.lane.b32.xlu0 %v377, 84
        %v3536 = vpop.permute.xlu0 %3535
        %3537 = vrot.lane.b32.xlu0 %v379, 84
        %v3538 = vpop.permute.xlu0 %3537
        %3539 = vrot.lane.b32.xlu0 %v385, 84
        %v3540 = vpop.permute.xlu0 %3539
        %3541 = vrot.lane.b32.xlu0 %v387, 84
        %v3542 = vpop.permute.xlu0 %3541
        %3543 = vrot.lane.b32.xlu0 %v389, 84
        %v3544 = vpop.permute.xlu0 %3543
        %3545 = vrot.lane.b32.xlu0 %v391, 84
        %v3546 = vpop.permute.xlu0 %3545
        %3547 = vrot.lane.b32.xlu0 %v393, 84
        %v3548 = vpop.permute.xlu0 %3547
        %3549 = vrot.lane.b32.xlu0 %v395, 84
        %v3550 = vpop.permute.xlu0 %3549
        %3551 = vrot.lane.b32.xlu0 %v397, 84
        %v3552 = vpop.permute.xlu0 %3551
        %3553 = vrot.lane.b32.xlu0 %v399, 84
        %v3554 = vpop.permute.xlu0 %3553
        %3555 = vrot.lane.b32.xlu0 %v405, 84
        %v3556 = vpop.permute.xlu0 %3555
        %3557 = vrot.lane.b32.xlu0 %v407, 84
        %v3558 = vpop.permute.xlu0 %3557
        %3559 = vrot.lane.b32.xlu0 %v409, 84
        %v3560 = vpop.permute.xlu0 %3559
        %3561 = vrot.lane.b32.xlu0 %v411, 84
        %v3562 = vpop.permute.xlu0 %3561
        %3563 = vrot.lane.b32.xlu0 %v413, 84
        %v3564 = vpop.permute.xlu0 %3563
        %3565 = vrot.lane.b32.xlu0 %v415, 84
        %v3566 = vpop.permute.xlu0 %3565
        %3567 = vrot.lane.b32.xlu0 %v417, 84
        %v3568 = vpop.permute.xlu0 %3567
        %3569 = vrot.lane.b32.xlu0 %v419, 84
        %v3570 = vpop.permute.xlu0 %3569
        %3571 = vrot.lane.b32.xlu0 %v425, 84
        %v3572 = vpop.permute.xlu0 %3571
        %3573 = vrot.lane.b32.xlu0 %v427, 84
        %v3574 = vpop.permute.xlu0 %3573
        %3575 = vrot.lane.b32.xlu0 %v429, 84
        %v3576 = vpop.permute.xlu0 %3575
        %3577 = vrot.lane.b32.xlu0 %v431, 84
        %v3578 = vpop.permute.xlu0 %3577
        %3579 = vrot.lane.b32.xlu0 %v433, 84
        %v3580 = vpop.permute.xlu0 %3579
        %3581 = vrot.lane.b32.xlu0 %v435, 84
        %v3582 = vpop.permute.xlu0 %3581
        %3583 = vrot.lane.b32.xlu0 %v437, 84
        %v3584 = vpop.permute.xlu0 %3583
        %3585 = vrot.lane.b32.xlu0 %v439, 84
        %v3586 = vpop.permute.xlu0 %3585
        %vm3619 = vcmask 720544
        %3620 = vst.msk [vmem:[#allocation2] sm:$0xff] %vm3619, %v3524
        %3621 = vst.msk [vmem:[#allocation2 + $0x8] sm:$0xff] %vm3619, %v3526
        %3622 = vst.msk [vmem:[#allocation2 + $0x10] sm:$0xff] %vm3619, %v3528
        %3623 = vst.msk [vmem:[#allocation2 + $0x18] sm:$0xff] %vm3619, %v3530
        %3624 = vst.msk [vmem:[#allocation2 + $0x20] sm:$0xff] %vm3619, %v3532
        %3625 = vst.msk [vmem:[#allocation2 + $0x28] sm:$0xff] %vm3619, %v3534
        %3626 = vst.msk [vmem:[#allocation2 + $0x30] sm:$0xff] %vm3619, %v3536
        %3627 = vst.msk [vmem:[#allocation2 + $0x38] sm:$0xff] %vm3619, %v3538
        %3628 = vst.msk [vmem:[#allocation2 + $0x40] sm:$0xff] %vm3619, %v3540
        %3629 = vst.msk [vmem:[#allocation2 + $0x48] sm:$0xff] %vm3619, %v3542
        %3630 = vst.msk [vmem:[#allocation2 + $0x50] sm:$0xff] %vm3619, %v3544
        %3631 = vst.msk [vmem:[#allocation2 + $0x58] sm:$0xff] %vm3619, %v3546
        %3632 = vst.msk [vmem:[#allocation2 + $0x60] sm:$0xff] %vm3619, %v3548
        %3633 = vst.msk [vmem:[#allocation2 + $0x68] sm:$0xff] %vm3619, %v3550
        %3634 = vst.msk [vmem:[#allocation2 + $0x70] sm:$0xff] %vm3619, %v3552
        %3635 = vst.msk [vmem:[#allocation2 + $0x78] sm:$0xff] %vm3619, %v3554
        %3636 = vst.msk [vmem:[#allocation2 + $0x80] sm:$0xff] %vm3619, %v3556
        %3637 = vst.msk [vmem:[#allocation2 + $0x88] sm:$0xff] %vm3619, %v3558
        %3638 = vst.msk [vmem:[#allocation2 + $0x90] sm:$0xff] %vm3619, %v3560
        %3639 = vst.msk [vmem:[#allocation2 + $0x98] sm:$0xff] %vm3619, %v3562
        %3640 = vst.msk [vmem:[#allocation2 + $0xa0] sm:$0xff] %vm3619, %v3564
        %3641 = vst.msk [vmem:[#allocation2 + $0xa8] sm:$0xff] %vm3619, %v3566
        %3642 = vst.msk [vmem:[#allocation2 + $0xb0] sm:$0xff] %vm3619, %v3568
        %3643 = vst.msk [vmem:[#allocation2 + $0xb8] sm:$0xff] %vm3619, %v3570
        %3644 = vst.msk [vmem:[#allocation2 + $0xc0] sm:$0xff] %vm3619, %v3572
        %3645 = vst.msk [vmem:[#allocation2 + $0xc8] sm:$0xff] %vm3619, %v3574
        %3646 = vst.msk [vmem:[#allocation2 + $0xd0] sm:$0xff] %vm3619, %v3576
        %3647 = vst.msk [vmem:[#allocation2 + $0xd8] sm:$0xff] %vm3619, %v3578
        %3648 = vst.msk [vmem:[#allocation2 + $0xe0] sm:$0xff] %vm3619, %v3580
        %3649 = vst.msk [vmem:[#allocation2 + $0xe8] sm:$0xff] %vm3619, %v3582
        %3650 = vst.msk [vmem:[#allocation2 + $0xf0] sm:$0xff] %vm3619, %v3584
        %3651 = vst.msk [vmem:[#allocation2 + $0xf8] sm:$0xff] %vm3619, %v3586
        %v3653 = vrot.slane %v439, 1
        %v3654 = vrot.slane %v440, 1
        %v3655 = vsel %vm540, %v3653, %v3654
        %3656 = vrot.lane.b32.xlu0 %v594, 88
        %v3657 = vpop.permute.xlu0 %3656
        %3658 = vrot.lane.b32.xlu0 %v597, 88
        %v3659 = vpop.permute.xlu0 %3658
        %3660 = vrot.lane.b32.xlu0 %v600, 88
        %v3661 = vpop.permute.xlu0 %3660
        %3662 = vrot.lane.b32.xlu0 %v603, 88
        %v3663 = vpop.permute.xlu0 %3662
        %3664 = vrot.lane.b32.xlu0 %v606, 88
        %v3665 = vpop.permute.xlu0 %3664
        %3666 = vrot.lane.b32.xlu0 %v609, 88
        %v3667 = vpop.permute.xlu0 %3666
        %3668 = vrot.lane.b32.xlu0 %v612, 88
        %v3669 = vpop.permute.xlu0 %3668
        %3670 = vrot.lane.b32.xlu0 %v1137, 88
        %v3671 = vpop.permute.xlu0 %3670
        %3672 = vrot.lane.b32.xlu0 %v618, 88
        %v3673 = vpop.permute.xlu0 %3672
        %3674 = vrot.lane.b32.xlu0 %v621, 88
        %v3675 = vpop.permute.xlu0 %3674
        %3676 = vrot.lane.b32.xlu0 %v624, 88
        %v3677 = vpop.permute.xlu0 %3676
        %3678 = vrot.lane.b32.xlu0 %v627, 88
        %v3679 = vpop.permute.xlu0 %3678
        %3680 = vrot.lane.b32.xlu0 %v630, 88
        %v3681 = vpop.permute.xlu0 %3680
        %3682 = vrot.lane.b32.xlu0 %v633, 88
        %v3683 = vpop.permute.xlu0 %3682
        %3684 = vrot.lane.b32.xlu0 %v636, 88
        %v3685 = vpop.permute.xlu0 %3684
        %3686 = vrot.lane.b32.xlu0 %v1140, 88
        %v3687 = vpop.permute.xlu0 %3686
        %3688 = vrot.lane.b32.xlu0 %v1980, 88
        %v3689 = vpop.permute.xlu0 %3688
        %3690 = vrot.lane.b32.xlu0 %v1983, 88
        %v3691 = vpop.permute.xlu0 %3690
        %3692 = vrot.lane.b32.xlu0 %v1986, 88
        %v3693 = vpop.permute.xlu0 %3692
        %3694 = vrot.lane.b32.xlu0 %v1989, 88
        %v3695 = vpop.permute.xlu0 %3694
        %3696 = vrot.lane.b32.xlu0 %v1992, 88
        %v3697 = vpop.permute.xlu0 %3696
        %3698 = vrot.lane.b32.xlu0 %v1995, 88
        %v3699 = vpop.permute.xlu0 %3698
        %3700 = vrot.lane.b32.xlu0 %v1998, 88
        %v3701 = vpop.permute.xlu0 %3700
        %3702 = vrot.lane.b32.xlu0 %v2414, 88
        %v3703 = vpop.permute.xlu0 %3702
        %3704 = vrot.lane.b32.xlu0 %v3221, 88
        %v3705 = vpop.permute.xlu0 %3704
        %3706 = vrot.lane.b32.xlu0 %v3224, 88
        %v3707 = vpop.permute.xlu0 %3706
        %3708 = vrot.lane.b32.xlu0 %v3227, 88
        %v3709 = vpop.permute.xlu0 %3708
        %3710 = vrot.lane.b32.xlu0 %v3230, 88
        %v3711 = vpop.permute.xlu0 %3710
        %3712 = vrot.lane.b32.xlu0 %v3233, 88
        %v3713 = vpop.permute.xlu0 %3712
        %3714 = vrot.lane.b32.xlu0 %v3236, 88
        %v3715 = vpop.permute.xlu0 %3714
        %3716 = vrot.lane.b32.xlu0 %v3239, 88
        %v3717 = vpop.permute.xlu0 %3716
        %3718 = vrot.lane.b32.xlu0 %v3655, 88
        %v3719 = vpop.permute.xlu0 %3718
        %vm3752 = vcmask 753344
        %3753 = vst.msk [vmem:[#allocation2] sm:$0xff] %vm3752, %v3657
        %3754 = vst.msk [vmem:[#allocation2 + $0x8] sm:$0xff] %vm3752, %v3659
        %3755 = vst.msk [vmem:[#allocation2 + $0x10] sm:$0xff] %vm3752, %v3661
        %3756 = vst.msk [vmem:[#allocation2 + $0x18] sm:$0xff] %vm3752, %v3663
        %3757 = vst.msk [vmem:[#allocation2 + $0x20] sm:$0xff] %vm3752, %v3665
        %3758 = vst.msk [vmem:[#allocation2 + $0x28] sm:$0xff] %vm3752, %v3667
        %3759 = vst.msk [vmem:[#allocation2 + $0x30] sm:$0xff] %vm3752, %v3669
        %3760 = vst.msk [vmem:[#allocation2 + $0x38] sm:$0xff] %vm3752, %v3671
        %3761 = vst.msk [vmem:[#allocation2 + $0x40] sm:$0xff] %vm3752, %v3673
        %3762 = vst.msk [vmem:[#allocation2 + $0x48] sm:$0xff] %vm3752, %v3675
        %3763 = vst.msk [vmem:[#allocation2 + $0x50] sm:$0xff] %vm3752, %v3677
        %3764 = vst.msk [vmem:[#allocation2 + $0x58] sm:$0xff] %vm3752, %v3679
        %3765 = vst.msk [vmem:[#allocation2 + $0x60] sm:$0xff] %vm3752, %v3681
        %3766 = vst.msk [vmem:[#allocation2 + $0x68] sm:$0xff] %vm3752, %v3683
        %3767 = vst.msk [vmem:[#allocation2 + $0x70] sm:$0xff] %vm3752, %v3685
        %3768 = vst.msk [vmem:[#allocation2 + $0x78] sm:$0xff] %vm3752, %v3687
        %3769 = vst.msk [vmem:[#allocation2 + $0x80] sm:$0xff] %vm3752, %v3689
        %3770 = vst.msk [vmem:[#allocation2 + $0x88] sm:$0xff] %vm3752, %v3691
        %3771 = vst.msk [vmem:[#allocation2 + $0x90] sm:$0xff] %vm3752, %v3693
        %3772 = vst.msk [vmem:[#allocation2 + $0x98] sm:$0xff] %vm3752, %v3695
        %3773 = vst.msk [vmem:[#allocation2 + $0xa0] sm:$0xff] %vm3752, %v3697
        %3774 = vst.msk [vmem:[#allocation2 + $0xa8] sm:$0xff] %vm3752, %v3699
        %3775 = vst.msk [vmem:[#allocation2 + $0xb0] sm:$0xff] %vm3752, %v3701
        %3776 = vst.msk [vmem:[#allocation2 + $0xb8] sm:$0xff] %vm3752, %v3703
        %3777 = vst.msk [vmem:[#allocation2 + $0xc0] sm:$0xff] %vm3752, %v3705
        %3778 = vst.msk [vmem:[#allocation2 + $0xc8] sm:$0xff] %vm3752, %v3707
        %3779 = vst.msk [vmem:[#allocation2 + $0xd0] sm:$0xff] %vm3752, %v3709
        %3780 = vst.msk [vmem:[#allocation2 + $0xd8] sm:$0xff] %vm3752, %v3711
        %3781 = vst.msk [vmem:[#allocation2 + $0xe0] sm:$0xff] %vm3752, %v3713
        %3782 = vst.msk [vmem:[#allocation2 + $0xe8] sm:$0xff] %vm3752, %v3715
        %3783 = vst.msk [vmem:[#allocation2 + $0xf0] sm:$0xff] %vm3752, %v3717
        %3784 = vst.msk [vmem:[#allocation2 + $0xf8] sm:$0xff] %vm3752, %v3719
        %v3785 = vrot.slane %v439, 2
        %v3786 = vrot.slane %v440, 2
        %v3787 = vsel %vm766, %v3785, %v3786
        %3788 = vrot.lane.b32.xlu0 %v820, 92
        %v3789 = vpop.permute.xlu0 %3788
        %3790 = vrot.lane.b32.xlu0 %v823, 92
        %v3791 = vpop.permute.xlu0 %3790
        %3792 = vrot.lane.b32.xlu0 %v826, 92
        %v3793 = vpop.permute.xlu0 %3792
        %3794 = vrot.lane.b32.xlu0 %v829, 92
        %v3795 = vpop.permute.xlu0 %3794
        %3796 = vrot.lane.b32.xlu0 %v832, 92
        %v3797 = vpop.permute.xlu0 %3796
        %3798 = vrot.lane.b32.xlu0 %v835, 92
        %v3799 = vpop.permute.xlu0 %3798
        %3800 = vrot.lane.b32.xlu0 %v838, 92
        %v3801 = vpop.permute.xlu0 %3800
        %3802 = vrot.lane.b32.xlu0 %v1278, 92
        %v3803 = vpop.permute.xlu0 %3802
        %3804 = vrot.lane.b32.xlu0 %v844, 92
        %v3805 = vpop.permute.xlu0 %3804
        %3806 = vrot.lane.b32.xlu0 %v847, 92
        %v3807 = vpop.permute.xlu0 %3806
        %3808 = vrot.lane.b32.xlu0 %v850, 92
        %v3809 = vpop.permute.xlu0 %3808
        %3810 = vrot.lane.b32.xlu0 %v853, 92
        %v3811 = vpop.permute.xlu0 %3810
        %3812 = vrot.lane.b32.xlu0 %v856, 92
        %v3813 = vpop.permute.xlu0 %3812
        %3814 = vrot.lane.b32.xlu0 %v859, 92
        %v3815 = vpop.permute.xlu0 %3814
        %3816 = vrot.lane.b32.xlu0 %v862, 92
        %v3817 = vpop.permute.xlu0 %3816
        %3818 = vrot.lane.b32.xlu0 %v1281, 92
        %v3819 = vpop.permute.xlu0 %3818
        %3820 = vrot.lane.b32.xlu0 %v2133, 92
        %v3821 = vpop.permute.xlu0 %3820
        %3822 = vrot.lane.b32.xlu0 %v2136, 92
        %v3823 = vpop.permute.xlu0 %3822
        %3824 = vrot.lane.b32.xlu0 %v2139, 92
        %v3825 = vpop.permute.xlu0 %3824
        %3826 = vrot.lane.b32.xlu0 %v2142, 92
        %v3827 = vpop.permute.xlu0 %3826
        %3828 = vrot.lane.b32.xlu0 %v2145, 92
        %v3829 = vpop.permute.xlu0 %3828
        %3830 = vrot.lane.b32.xlu0 %v2148, 92
        %v3831 = vpop.permute.xlu0 %3830
        %3832 = vrot.lane.b32.xlu0 %v2151, 92
        %v3833 = vpop.permute.xlu0 %3832
        %3834 = vrot.lane.b32.xlu0 %v2546, 92
        %v3835 = vpop.permute.xlu0 %3834
        %3836 = vrot.lane.b32.xlu0 %v3374, 92
        %v3837 = vpop.permute.xlu0 %3836
        %3838 = vrot.lane.b32.xlu0 %v3377, 92
        %v3839 = vpop.permute.xlu0 %3838
        %3840 = vrot.lane.b32.xlu0 %v3380, 92
        %v3841 = vpop.permute.xlu0 %3840
        %3842 = vrot.lane.b32.xlu0 %v3383, 92
        %v3843 = vpop.permute.xlu0 %3842
        %3844 = vrot.lane.b32.xlu0 %v3386, 92
        %v3845 = vpop.permute.xlu0 %3844
        %3846 = vrot.lane.b32.xlu0 %v3389, 92
        %v3847 = vpop.permute.xlu0 %3846
        %3848 = vrot.lane.b32.xlu0 %v3392, 92
        %v3849 = vpop.permute.xlu0 %3848
        %3850 = vrot.lane.b32.xlu0 %v3787, 92
        %v3851 = vpop.permute.xlu0 %3850
        %vm3884 = vcmask 786144
        %3885 = vst.msk [vmem:[#allocation2] sm:$0xff] %vm3884, %v3789
        %3886 = vst.msk [vmem:[#allocation2 + $0x8] sm:$0xff] %vm3884, %v3791
        %3887 = vst.msk [vmem:[#allocation2 + $0x10] sm:$0xff] %vm3884, %v3793
        %3888 = vst.msk [vmem:[#allocation2 + $0x18] sm:$0xff] %vm3884, %v3795
        %3889 = vst.msk [vmem:[#allocation2 + $0x20] sm:$0xff] %vm3884, %v3797
        %3890 = vst.msk [vmem:[#allocation2 + $0x28] sm:$0xff] %vm3884, %v3799
        %3891 = vst.msk [vmem:[#allocation2 + $0x30] sm:$0xff] %vm3884, %v3801
        %3892 = vst.msk [vmem:[#allocation2 + $0x38] sm:$0xff] %vm3884, %v3803
        %3893 = vst.msk [vmem:[#allocation2 + $0x40] sm:$0xff] %vm3884, %v3805
        %3894 = vst.msk [vmem:[#allocation2 + $0x48] sm:$0xff] %vm3884, %v3807
        %3895 = vst.msk [vmem:[#allocation2 + $0x50] sm:$0xff] %vm3884, %v3809
        %3896 = vst.msk [vmem:[#allocation2 + $0x58] sm:$0xff] %vm3884, %v3811
        %3897 = vst.msk [vmem:[#allocation2 + $0x60] sm:$0xff] %vm3884, %v3813
        %3898 = vst.msk [vmem:[#allocation2 + $0x68] sm:$0xff] %vm3884, %v3815
        %3899 = vst.msk [vmem:[#allocation2 + $0x70] sm:$0xff] %vm3884, %v3817
        %3900 = vst.msk [vmem:[#allocation2 + $0x78] sm:$0xff] %vm3884, %v3819
        %3901 = vst.msk [vmem:[#allocation2 + $0x80] sm:$0xff] %vm3884, %v3821
        %3902 = vst.msk [vmem:[#allocation2 + $0x88] sm:$0xff] %vm3884, %v3823
        %3903 = vst.msk [vmem:[#allocation2 + $0x90] sm:$0xff] %vm3884, %v3825
        %3904 = vst.msk [vmem:[#allocation2 + $0x98] sm:$0xff] %vm3884, %v3827
        %3905 = vst.msk [vmem:[#allocation2 + $0xa0] sm:$0xff] %vm3884, %v3829
        %3906 = vst.msk [vmem:[#allocation2 + $0xa8] sm:$0xff] %vm3884, %v3831
        %3907 = vst.msk [vmem:[#allocation2 + $0xb0] sm:$0xff] %vm3884, %v3833
        %3908 = vst.msk [vmem:[#allocation2 + $0xb8] sm:$0xff] %vm3884, %v3835
        %3909 = vst.msk [vmem:[#allocation2 + $0xc0] sm:$0xff] %vm3884, %v3837
        %3910 = vst.msk [vmem:[#allocation2 + $0xc8] sm:$0xff] %vm3884, %v3839
        %3911 = vst.msk [vmem:[#allocation2 + $0xd0] sm:$0xff] %vm3884, %v3841
        %3912 = vst.msk [vmem:[#allocation2 + $0xd8] sm:$0xff] %vm3884, %v3843
        %3913 = vst.msk [vmem:[#allocation2 + $0xe0] sm:$0xff] %vm3884, %v3845
        %3914 = vst.msk [vmem:[#allocation2 + $0xe8] sm:$0xff] %vm3884, %v3847
        %3915 = vst.msk [vmem:[#allocation2 + $0xf0] sm:$0xff] %vm3884, %v3849
        %3916 = vst.msk [vmem:[#allocation2 + $0xf8] sm:$0xff] %vm3884, %v3851
        %3918 = vrot.lane.b32.xlu0 %v367, 96
        %v3919 = vpop.permute.xlu0 %3918
        %3920 = vrot.lane.b32.xlu0 %v369, 96
        %v3921 = vpop.permute.xlu0 %3920
        %3922 = vrot.lane.b32.xlu0 %v371, 96
        %v3923 = vpop.permute.xlu0 %3922
        %3924 = vrot.lane.b32.xlu0 %v373, 96
        %v3925 = vpop.permute.xlu0 %3924
        %3926 = vrot.lane.b32.xlu0 %v375, 96
        %v3927 = vpop.permute.xlu0 %3926
        %3928 = vrot.lane.b32.xlu0 %v377, 96
        %v3929 = vpop.permute.xlu0 %3928
        %3930 = vrot.lane.b32.xlu0 %v379, 96
        %v3931 = vpop.permute.xlu0 %3930
        %3932 = vrot.lane.b32.xlu0 %v381, 96
        %v3933 = vpop.permute.xlu0 %3932
        %3934 = vrot.lane.b32.xlu0 %v387, 96
        %v3935 = vpop.permute.xlu0 %3934
        %3936 = vrot.lane.b32.xlu0 %v389, 96
        %v3937 = vpop.permute.xlu0 %3936
        %3938 = vrot.lane.b32.xlu0 %v391, 96
        %v3939 = vpop.permute.xlu0 %3938
        %3940 = vrot.lane.b32.xlu0 %v393, 96
        %v3941 = vpop.permute.xlu0 %3940
        %3942 = vrot.lane.b32.xlu0 %v395, 96
        %v3943 = vpop.permute.xlu0 %3942
        %3944 = vrot.lane.b32.xlu0 %v397, 96
        %v3945 = vpop.permute.xlu0 %3944
        %3946 = vrot.lane.b32.xlu0 %v399, 96
        %v3947 = vpop.permute.xlu0 %3946
        %3948 = vrot.lane.b32.xlu0 %v401, 96
        %v3949 = vpop.permute.xlu0 %3948
        %3950 = vrot.lane.b32.xlu0 %v407, 96
        %v3951 = vpop.permute.xlu0 %3950
        %3952 = vrot.lane.b32.xlu0 %v409, 96
        %v3953 = vpop.permute.xlu0 %3952
        %3954 = vrot.lane.b32.xlu0 %v411, 96
        %v3955 = vpop.permute.xlu0 %3954
        %3956 = vrot.lane.b32.xlu0 %v413, 96
        %v3957 = vpop.permute.xlu0 %3956
        %3958 = vrot.lane.b32.xlu0 %v415, 96
        %v3959 = vpop.permute.xlu0 %3958
        %3960 = vrot.lane.b32.xlu0 %v417, 96
        %v3961 = vpop.permute.xlu0 %3960
        %3962 = vrot.lane.b32.xlu0 %v419, 96
        %v3963 = vpop.permute.xlu0 %3962
        %3964 = vrot.lane.b32.xlu0 %v421, 96
        %v3965 = vpop.permute.xlu0 %3964
        %3966 = vrot.lane.b32.xlu0 %v427, 96
        %v3967 = vpop.permute.xlu0 %3966
        %3968 = vrot.lane.b32.xlu0 %v429, 96
        %v3969 = vpop.permute.xlu0 %3968
        %3970 = vrot.lane.b32.xlu0 %v431, 96
        %v3971 = vpop.permute.xlu0 %3970
        %3972 = vrot.lane.b32.xlu0 %v433, 96
        %v3973 = vpop.permute.xlu0 %3972
        %3974 = vrot.lane.b32.xlu0 %v435, 96
        %v3975 = vpop.permute.xlu0 %3974
        %3976 = vrot.lane.b32.xlu0 %v437, 96
        %v3977 = vpop.permute.xlu0 %3976
        %3978 = vrot.lane.b32.xlu0 %v439, 96
        %v3979 = vpop.permute.xlu0 %3978
        %3980 = vrot.lane.b32.xlu0 %v441, 96
        %v3981 = vpop.permute.xlu0 %3980
        %vm4014 = vcmask 818944
        %4015 = vst.msk [vmem:[#allocation2] sm:$0xff] %vm4014, %v3919
        %4016 = vst.msk [vmem:[#allocation2 + $0x8] sm:$0xff] %vm4014, %v3921
        %4017 = vst.msk [vmem:[#allocation2 + $0x10] sm:$0xff] %vm4014, %v3923
        %4018 = vst.msk [vmem:[#allocation2 + $0x18] sm:$0xff] %vm4014, %v3925
        %4019 = vst.msk [vmem:[#allocation2 + $0x20] sm:$0xff] %vm4014, %v3927
        %4020 = vst.msk [vmem:[#allocation2 + $0x28] sm:$0xff] %vm4014, %v3929
        %4021 = vst.msk [vmem:[#allocation2 + $0x30] sm:$0xff] %vm4014, %v3931
        %4022 = vst.msk [vmem:[#allocation2 + $0x38] sm:$0xff] %vm4014, %v3933
        %4023 = vst.msk [vmem:[#allocation2 + $0x40] sm:$0xff] %vm4014, %v3935
        %4024 = vst.msk [vmem:[#allocation2 + $0x48] sm:$0xff] %vm4014, %v3937
        %4025 = vst.msk [vmem:[#allocation2 + $0x50] sm:$0xff] %vm4014, %v3939
        %4026 = vst.msk [vmem:[#allocation2 + $0x58] sm:$0xff] %vm4014, %v3941
        %4027 = vst.msk [vmem:[#allocation2 + $0x60] sm:$0xff] %vm4014, %v3943
        %4028 = vst.msk [vmem:[#allocation2 + $0x68] sm:$0xff] %vm4014, %v3945
        %4029 = vst.msk [vmem:[#allocation2 + $0x70] sm:$0xff] %vm4014, %v3947
        %4030 = vst.msk [vmem:[#allocation2 + $0x78] sm:$0xff] %vm4014, %v3949
        %4031 = vst.msk [vmem:[#allocation2 + $0x80] sm:$0xff] %vm4014, %v3951
        %4032 = vst.msk [vmem:[#allocation2 + $0x88] sm:$0xff] %vm4014, %v3953
        %4033 = vst.msk [vmem:[#allocation2 + $0x90] sm:$0xff] %vm4014, %v3955
        %4034 = vst.msk [vmem:[#allocation2 + $0x98] sm:$0xff] %vm4014, %v3957
        %4035 = vst.msk [vmem:[#allocation2 + $0xa0] sm:$0xff] %vm4014, %v3959
        %4036 = vst.msk [vmem:[#allocation2 + $0xa8] sm:$0xff] %vm4014, %v3961
        %4037 = vst.msk [vmem:[#allocation2 + $0xb0] sm:$0xff] %vm4014, %v3963
        %4038 = vst.msk [vmem:[#allocation2 + $0xb8] sm:$0xff] %vm4014, %v3965
        %4039 = vst.msk [vmem:[#allocation2 + $0xc0] sm:$0xff] %vm4014, %v3967
        %4040 = vst.msk [vmem:[#allocation2 + $0xc8] sm:$0xff] %vm4014, %v3969
        %4041 = vst.msk [vmem:[#allocation2 + $0xd0] sm:$0xff] %vm4014, %v3971
        %4042 = vst.msk [vmem:[#allocation2 + $0xd8] sm:$0xff] %vm4014, %v3973
        %4043 = vst.msk [vmem:[#allocation2 + $0xe0] sm:$0xff] %vm4014, %v3975
        %4044 = vst.msk [vmem:[#allocation2 + $0xe8] sm:$0xff] %vm4014, %v3977
        %4045 = vst.msk [vmem:[#allocation2 + $0xf0] sm:$0xff] %vm4014, %v3979
        %4046 = vst.msk [vmem:[#allocation2 + $0xf8] sm:$0xff] %vm4014, %v3981
        %v4048 = vrot.slane %v441, 1
        %v4049 = vrot.slane %v442, 1
        %v4050 = vsel %vm540, %v4048, %v4049
        %4051 = vrot.lane.b32.xlu0 %v597, 100
        %v4052 = vpop.permute.xlu0 %4051
        %4053 = vrot.lane.b32.xlu0 %v600, 100
        %v4054 = vpop.permute.xlu0 %4053
        %4055 = vrot.lane.b32.xlu0 %v603, 100
        %v4056 = vpop.permute.xlu0 %4055
        %4057 = vrot.lane.b32.xlu0 %v606, 100
        %v4058 = vpop.permute.xlu0 %4057
        %4059 = vrot.lane.b32.xlu0 %v609, 100
        %v4060 = vpop.permute.xlu0 %4059
        %4061 = vrot.lane.b32.xlu0 %v612, 100
        %v4062 = vpop.permute.xlu0 %4061
        %4063 = vrot.lane.b32.xlu0 %v1137, 100
        %v4064 = vpop.permute.xlu0 %4063
        %4065 = vrot.lane.b32.xlu0 %v1556, 100
        %v4066 = vpop.permute.xlu0 %4065
        %4067 = vrot.lane.b32.xlu0 %v621, 100
        %v4068 = vpop.permute.xlu0 %4067
        %4069 = vrot.lane.b32.xlu0 %v624, 100
        %v4070 = vpop.permute.xlu0 %4069
        %4071 = vrot.lane.b32.xlu0 %v627, 100
        %v4072 = vpop.permute.xlu0 %4071
        %4073 = vrot.lane.b32.xlu0 %v630, 100
        %v4074 = vpop.permute.xlu0 %4073
        %4075 = vrot.lane.b32.xlu0 %v633, 100
        %v4076 = vpop.permute.xlu0 %4075
        %4077 = vrot.lane.b32.xlu0 %v636, 100
        %v4078 = vpop.permute.xlu0 %4077
        %4079 = vrot.lane.b32.xlu0 %v1140, 100
        %v4080 = vpop.permute.xlu0 %4079
        %4081 = vrot.lane.b32.xlu0 %v1559, 100
        %v4082 = vpop.permute.xlu0 %4081
        %4083 = vrot.lane.b32.xlu0 %v1983, 100
        %v4084 = vpop.permute.xlu0 %4083
        %4085 = vrot.lane.b32.xlu0 %v1986, 100
        %v4086 = vpop.permute.xlu0 %4085
        %4087 = vrot.lane.b32.xlu0 %v1989, 100
        %v4088 = vpop.permute.xlu0 %4087
        %4089 = vrot.lane.b32.xlu0 %v1992, 100
        %v4090 = vpop.permute.xlu0 %4089
        %4091 = vrot.lane.b32.xlu0 %v1995, 100
        %v4092 = vpop.permute.xlu0 %4091
        %4093 = vrot.lane.b32.xlu0 %v1998, 100
        %v4094 = vpop.permute.xlu0 %4093
        %4095 = vrot.lane.b32.xlu0 %v2414, 100
        %v4096 = vpop.permute.xlu0 %4095
        %4097 = vrot.lane.b32.xlu0 %v2809, 100
        %v4098 = vpop.permute.xlu0 %4097
        %4099 = vrot.lane.b32.xlu0 %v3224, 100
        %v4100 = vpop.permute.xlu0 %4099
        %4101 = vrot.lane.b32.xlu0 %v3227, 100
        %v4102 = vpop.permute.xlu0 %4101
        %4103 = vrot.lane.b32.xlu0 %v3230, 100
        %v4104 = vpop.permute.xlu0 %4103
        %4105 = vrot.lane.b32.xlu0 %v3233, 100
        %v4106 = vpop.permute.xlu0 %4105
        %4107 = vrot.lane.b32.xlu0 %v3236, 100
        %v4108 = vpop.permute.xlu0 %4107
        %4109 = vrot.lane.b32.xlu0 %v3239, 100
        %v4110 = vpop.permute.xlu0 %4109
        %4111 = vrot.lane.b32.xlu0 %v3655, 100
        %v4112 = vpop.permute.xlu0 %4111
        %4113 = vrot.lane.b32.xlu0 %v4050, 100
        %v4114 = vpop.permute.xlu0 %4113
        %vm4147 = vcmask 851744
        %4148 = vst.msk [vmem:[#allocation2] sm:$0xff] %vm4147, %v4052
        %4149 = vst.msk [vmem:[#allocation2 + $0x8] sm:$0xff] %vm4147, %v4054
        %4150 = vst.msk [vmem:[#allocation2 + $0x10] sm:$0xff] %vm4147, %v4056
        %4151 = vst.msk [vmem:[#allocation2 + $0x18] sm:$0xff] %vm4147, %v4058
        %4152 = vst.msk [vmem:[#allocation2 + $0x20] sm:$0xff] %vm4147, %v4060
        %4153 = vst.msk [vmem:[#allocation2 + $0x28] sm:$0xff] %vm4147, %v4062
        %4154 = vst.msk [vmem:[#allocation2 + $0x30] sm:$0xff] %vm4147, %v4064
        %4155 = vst.msk [vmem:[#allocation2 + $0x38] sm:$0xff] %vm4147, %v4066
        %4156 = vst.msk [vmem:[#allocation2 + $0x40] sm:$0xff] %vm4147, %v4068
        %4157 = vst.msk [vmem:[#allocation2 + $0x48] sm:$0xff] %vm4147, %v4070
        %4158 = vst.msk [vmem:[#allocation2 + $0x50] sm:$0xff] %vm4147, %v4072
        %4159 = vst.msk [vmem:[#allocation2 + $0x58] sm:$0xff] %vm4147, %v4074
        %4160 = vst.msk [vmem:[#allocation2 + $0x60] sm:$0xff] %vm4147, %v4076
        %4161 = vst.msk [vmem:[#allocation2 + $0x68] sm:$0xff] %vm4147, %v4078
        %4162 = vst.msk [vmem:[#allocation2 + $0x70] sm:$0xff] %vm4147, %v4080
        %4163 = vst.msk [vmem:[#allocation2 + $0x78] sm:$0xff] %vm4147, %v4082
        %4164 = vst.msk [vmem:[#allocation2 + $0x80] sm:$0xff] %vm4147, %v4084
        %4165 = vst.msk [vmem:[#allocation2 + $0x88] sm:$0xff] %vm4147, %v4086
        %4166 = vst.msk [vmem:[#allocation2 + $0x90] sm:$0xff] %vm4147, %v4088
        %4167 = vst.msk [vmem:[#allocation2 + $0x98] sm:$0xff] %vm4147, %v4090
        %4168 = vst.msk [vmem:[#allocation2 + $0xa0] sm:$0xff] %vm4147, %v4092
        %4169 = vst.msk [vmem:[#allocation2 + $0xa8] sm:$0xff] %vm4147, %v4094
        %4170 = vst.msk [vmem:[#allocation2 + $0xb0] sm:$0xff] %vm4147, %v4096
        %4171 = vst.msk [vmem:[#allocation2 + $0xb8] sm:$0xff] %vm4147, %v4098
        %4172 = vst.msk [vmem:[#allocation2 + $0xc0] sm:$0xff] %vm4147, %v4100
        %4173 = vst.msk [vmem:[#allocation2 + $0xc8] sm:$0xff] %vm4147, %v4102
        %4174 = vst.msk [vmem:[#allocation2 + $0xd0] sm:$0xff] %vm4147, %v4104
        %4175 = vst.msk [vmem:[#allocation2 + $0xd8] sm:$0xff] %vm4147, %v4106
        %4176 = vst.msk [vmem:[#allocation2 + $0xe0] sm:$0xff] %vm4147, %v4108
        %4177 = vst.msk [vmem:[#allocation2 + $0xe8] sm:$0xff] %vm4147, %v4110
        %4178 = vst.msk [vmem:[#allocation2 + $0xf0] sm:$0xff] %vm4147, %v4112
        %4179 = vst.msk [vmem:[#allocation2 + $0xf8] sm:$0xff] %vm4147, %v4114
        %v4180 = vrot.slane %v441, 2
        %v4181 = vrot.slane %v442, 2
        %v4182 = vsel %vm766, %v4180, %v4181
        %4183 = vrot.lane.b32.xlu0 %v823, 104
        %v4184 = vpop.permute.xlu0 %4183
        %4185 = vrot.lane.b32.xlu0 %v826, 104
        %v4186 = vpop.permute.xlu0 %4185
        %4187 = vrot.lane.b32.xlu0 %v829, 104
        %v4188 = vpop.permute.xlu0 %4187
        %4189 = vrot.lane.b32.xlu0 %v832, 104
        %v4190 = vpop.permute.xlu0 %4189
        %4191 = vrot.lane.b32.xlu0 %v835, 104
        %v4192 = vpop.permute.xlu0 %4191
        %4193 = vrot.lane.b32.xlu0 %v838, 104
        %v4194 = vpop.permute.xlu0 %4193
        %4195 = vrot.lane.b32.xlu0 %v1278, 104
        %v4196 = vpop.permute.xlu0 %4195
        %4197 = vrot.lane.b32.xlu0 %v1697, 104
        %v4198 = vpop.permute.xlu0 %4197
        %4199 = vrot.lane.b32.xlu0 %v847, 104
        %v4200 = vpop.permute.xlu0 %4199
        %4201 = vrot.lane.b32.xlu0 %v850, 104
        %v4202 = vpop.permute.xlu0 %4201
        %4203 = vrot.lane.b32.xlu0 %v853, 104
        %v4204 = vpop.permute.xlu0 %4203
        %4205 = vrot.lane.b32.xlu0 %v856, 104
        %v4206 = vpop.permute.xlu0 %4205
        %4207 = vrot.lane.b32.xlu0 %v859, 104
        %v4208 = vpop.permute.xlu0 %4207
        %4209 = vrot.lane.b32.xlu0 %v862, 104
        %v4210 = vpop.permute.xlu0 %4209
        %4211 = vrot.lane.b32.xlu0 %v1281, 104
        %v4212 = vpop.permute.xlu0 %4211
        %4213 = vrot.lane.b32.xlu0 %v1700, 104
        %v4214 = vpop.permute.xlu0 %4213
        %4215 = vrot.lane.b32.xlu0 %v2136, 104
        %v4216 = vpop.permute.xlu0 %4215
        %4217 = vrot.lane.b32.xlu0 %v2139, 104
        %v4218 = vpop.permute.xlu0 %4217
        %4219 = vrot.lane.b32.xlu0 %v2142, 104
        %v4220 = vpop.permute.xlu0 %4219
        %4221 = vrot.lane.b32.xlu0 %v2145, 104
        %v4222 = vpop.permute.xlu0 %4221
        %4223 = vrot.lane.b32.xlu0 %v2148, 104
        %v4224 = vpop.permute.xlu0 %4223
        %4225 = vrot.lane.b32.xlu0 %v2151, 104
        %v4226 = vpop.permute.xlu0 %4225
        %4227 = vrot.lane.b32.xlu0 %v2546, 104
        %v4228 = vpop.permute.xlu0 %4227
        %4229 = vrot.lane.b32.xlu0 %v2941, 104
        %v4230 = vpop.permute.xlu0 %4229
        %4231 = vrot.lane.b32.xlu0 %v3377, 104
        %v4232 = vpop.permute.xlu0 %4231
        %4233 = vrot.lane.b32.xlu0 %v3380, 104
        %v4234 = vpop.permute.xlu0 %4233
        %4235 = vrot.lane.b32.xlu0 %v3383, 104
        %v4236 = vpop.permute.xlu0 %4235
        %4237 = vrot.lane.b32.xlu0 %v3386, 104
        %v4238 = vpop.permute.xlu0 %4237
        %4239 = vrot.lane.b32.xlu0 %v3389, 104
        %v4240 = vpop.permute.xlu0 %4239
        %4241 = vrot.lane.b32.xlu0 %v3392, 104
        %v4242 = vpop.permute.xlu0 %4241
        %4243 = vrot.lane.b32.xlu0 %v3787, 104
        %v4244 = vpop.permute.xlu0 %4243
        %4245 = vrot.lane.b32.xlu0 %v4182, 104
        %v4246 = vpop.permute.xlu0 %4245
        %vm4279 = vcmask 884544
        %4280 = vst.msk [vmem:[#allocation2] sm:$0xff] %vm4279, %v4184
        %4281 = vst.msk [vmem:[#allocation2 + $0x8] sm:$0xff] %vm4279, %v4186
        %4282 = vst.msk [vmem:[#allocation2 + $0x10] sm:$0xff] %vm4279, %v4188
        %4283 = vst.msk [vmem:[#allocation2 + $0x18] sm:$0xff] %vm4279, %v4190
        %4284 = vst.msk [vmem:[#allocation2 + $0x20] sm:$0xff] %vm4279, %v4192
        %4285 = vst.msk [vmem:[#allocation2 + $0x28] sm:$0xff] %vm4279, %v4194
        %4286 = vst.msk [vmem:[#allocation2 + $0x30] sm:$0xff] %vm4279, %v4196
        %4287 = vst.msk [vmem:[#allocation2 + $0x38] sm:$0xff] %vm4279, %v4198
        %4288 = vst.msk [vmem:[#allocation2 + $0x40] sm:$0xff] %vm4279, %v4200
        %4289 = vst.msk [vmem:[#allocation2 + $0x48] sm:$0xff] %vm4279, %v4202
        %4290 = vst.msk [vmem:[#allocation2 + $0x50] sm:$0xff] %vm4279, %v4204
        %4291 = vst.msk [vmem:[#allocation2 + $0x58] sm:$0xff] %vm4279, %v4206
        %4292 = vst.msk [vmem:[#allocation2 + $0x60] sm:$0xff] %vm4279, %v4208
        %4293 = vst.msk [vmem:[#allocation2 + $0x68] sm:$0xff] %vm4279, %v4210
        %4294 = vst.msk [vmem:[#allocation2 + $0x70] sm:$0xff] %vm4279, %v4212
        %4295 = vst.msk [vmem:[#allocation2 + $0x78] sm:$0xff] %vm4279, %v4214
        %4296 = vst.msk [vmem:[#allocation2 + $0x80] sm:$0xff] %vm4279, %v4216
        %4297 = vst.msk [vmem:[#allocation2 + $0x88] sm:$0xff] %vm4279, %v4218
        %4298 = vst.msk [vmem:[#allocation2 + $0x90] sm:$0xff] %vm4279, %v4220
        %4299 = vst.msk [vmem:[#allocation2 + $0x98] sm:$0xff] %vm4279, %v4222
        %4300 = vst.msk [vmem:[#allocation2 + $0xa0] sm:$0xff] %vm4279, %v4224
        %4301 = vst.msk [vmem:[#allocation2 + $0xa8] sm:$0xff] %vm4279, %v4226
        %4302 = vst.msk [vmem:[#allocation2 + $0xb0] sm:$0xff] %vm4279, %v4228
        %4303 = vst.msk [vmem:[#allocation2 + $0xb8] sm:$0xff] %vm4279, %v4230
        %4304 = vst.msk [vmem:[#allocation2 + $0xc0] sm:$0xff] %vm4279, %v4232
        %4305 = vst.msk [vmem:[#allocation2 + $0xc8] sm:$0xff] %vm4279, %v4234
        %4306 = vst.msk [vmem:[#allocation2 + $0xd0] sm:$0xff] %vm4279, %v4236
        %4307 = vst.msk [vmem:[#allocation2 + $0xd8] sm:$0xff] %vm4279, %v4238
        %4308 = vst.msk [vmem:[#allocation2 + $0xe0] sm:$0xff] %vm4279, %v4240
        %4309 = vst.msk [vmem:[#allocation2 + $0xe8] sm:$0xff] %vm4279, %v4242
        %4310 = vst.msk [vmem:[#allocation2 + $0xf0] sm:$0xff] %vm4279, %v4244
        %4311 = vst.msk [vmem:[#allocation2 + $0xf8] sm:$0xff] %vm4279, %v4246
        %v4312 = vld [vmem:[#allocation2] sm:$0xff]
        %v4313 = vld [vmem:[#allocation2 + $0x8] sm:$0xff]
        %v4314 = vld [vmem:[#allocation2 + $0x10] sm:$0xff]
        %v4315 = vld [vmem:[#allocation2 + $0x18] sm:$0xff]
        %v4316 = vld [vmem:[#allocation2 + $0x20] sm:$0xff]
        %v4317 = vld [vmem:[#allocation2 + $0x28] sm:$0xff]
        %v4318 = vld [vmem:[#allocation2 + $0x30] sm:$0xff]
        %v4319 = vld [vmem:[#allocation2 + $0x38] sm:$0xff]
        %v4320 = vld [vmem:[#allocation2 + $0x40] sm:$0xff]
        %v4321 = vld [vmem:[#allocation2 + $0x48] sm:$0xff]
        %v4322 = vld [vmem:[#allocation2 + $0x50] sm:$0xff]
        %v4323 = vld [vmem:[#allocation2 + $0x58] sm:$0xff]
        %v4324 = vld [vmem:[#allocation2 + $0x60] sm:$0xff]
        %v4325 = vld [vmem:[#allocation2 + $0x68] sm:$0xff]
        %v4326 = vld [vmem:[#allocation2 + $0x70] sm:$0xff]
        %v4327 = vld [vmem:[#allocation2 + $0x78] sm:$0xff]
        %v4328 = vld [vmem:[#allocation2 + $0x80] sm:$0xff]
        %v4329 = vld [vmem:[#allocation2 + $0x88] sm:$0xff]
        %v4330 = vld [vmem:[#allocation2 + $0x90] sm:$0xff]
        %v4331 = vld [vmem:[#allocation2 + $0x98] sm:$0xff]
        %v4332 = vld [vmem:[#allocation2 + $0xa0] sm:$0xff]
        %v4333 = vld [vmem:[#allocation2 + $0xa8] sm:$0xff]
        %v4334 = vld [vmem:[#allocation2 + $0xb0] sm:$0xff]
        %v4335 = vld [vmem:[#allocation2 + $0xb8] sm:$0xff]
        %v4336 = vld [vmem:[#allocation2 + $0xc0] sm:$0xff]
        %v4337 = vld [vmem:[#allocation2 + $0xc8] sm:$0xff]
        %v4338 = vld [vmem:[#allocation2 + $0xd0] sm:$0xff]
        %v4339 = vld [vmem:[#allocation2 + $0xd8] sm:$0xff]
        %v4340 = vld [vmem:[#allocation2 + $0xe0] sm:$0xff]
        %v4341 = vld [vmem:[#allocation2 + $0xe8] sm:$0xff]
        %v4342 = vld [vmem:[#allocation2 + $0xf0] sm:$0xff]
        %v4343 = vld [vmem:[#allocation2 + $0xf8] sm:$0xff]
        %v4344 = vld [vmem:[%s1] sm:$0xff]
        %v4345 = vld [vmem:[%s1 + $0x8] sm:$0xff]
        %v4346 = vld [vmem:[%s1 + $0x10] sm:$0xff]
        %v4347 = vld [vmem:[%s1 + $0x18] sm:$0xff]
        %v4348 = vld [vmem:[%s1 + $0x20] sm:$0xff]
        %v4349 = vld [vmem:[%s1 + $0x28] sm:$0xff]
        %v4350 = vld [vmem:[%s1 + $0x30] sm:$0xff]
        %v4351 = vld [vmem:[%s1 + $0x38] sm:$0xff]
        %v4352 = vld [vmem:[%s1 + $0x40] sm:$0xff]
        %v4353 = vld [vmem:[%s1 + $0x48] sm:$0xff]
        %v4354 = vld [vmem:[%s1 + $0x50] sm:$0xff]
        %v4355 = vld [vmem:[%s1 + $0x58] sm:$0xff]
        %v4356 = vld [vmem:[%s1 + $0x60] sm:$0xff]
        %v4357 = vld [vmem:[%s1 + $0x68] sm:$0xf]
        %vm4358 = vcmask 883712
        %v4360 = vsel %vm4358, %v4312, 0
        %v4363 = vsel %vm4358, %v4313, 0
        %v4366 = vsel %vm4358, %v4314, 0
        %v4369 = vsel %vm4358, %v4315, 0
        %v4372 = vsel %vm4358, %v4316, 0
        %v4375 = vsel %vm4358, %v4317, 0
        %v4378 = vsel %vm4358, %v4318, 0
        %v4381 = vsel %vm4358, %v4319, 0
        %v4384 = vsel %vm4358, %v4320, 0
        %v4387 = vsel %vm4358, %v4321, 0
        %v4390 = vsel %vm4358, %v4322, 0
        %v4393 = vsel %vm4358, %v4323, 0
        %v4396 = vsel %vm4358, %v4324, 0
        %v4399 = vsel %vm4358, %v4325, 0
        %v4402 = vsel %vm4358, %v4326, 0
        %v4405 = vsel %vm4358, %v4327, 0
        %v4408 = vsel %vm4358, %v4328, 0
        %v4411 = vsel %vm4358, %v4329, 0
        %v4414 = vsel %vm4358, %v4330, 0
        %v4417 = vsel %vm4358, %v4331, 0
        %v4420 = vsel %vm4358, %v4332, 0
        %v4423 = vsel %vm4358, %v4333, 0
        %v4426 = vsel %vm4358, %v4334, 0
        %v4429 = vsel %vm4358, %v4335, 0
        %v4432 = vsel %vm4358, %v4336, 0
        %v4435 = vsel %vm4358, %v4337, 0
        %v4438 = vsel %vm4358, %v4338, 0
        %v4441 = vsel %vm4358, %v4339, 0
        %v4444 = vsel %vm4358, %v4340, 0
        %v4447 = vsel %vm4358, %v4341, 0
        %v4450 = vsel %vm4358, %v4342, 0
        %v4453 = vsel %vm4358, %v4343, 0
        %vm4455 = vcmask 1043456
        %v4457 = vsel %vm4455, %v4357, 0
        %4459 = vmatprep.subr.mxu0 0.0
        %4460 = vmatpush1.msra.mxu0 %v4344
        %4461 = vmatprep.subr.mxu0 0.0
        %4462 = vmatpush1.msra.mxu0 %v4345
        %4463 = vmatprep.subr.mxu0 0.0
        %4464 = vmatpush1.msra.mxu0 %v4346
        %4465 = vmatprep.subr.mxu0 0.0
        %4466 = vmatpush1.msra.mxu0 %v4347
        %4467 = vmatprep.subr.mxu0 0.0
        %4468 = vmatpush1.msra.mxu0 %v4348
        %4469 = vmatprep.subr.mxu0 0.0
        %4470 = vmatpush1.msra.mxu0 %v4349
        %4471 = vmatprep.subr.mxu0 0.0
        %4472 = vmatpush1.msra.mxu0 %v4350
        %4473 = vmatprep.subr.mxu0 0.0
        %4474 = vmatpush1.msra.mxu0 %v4351
        %4475 = vmatprep.subr.mxu0 0.0
        %4476 = vmatpush1.msra.mxu0 %v4352
        %4477 = vmatprep.subr.mxu0 0.0
        %4478 = vmatpush1.msra.mxu0 %v4353
        %4479 = vmatprep.subr.mxu0 0.0
        %4480 = vmatpush1.msra.mxu0 %v4354
        %4481 = vmatprep.subr.mxu0 0.0
        %4482 = vmatpush1.msra.mxu0 %v4355
        %4483 = vmatprep.subr.mxu0 0.0
        %4484 = vmatpush1.msra.mxu0 %v4356
        %4485 = vmatprep.subr.mxu0 0.0
        %4486 = vmatpush1.msra.mxu0 %v4457
        %4487 = vmatprep.subr.mxu0 0.0
        %4488 = vmatpush1.msra.mxu0 0.0
        %4489 = vmatprep.subr.mxu0 0.0
        %4490 = vmatpush1.msra.mxu0 0.0
        %4491 = vmatprep.subr.mxu0 0.0
        %4492 = vmatpush1.msra.mxu0 0.0
        %4493 = vmatprep.subr.mxu0 0.0
        %4494 = vmatpush1.msra.mxu0 0.0
        %4495 = vmatprep.subr.mxu0 0.0
        %4496 = vmatpush1.msra.mxu0 0.0
        %4497 = vmatprep.subr.mxu0 0.0
        %4498 = vmatpush1.msra.mxu0 0.0
        %4499 = vmatprep.subr.mxu0 0.0
        %4500 = vmatpush1.msra.mxu0 0.0
        %4501 = vmatprep.subr.mxu0 0.0
        %4502 = vmatpush1.msra.mxu0 0.0
        %4503 = vmatprep.subr.mxu0 0.0
        %4504 = vmatpush1.msra.mxu0 0.0
        %4505 = vmatprep.subr.mxu0 0.0
        %4506 = vmatpush1.msra.mxu0 0.0
        %4507 = vmatprep.subr.mxu0 0.0
        %4508 = vmatpush1.msra.mxu0 0.0
        %4509 = vmatprep.subr.mxu0 0.0
        %4510 = vmatpush1.msra.mxu0 0.0
        %4511 = vmatprep.subr.mxu0 0.0
        %4512 = vmatpush1.msra.mxu0 0.0
        %4513 = vmatprep.subr.mxu0 0.0
        %4514 = vmatpush1.msra.mxu0 0.0
        %4515 = vmatprep.subr.mxu0 0.0
        %4516 = vmatpush1.msra.mxu0 0.0
        %4517 = vmatprep.subr.mxu0 0.0
        %4518 = vmatpush1.msra.mxu0 0.0
        %4519 = vmatprep.subr.mxu0 0.0
        %4520 = vmatpush1.msra.mxu0 0.0
        %4521 = vmatprep.subr.mxu0 0.0
        %4522 = vmatpush1.msra.mxu0 0.0
        %4523 = vmatprep.mubr.f32.mxu0 0.0
        %4524 = vmatmul.mubr.f32.gmra.mrb[0].mxu0 %v4360
        %v4525 = vpop.f32.mrb[0].mxu0
        %v4526 = vadd.f32 0.0, %v4525
        %v4527 = vpop.f32.mrb[0].mxu0
        %4528 = vmatprep.mubr.f32.mxu0 0.0
        %4529 = vmatmul.mubr.f32.gmra.mrb[0].mxu0 %v4363
        %v4530 = vpop.f32.mrb[0].mxu0
        %v4531 = vadd.f32 0.0, %v4530
        %v4532 = vpop.f32.mrb[0].mxu0
        %4533 = vmatprep.mubr.f32.mxu0 0.0
        %4534 = vmatmul.mubr.f32.gmra.mrb[0].mxu0 %v4366
        %v4535 = vpop.f32.mrb[0].mxu0
        %v4536 = vadd.f32 0.0, %v4535
        %v4537 = vpop.f32.mrb[0].mxu0
        %4538 = vmatprep.mubr.f32.mxu0 0.0
        %4539 = vmatmul.mubr.f32.gmra.mrb[0].mxu0 %v4369
        %v4540 = vpop.f32.mrb[0].mxu0
        %v4541 = vadd.f32 0.0, %v4540
        %v4542 = vpop.f32.mrb[0].mxu0
        %4543 = vmatprep.mubr.f32.mxu0 0.0
        %4544 = vmatmul.mubr.f32.gmra.mrb[0].mxu0 %v4372
        %v4545 = vpop.f32.mrb[0].mxu0
        %v4546 = vadd.f32 0.0, %v4545
        %v4547 = vpop.f32.mrb[0].mxu0
        %4548 = vmatprep.mubr.f32.mxu0 0.0
        %4549 = vmatmul.mubr.f32.gmra.mrb[0].mxu0 %v4375
        %v4550 = vpop.f32.mrb[0].mxu0
        %v4551 = vadd.f32 0.0, %v4550
        %v4552 = vpop.f32.mrb[0].mxu0
        %4553 = vmatprep.mubr.f32.mxu0 0.0
        %4554 = vmatmul.mubr.f32.gmra.mrb[0].mxu0 %v4378
        %v4555 = vpop.f32.mrb[0].mxu0
        %v4556 = vadd.f32 0.0, %v4555
        %v4557 = vpop.f32.mrb[0].mxu0
        %4558 = vmatprep.mubr.f32.mxu0 0.0
        %4559 = vmatmul.mubr.f32.gmra.mrb[0].mxu0 %v4381
        %v4560 = vpop.f32.mrb[0].mxu0
        %v4561 = vadd.f32 0.0, %v4560
        %v4562 = vpop.f32.mrb[0].mxu0
        %4563 = vmatprep.mubr.f32.mxu0 0.0
        %4564 = vmatmul.mubr.f32.gmra.mrb[0].mxu0 %v4384
        %v4565 = vpop.f32.mrb[0].mxu0
        %v4566 = vadd.f32 0.0, %v4565
        %v4567 = vpop.f32.mrb[0].mxu0
        %4568 = vmatprep.mubr.f32.mxu0 0.0
        %4569 = vmatmul.mubr.f32.gmra.mrb[0].mxu0 %v4387
        %v4570 = vpop.f32.mrb[0].mxu0
        %v4571 = vadd.f32 0.0, %v4570
        %v4572 = vpop.f32.mrb[0].mxu0
        %4573 = vmatprep.mubr.f32.mxu0 0.0
        %4574 = vmatmul.mubr.f32.gmra.mrb[0].mxu0 %v4390
        %v4575 = vpop.f32.mrb[0].mxu0
        %v4576 = vadd.f32 0.0, %v4575
        %v4577 = vpop.f32.mrb[0].mxu0
        %4578 = vmatprep.mubr.f32.mxu0 0.0
        %4579 = vmatmul.mubr.f32.gmra.mrb[0].mxu0 %v4393
        %v4580 = vpop.f32.mrb[0].mxu0
        %v4581 = vadd.f32 0.0, %v4580
        %v4582 = vpop.f32.mrb[0].mxu0
        %4583 = vmatprep.mubr.f32.mxu0 0.0
        %4584 = vmatmul.mubr.f32.gmra.mrb[0].mxu0 %v4396
        %v4585 = vpop.f32.mrb[0].mxu0
        %v4586 = vadd.f32 0.0, %v4585
        %v4587 = vpop.f32.mrb[0].mxu0
        %4588 = vmatprep.mubr.f32.mxu0 0.0
        %4589 = vmatmul.mubr.f32.gmra.mrb[0].mxu0 %v4399
        %v4590 = vpop.f32.mrb[0].mxu0
        %v4591 = vadd.f32 0.0, %v4590
        %v4592 = vpop.f32.mrb[0].mxu0
        %4593 = vmatprep.mubr.f32.mxu0 0.0
        %4594 = vmatmul.mubr.f32.gmra.mrb[0].mxu0 %v4402
        %v4595 = vpop.f32.mrb[0].mxu0
        %v4596 = vadd.f32 0.0, %v4595
        %v4597 = vpop.f32.mrb[0].mxu0
        %4598 = vmatprep.mubr.f32.mxu0 0.0
        %4599 = vmatmul.mubr.f32.gmra.mrb[0].mxu0 %v4405
        %v4600 = vpop.f32.mrb[0].mxu0
        %v4601 = vadd.f32 0.0, %v4600
        %v4602 = vpop.f32.mrb[0].mxu0
        %4603 = vmatprep.mubr.f32.mxu0 0.0
        %4604 = vmatmul.mubr.f32.gmra.mrb[0].mxu0 %v4408
        %v4605 = vpop.f32.mrb[0].mxu0
        %v4606 = vadd.f32 0.0, %v4605
        %v4607 = vpop.f32.mrb[0].mxu0
        %4608 = vmatprep.mubr.f32.mxu0 0.0
        %4609 = vmatmul.mubr.f32.gmra.mrb[0].mxu0 %v4411
        %v4610 = vpop.f32.mrb[0].mxu0
        %v4611 = vadd.f32 0.0, %v4610
        %v4612 = vpop.f32.mrb[0].mxu0
        %4613 = vmatprep.mubr.f32.mxu0 0.0
        %4614 = vmatmul.mubr.f32.gmra.mrb[0].mxu0 %v4414
        %v4615 = vpop.f32.mrb[0].mxu0
        %v4616 = vadd.f32 0.0, %v4615
        %v4617 = vpop.f32.mrb[0].mxu0
        %4618 = vmatprep.mubr.f32.mxu0 0.0
        %4619 = vmatmul.mubr.f32.gmra.mrb[0].mxu0 %v4417
        %v4620 = vpop.f32.mrb[0].mxu0
        %v4621 = vadd.f32 0.0, %v4620
        %v4622 = vpop.f32.mrb[0].mxu0
        %4623 = vmatprep.mubr.f32.mxu0 0.0
        %4624 = vmatmul.mubr.f32.gmra.mrb[0].mxu0 %v4420
        %v4625 = vpop.f32.mrb[0].mxu0
        %v4626 = vadd.f32 0.0, %v4625
        %v4627 = vpop.f32.mrb[0].mxu0
        %4628 = vmatprep.mubr.f32.mxu0 0.0
        %4629 = vmatmul.mubr.f32.gmra.mrb[0].mxu0 %v4423
        %v4630 = vpop.f32.mrb[0].mxu0
        %v4631 = vadd.f32 0.0, %v4630
        %v4632 = vpop.f32.mrb[0].mxu0
        %4633 = vmatprep.mubr.f32.mxu0 0.0
        %4634 = vmatmul.mubr.f32.gmra.mrb[0].mxu0 %v4426
        %v4635 = vpop.f32.mrb[0].mxu0
        %v4636 = vadd.f32 0.0, %v4635
        %v4637 = vpop.f32.mrb[0].mxu0
        %4638 = vmatprep.mubr.f32.mxu0 0.0
        %4639 = vmatmul.mubr.f32.gmra.mrb[0].mxu0 %v4429
        %v4640 = vpop.f32.mrb[0].mxu0
        %v4641 = vadd.f32 0.0, %v4640
        %v4642 = vpop.f32.mrb[0].mxu0
        %4643 = vmatprep.mubr.f32.mxu0 0.0
        %4644 = vmatmul.mubr.f32.gmra.mrb[0].mxu0 %v4432
        %v4645 = vpop.f32.mrb[0].mxu0
        %v4646 = vadd.f32 0.0, %v4645
        %v4647 = vpop.f32.mrb[0].mxu0
        %4648 = vmatprep.mubr.f32.mxu0 0.0
        %4649 = vmatmul.mubr.f32.gmra.mrb[0].mxu0 %v4435
        %v4650 = vpop.f32.mrb[0].mxu0
        %v4651 = vadd.f32 0.0, %v4650
        %v4652 = vpop.f32.mrb[0].mxu0
        %4653 = vmatprep.mubr.f32.mxu0 0.0
        %4654 = vmatmul.mubr.f32.gmra.mrb[0].mxu0 %v4438
        %v4655 = vpop.f32.mrb[0].mxu0
        %v4656 = vadd.f32 0.0, %v4655
        %v4657 = vpop.f32.mrb[0].mxu0
        %4658 = vmatprep.mubr.f32.mxu0 0.0
        %4659 = vmatmul.mubr.f32.gmra.mrb[0].mxu0 %v4441
        %v4660 = vpop.f32.mrb[0].mxu0
        %v4661 = vadd.f32 0.0, %v4660
        %v4662 = vpop.f32.mrb[0].mxu0
        %4663 = vmatprep.mubr.f32.mxu0 0.0
        %4664 = vmatmul.mubr.f32.gmra.mrb[0].mxu0 %v4444
        %v4665 = vpop.f32.mrb[0].mxu0
        %v4666 = vadd.f32 0.0, %v4665
        %v4667 = vpop.f32.mrb[0].mxu0
        %4668 = vmatprep.mubr.f32.mxu0 0.0
        %4669 = vmatmul.mubr.f32.gmra.mrb[0].mxu0 %v4447
        %v4670 = vpop.f32.mrb[0].mxu0
        %v4671 = vadd.f32 0.0, %v4670
        %v4672 = vpop.f32.mrb[0].mxu0
        %4673 = vmatprep.mubr.f32.mxu0 0.0
        %4674 = vmatmul.mubr.f32.gmra.mrb[0].mxu0 %v4450
        %v4675 = vpop.f32.mrb[0].mxu0
        %v4676 = vadd.f32 0.0, %v4675
        %v4677 = vpop.f32.mrb[0].mxu0
        %4678 = vmatprep.mubr.f32.mxu0 0.0
        %4679 = vmatmul.mubr.f32.gmra.mrb[0].mxu0 %v4453
        %v4680 = vpop.f32.mrb[0].mxu0
        %v4681 = vadd.f32 0.0, %v4680
        %v4682 = vpop.f32.mrb[0].mxu0
        %4683 = vdwg.mxu0
        %vm4684 = vcmask 64512
        %4685 = vst.msk [vmem:[%s304] sm:$0xff] %vm4684, %v4526
        %4686 = vst.msk [vmem:[%s304 + $0x8] sm:$0xff] %vm4684, %v4531
        %4687 = vst.msk [vmem:[%s304 + $0x10] sm:$0xff] %vm4684, %v4536
        %4688 = vst.msk [vmem:[%s304 + $0x18] sm:$0xff] %vm4684, %v4541
        %4689 = vst.msk [vmem:[%s304 + $0x20] sm:$0xff] %vm4684, %v4546
        %4690 = vst.msk [vmem:[%s304 + $0x28] sm:$0xff] %vm4684, %v4551
        %4691 = vst.msk [vmem:[%s304 + $0x30] sm:$0xff] %vm4684, %v4556
        %4692 = vst.msk [vmem:[%s304 + $0x38] sm:$0xff] %vm4684, %v4561
        %4693 = vst.msk [vmem:[%s304 + $0x40] sm:$0xff] %vm4684, %v4566
        %4694 = vst.msk [vmem:[%s304 + $0x48] sm:$0xff] %vm4684, %v4571
        %4695 = vst.msk [vmem:[%s304 + $0x50] sm:$0xff] %vm4684, %v4576
        %4696 = vst.msk [vmem:[%s304 + $0x58] sm:$0xff] %vm4684, %v4581
        %4697 = vst.msk [vmem:[%s304 + $0x60] sm:$0xff] %vm4684, %v4586
        %4698 = vst.msk [vmem:[%s304 + $0x68] sm:$0xff] %vm4684, %v4591
        %4699 = vst.msk [vmem:[%s304 + $0x70] sm:$0xff] %vm4684, %v4596
        %4700 = vst.msk [vmem:[%s304 + $0x78] sm:$0xff] %vm4684, %v4601
        %4701 = vst.msk [vmem:[%s304 + $0x80] sm:$0xff] %vm4684, %v4606
        %4702 = vst.msk [vmem:[%s304 + $0x88] sm:$0xff] %vm4684, %v4611
        %4703 = vst.msk [vmem:[%s304 + $0x90] sm:$0xff] %vm4684, %v4616
        %4704 = vst.msk [vmem:[%s304 + $0x98] sm:$0xff] %vm4684, %v4621
        %4705 = vst.msk [vmem:[%s304 + $0xa0] sm:$0xff] %vm4684, %v4626
        %4706 = vst.msk [vmem:[%s304 + $0xa8] sm:$0xff] %vm4684, %v4631
        %4707 = vst.msk [vmem:[%s304 + $0xb0] sm:$0xff] %vm4684, %v4636
        %4708 = vst.msk [vmem:[%s304 + $0xb8] sm:$0xff] %vm4684, %v4641
        %4709 = vst.msk [vmem:[%s304 + $0xc0] sm:$0xff] %vm4684, %v4646
        %4710 = vst.msk [vmem:[%s304 + $0xc8] sm:$0xff] %vm4684, %v4651
        %4711 = vst.msk [vmem:[%s304 + $0xd0] sm:$0xff] %vm4684, %v4656
        %4712 = vst.msk [vmem:[%s304 + $0xd8] sm:$0xff] %vm4684, %v4661
        %4713 = vst.msk [vmem:[%s304 + $0xe0] sm:$0xff] %vm4684, %v4666
        %4714 = vst.msk [vmem:[%s304 + $0xe8] sm:$0xff] %vm4684, %v4671
        %4715 = vst.msk [vmem:[%s304 + $0xf0] sm:$0xff] %vm4684, %v4676
        %4716 = vst.msk [vmem:[%s304 + $0xf8] sm:$0xff] %vm4684, %v4681
        %v4717 = vsel %vm4684, %v4526, 0.0
        %v4718 = vsel %vm4684, %v4531, 0.0
        %v4719 = vadd.f32 %v4717, %v4718
        %v4720 = vsel %vm4684, %v4536, 0.0
        %v4721 = vadd.f32 %v4719, %v4720
        %v4722 = vsel %vm4684, %v4541, 0.0
        %v4723 = vadd.f32 %v4721, %v4722
        %v4724 = vsel %vm4684, %v4546, 0.0
        %v4725 = vadd.f32 %v4723, %v4724
        %v4726 = vsel %vm4684, %v4551, 0.0
        %v4727 = vadd.f32 %v4725, %v4726
        %v4728 = vsel %vm4684, %v4556, 0.0
        %v4729 = vadd.f32 %v4727, %v4728
        %v4730 = vsel %vm4684, %v4561, 0.0
        %v4731 = vadd.f32 %v4729, %v4730
        %v4732 = vsel %vm4684, %v4566, 0.0
        %v4733 = vadd.f32 %v4731, %v4732
        %v4734 = vsel %vm4684, %v4571, 0.0
        %v4735 = vadd.f32 %v4733, %v4734
        %v4736 = vsel %vm4684, %v4576, 0.0
        %v4737 = vadd.f32 %v4735, %v4736
        %v4738 = vsel %vm4684, %v4581, 0.0
        %v4739 = vadd.f32 %v4737, %v4738
        %v4740 = vsel %vm4684, %v4586, 0.0
        %v4741 = vadd.f32 %v4739, %v4740
        %v4742 = vsel %vm4684, %v4591, 0.0
        %v4743 = vadd.f32 %v4741, %v4742
        %v4744 = vsel %vm4684, %v4596, 0.0
        %v4745 = vadd.f32 %v4743, %v4744
        %v4746 = vsel %vm4684, %v4601, 0.0
        %v4747 = vadd.f32 %v4745, %v4746
        %v4748 = vsel %vm4684, %v4606, 0.0
        %v4749 = vadd.f32 %v4747, %v4748
        %v4750 = vsel %vm4684, %v4611, 0.0
        %v4751 = vadd.f32 %v4749, %v4750
        %v4752 = vsel %vm4684, %v4616, 0.0
        %v4753 = vadd.f32 %v4751, %v4752
        %v4754 = vsel %vm4684, %v4621, 0.0
        %v4755 = vadd.f32 %v4753, %v4754
        %v4756 = vsel %vm4684, %v4626, 0.0
        %v4757 = vadd.f32 %v4755, %v4756
        %v4758 = vsel %vm4684, %v4631, 0.0
        %v4759 = vadd.f32 %v4757, %v4758
        %v4760 = vsel %vm4684, %v4636, 0.0
        %v4761 = vadd.f32 %v4759, %v4760
        %v4762 = vsel %vm4684, %v4641, 0.0
        %v4763 = vadd.f32 %v4761, %v4762
        %v4764 = vsel %vm4684, %v4646, 0.0
        %v4765 = vadd.f32 %v4763, %v4764
        %v4766 = vsel %vm4684, %v4651, 0.0
        %v4767 = vadd.f32 %v4765, %v4766
        %v4768 = vsel %vm4684, %v4656, 0.0
        %v4769 = vadd.f32 %v4767, %v4768
        %v4770 = vsel %vm4684, %v4661, 0.0
        %v4771 = vadd.f32 %v4769, %v4770
        %v4772 = vsel %vm4684, %v4666, 0.0
        %v4773 = vadd.f32 %v4771, %v4772
        %v4774 = vsel %vm4684, %v4671, 0.0
        %v4775 = vadd.f32 %v4773, %v4774
        %v4776 = vsel %vm4684, %v4676, 0.0
        %v4777 = vadd.f32 %v4775, %v4776
        %v4778 = vsel %vm4684, %v4681, 0.0
        %v4779 = vadd.f32 %v4777, %v4778
        %v4780 = vrot.slane %v4779, 4
        %v4781 = vadd.f32 %v4779, %v4780
        %v4782 = vrot.slane %v4781, 2
        %v4783 = vadd.f32 %v4781, %v4782
        %v4784 = vrot.slane %v4783, 1
        %v4785 = vadd.f32 %v4783, %v4784
        %vm4786 = vcmask 57344
        %4787 = vst.msk [vmem:[%s281] sm:$0x1] %vm4786, %v4785
        %v4788 = vmul.f32 %v4526, %v4526
        %v4789 = vmul.f32 %v4531, %v4531
        %v4790 = vmul.f32 %v4536, %v4536
        %v4791 = vmul.f32 %v4541, %v4541
        %v4792 = vmul.f32 %v4546, %v4546
        %v4793 = vmul.f32 %v4551, %v4551
        %v4794 = vmul.f32 %v4556, %v4556
        %v4795 = vmul.f32 %v4561, %v4561
        %v4796 = vmul.f32 %v4566, %v4566
        %v4797 = vmul.f32 %v4571, %v4571
        %v4798 = vmul.f32 %v4576, %v4576
        %v4799 = vmul.f32 %v4581, %v4581
        %v4800 = vmul.f32 %v4586, %v4586
        %v4801 = vmul.f32 %v4591, %v4591
        %v4802 = vmul.f32 %v4596, %v4596
        %v4803 = vmul.f32 %v4601, %v4601
        %v4804 = vmul.f32 %v4606, %v4606
        %v4805 = vmul.f32 %v4611, %v4611
        %v4806 = vmul.f32 %v4616, %v4616
        %v4807 = vmul.f32 %v4621, %v4621
        %v4808 = vmul.f32 %v4626, %v4626
        %v4809 = vmul.f32 %v4631, %v4631
        %v4810 = vmul.f32 %v4636, %v4636
        %v4811 = vmul.f32 %v4641, %v4641
        %v4812 = vmul.f32 %v4646, %v4646
        %v4813 = vmul.f32 %v4651, %v4651
        %v4814 = vmul.f32 %v4656, %v4656
        %v4815 = vmul.f32 %v4661, %v4661
        %v4816 = vmul.f32 %v4666, %v4666
        %v4817 = vmul.f32 %v4671, %v4671
        %v4818 = vmul.f32 %v4676, %v4676
        %v4819 = vmul.f32 %v4681, %v4681
        %v4820 = vsel %vm4684, %v4788, 0.0
        %v4821 = vsel %vm4684, %v4789, 0.0
        %v4822 = vadd.f32 %v4820, %v4821
        %v4823 = vsel %vm4684, %v4790, 0.0
        %v4824 = vadd.f32 %v4822, %v4823
        %v4825 = vsel %vm4684, %v4791, 0.0
        %v4826 = vadd.f32 %v4824, %v4825
        %v4827 = vsel %vm4684, %v4792, 0.0
        %v4828 = vadd.f32 %v4826, %v4827
        %v4829 = vsel %vm4684, %v4793, 0.0
        %v4830 = vadd.f32 %v4828, %v4829
        %v4831 = vsel %vm4684, %v4794, 0.0
        %v4832 = vadd.f32 %v4830, %v4831
        %v4833 = vsel %vm4684, %v4795, 0.0
        %v4834 = vadd.f32 %v4832, %v4833
        %v4835 = vsel %vm4684, %v4796, 0.0
        %v4836 = vadd.f32 %v4834, %v4835
        %v4837 = vsel %vm4684, %v4797, 0.0
        %v4838 = vadd.f32 %v4836, %v4837
        %v4839 = vsel %vm4684, %v4798, 0.0
        %v4840 = vadd.f32 %v4838, %v4839
        %v4841 = vsel %vm4684, %v4799, 0.0
        %v4842 = vadd.f32 %v4840, %v4841
        %v4843 = vsel %vm4684, %v4800, 0.0
        %v4844 = vadd.f32 %v4842, %v4843
        %v4845 = vsel %vm4684, %v4801, 0.0
        %v4846 = vadd.f32 %v4844, %v4845
        %v4847 = vsel %vm4684, %v4802, 0.0
        %v4848 = vadd.f32 %v4846, %v4847
        %v4849 = vsel %vm4684, %v4803, 0.0
        %v4850 = vadd.f32 %v4848, %v4849
        %v4851 = vsel %vm4684, %v4804, 0.0
        %v4852 = vadd.f32 %v4850, %v4851
        %v4853 = vsel %vm4684, %v4805, 0.0
        %v4854 = vadd.f32 %v4852, %v4853
        %v4855 = vsel %vm4684, %v4806, 0.0
        %v4856 = vadd.f32 %v4854, %v4855
        %v4857 = vsel %vm4684, %v4807, 0.0
        %v4858 = vadd.f32 %v4856, %v4857
        %v4859 = vsel %vm4684, %v4808, 0.0
        %v4860 = vadd.f32 %v4858, %v4859
        %v4861 = vsel %vm4684, %v4809, 0.0
        %v4862 = vadd.f32 %v4860, %v4861
        %v4863 = vsel %vm4684, %v4810, 0.0
        %v4864 = vadd.f32 %v4862, %v4863
        %v4865 = vsel %vm4684, %v4811, 0.0
        %v4866 = vadd.f32 %v4864, %v4865
        %v4867 = vsel %vm4684, %v4812, 0.0
        %v4868 = vadd.f32 %v4866, %v4867
        %v4869 = vsel %vm4684, %v4813, 0.0
        %v4870 = vadd.f32 %v4868, %v4869
        %v4871 = vsel %vm4684, %v4814, 0.0
        %v4872 = vadd.f32 %v4870, %v4871
        %v4873 = vsel %vm4684, %v4815, 0.0
        %v4874 = vadd.f32 %v4872, %v4873
        %v4875 = vsel %vm4684, %v4816, 0.0
        %v4876 = vadd.f32 %v4874, %v4875
        %v4877 = vsel %vm4684, %v4817, 0.0
        %v4878 = vadd.f32 %v4876, %v4877
        %v4879 = vsel %vm4684, %v4818, 0.0
        %v4880 = vadd.f32 %v4878, %v4879
        %v4881 = vsel %vm4684, %v4819, 0.0
        %v4882 = vadd.f32 %v4880, %v4881
        %v4883 = vrot.slane %v4882, 4
        %v4884 = vadd.f32 %v4882, %v4883
        %v4885 = vrot.slane %v4884, 2
        %v4886 = vadd.f32 %v4884, %v4885
        %v4887 = vrot.slane %v4886, 1
        %v4888 = vadd.f32 %v4886, %v4887
        %4889 = vst.msk [vmem:[%s281 + $0x1] sm:$0x1] %vm4786, %v4888
        %v4890 = vld [vmem:[%s2] sm:$0xf]
        %v4891 = vld [vmem:[%s3] sm:$0x1]
        %v4893 = vlaneseq
        %v4894 = vshrl.u32 %v4893, 7
        %v4895 = vsub.s32 0, %v4894
        %v4896 = vrot.slane %v4891, %v4895
        %4898 = vrot.lane.b32.xlu0 %v4312, 76
        %v4899 = vpop.permute.xlu0 %4898
        %4900 = vrot.lane.b32.xlu0 %v4313, 76
        %v4901 = vpop.permute.xlu0 %4900
        %4902 = vrot.lane.b32.xlu0 %v4314, 76
        %v4903 = vpop.permute.xlu0 %4902
        %4904 = vrot.lane.b32.xlu0 %v4315, 76
        %v4905 = vpop.permute.xlu0 %4904
        %4906 = vrot.lane.b32.xlu0 %v4316, 76
        %v4907 = vpop.permute.xlu0 %4906
        %4908 = vrot.lane.b32.xlu0 %v4317, 76
        %v4909 = vpop.permute.xlu0 %4908
        %4910 = vrot.lane.b32.xlu0 %v4318, 76
        %v4911 = vpop.permute.xlu0 %4910
        %4912 = vrot.lane.b32.xlu0 %v4319, 76
        %v4913 = vpop.permute.xlu0 %4912
        %4914 = vrot.lane.b32.xlu0 %v4320, 76
        %v4915 = vpop.permute.xlu0 %4914
        %4916 = vrot.lane.b32.xlu0 %v4321, 76
        %v4917 = vpop.permute.xlu0 %4916
        %4918 = vrot.lane.b32.xlu0 %v4322, 76
        %v4919 = vpop.permute.xlu0 %4918
        %4920 = vrot.lane.b32.xlu0 %v4323, 76
        %v4921 = vpop.permute.xlu0 %4920
        %4922 = vrot.lane.b32.xlu0 %v4324, 76
        %v4923 = vpop.permute.xlu0 %4922
        %4924 = vrot.lane.b32.xlu0 %v4325, 76
        %v4925 = vpop.permute.xlu0 %4924
        %4926 = vrot.lane.b32.xlu0 %v4326, 76
        %v4927 = vpop.permute.xlu0 %4926
        %4928 = vrot.lane.b32.xlu0 %v4327, 76
        %v4929 = vpop.permute.xlu0 %4928
        %4930 = vrot.lane.b32.xlu0 %v4328, 76
        %v4931 = vpop.permute.xlu0 %4930
        %4932 = vrot.lane.b32.xlu0 %v4329, 76
        %v4933 = vpop.permute.xlu0 %4932
        %4934 = vrot.lane.b32.xlu0 %v4330, 76
        %v4935 = vpop.permute.xlu0 %4934
        %4936 = vrot.lane.b32.xlu0 %v4331, 76
        %v4937 = vpop.permute.xlu0 %4936
        %4938 = vrot.lane.b32.xlu0 %v4332, 76
        %v4939 = vpop.permute.xlu0 %4938
        %4940 = vrot.lane.b32.xlu0 %v4333, 76
        %v4941 = vpop.permute.xlu0 %4940
        %4942 = vrot.lane.b32.xlu0 %v4334, 76
        %v4943 = vpop.permute.xlu0 %4942
        %4944 = vrot.lane.b32.xlu0 %v4335, 76
        %v4945 = vpop.permute.xlu0 %4944
        %4946 = vrot.lane.b32.xlu0 %v4336, 76
        %v4947 = vpop.permute.xlu0 %4946
        %4948 = vrot.lane.b32.xlu0 %v4337, 76
        %v4949 = vpop.permute.xlu0 %4948
        %4950 = vrot.lane.b32.xlu0 %v4338, 76
        %v4951 = vpop.permute.xlu0 %4950
        %4952 = vrot.lane.b32.xlu0 %v4339, 76
        %v4953 = vpop.permute.xlu0 %4952
        %4954 = vrot.lane.b32.xlu0 %v4340, 76
        %v4955 = vpop.permute.xlu0 %4954
        %4956 = vrot.lane.b32.xlu0 %v4341, 76
        %v4957 = vpop.permute.xlu0 %4956
        %4958 = vrot.lane.b32.xlu0 %v4342, 76
        %v4959 = vpop.permute.xlu0 %4958
        %4960 = vrot.lane.b32.xlu0 %v4343, 76
        %v4961 = vpop.permute.xlu0 %4960
        %v4962 = vsel %vm443, %v4899, 0
        %v4964 = vsel %vm443, %v4901, 0
        %v4966 = vsel %vm443, %v4903, 0
        %v4968 = vsel %vm443, %v4905, 0
        %v4970 = vsel %vm443, %v4907, 0
        %v4972 = vsel %vm443, %v4909, 0
        %v4974 = vsel %vm443, %v4911, 0
        %v4976 = vsel %vm443, %v4913, 0
        %v4978 = vsel %vm443, %v4915, 0
        %v4980 = vsel %vm443, %v4917, 0
        %v4982 = vsel %vm443, %v4919, 0
        %v4984 = vsel %vm443, %v4921, 0
        %v4986 = vsel %vm443, %v4923, 0
        %v4988 = vsel %vm443, %v4925, 0
        %v4990 = vsel %vm443, %v4927, 0
        %v4992 = vsel %vm443, %v4929, 0
        %v4994 = vsel %vm443, %v4931, 0
        %v4996 = vsel %vm443, %v4933, 0
        %v4998 = vsel %vm443, %v4935, 0
        %v5000 = vsel %vm443, %v4937, 0
        %v5002 = vsel %vm443, %v4939, 0
        %v5004 = vsel %vm443, %v4941, 0
        %v5006 = vsel %vm443, %v4943, 0
        %v5008 = vsel %vm443, %v4945, 0
        %v5010 = vsel %vm443, %v4947, 0
        %v5012 = vsel %vm443, %v4949, 0
        %v5014 = vsel %vm443, %v4951, 0
        %v5016 = vsel %vm443, %v4953, 0
        %v5018 = vsel %vm443, %v4955, 0
        %v5020 = vsel %vm443, %v4957, 0
        %v5022 = vsel %vm443, %v4959, 0
        %v5024 = vsel %vm443, %v4961, 0
        %v5027 = vsel %vm4455, %v4890, 0
        %5029 = vmatprep.subr.mxu0 0.0
        %5030 = vmatpush1.msra.mxu0 %v5027
        %5031 = vmatprep.subr.mxu0 0.0
        %5032 = vmatpush1.msra.mxu0 0.0
        %5033 = vmatprep.subr.mxu0 0.0
        %5034 = vmatpush1.msra.mxu0 0.0
        %5035 = vmatprep.subr.mxu0 0.0
        %5036 = vmatpush1.msra.mxu0 0.0
        %5037 = vmatprep.subr.mxu0 0.0
        %5038 = vmatpush1.msra.mxu0 0.0
        %5039 = vmatprep.subr.mxu0 0.0
        %5040 = vmatpush1.msra.mxu0 0.0
        %5041 = vmatprep.subr.mxu0 0.0
        %5042 = vmatpush1.msra.mxu0 0.0
        %5043 = vmatprep.subr.mxu0 0.0
        %5044 = vmatpush1.msra.mxu0 0.0
        %5045 = vmatprep.subr.mxu0 0.0
        %5046 = vmatpush1.msra.mxu0 0.0
        %5047 = vmatprep.subr.mxu0 0.0
        %5048 = vmatpush1.msra.mxu0 0.0
        %5049 = vmatprep.subr.mxu0 0.0
        %5050 = vmatpush1.msra.mxu0 0.0
        %5051 = vmatprep.subr.mxu0 0.0
        %5052 = vmatpush1.msra.mxu0 0.0
        %5053 = vmatprep.subr.mxu0 0.0
        %5054 = vmatpush1.msra.mxu0 0.0
        %5055 = vmatprep.subr.mxu0 0.0
        %5056 = vmatpush1.msra.mxu0 0.0
        %5057 = vmatprep.subr.mxu0 0.0
        %5058 = vmatpush1.msra.mxu0 0.0
        %5059 = vmatprep.subr.mxu0 0.0
        %5060 = vmatpush1.msra.mxu0 0.0
        %5061 = vmatprep.subr.mxu0 0.0
        %5062 = vmatpush1.msra.mxu0 0.0
        %5063 = vmatprep.subr.mxu0 0.0
        %5064 = vmatpush1.msra.mxu0 0.0
        %5065 = vmatprep.subr.mxu0 0.0
        %5066 = vmatpush1.msra.mxu0 0.0
        %5067 = vmatprep.subr.mxu0 0.0
        %5068 = vmatpush1.msra.mxu0 0.0
        %5069 = vmatprep.subr.mxu0 0.0
        %5070 = vmatpush1.msra.mxu0 0.0
        %5071 = vmatprep.subr.mxu0 0.0
        %5072 = vmatpush1.msra.mxu0 0.0
        %5073 = vmatprep.subr.mxu0 0.0
        %5074 = vmatpush1.msra.mxu0 0.0
        %5075 = vmatprep.subr.mxu0 0.0
        %5076 = vmatpush1.msra.mxu0 0.0
        %5077 = vmatprep.subr.mxu0 0.0
        %5078 = vmatpush1.msra.mxu0 0.0
        %5079 = vmatprep.subr.mxu0 0.0
        %5080 = vmatpush1.msra.mxu0 0.0
        %5081 = vmatprep.subr.mxu0 0.0
        %5082 = vmatpush1.msra.mxu0 0.0
        %5083 = vmatprep.subr.mxu0 0.0
        %5084 = vmatpush1.msra.mxu0 0.0
        %5085 = vmatprep.subr.mxu0 0.0
        %5086 = vmatpush1.msra.mxu0 0.0
        %5087 = vmatprep.subr.mxu0 0.0
        %5088 = vmatpush1.msra.mxu0 0.0
        %5089 = vmatprep.subr.mxu0 0.0
        %5090 = vmatpush1.msra.mxu0 0.0
        %5091 = vmatprep.subr.mxu0 0.0
        %5092 = vmatpush1.msra.mxu0 0.0
        %5093 = vmatprep.mubr.f32.mxu0 0.0
        %5094 = vmatmul.mubr.f32.gmra.mrb[0].mxu0 %v4962
        %v5095 = vpop.f32.mrb[0].mxu0
        %v5096 = vadd.f32 %v4896, %v5095
        %v5097 = vpop.f32.mrb[0].mxu0
        %5098 = vmatprep.mubr.f32.mxu0 0.0
        %5099 = vmatmul.mubr.f32.gmra.mrb[0].mxu0 %v4964
        %v5100 = vpop.f32.mrb[0].mxu0
        %v5101 = vadd.f32 %v4896, %v5100
        %v5102 = vpop.f32.mrb[0].mxu0
        %5103 = vmatprep.mubr.f32.mxu0 0.0
        %5104 = vmatmul.mubr.f32.gmra.mrb[0].mxu0 %v4966
        %v5105 = vpop.f32.mrb[0].mxu0
        %v5106 = vadd.f32 %v4896, %v5105
        %v5107 = vpop.f32.mrb[0].mxu0
        %5108 = vmatprep.mubr.f32.mxu0 0.0
        %5109 = vmatmul.mubr.f32.gmra.mrb[0].mxu0 %v4968
        %v5110 = vpop.f32.mrb[0].mxu0
        %v5111 = vadd.f32 %v4896, %v5110
        %v5112 = vpop.f32.mrb[0].mxu0
        %5113 = vmatprep.mubr.f32.mxu0 0.0
        %5114 = vmatmul.mubr.f32.gmra.mrb[0].mxu0 %v4970
        %v5115 = vpop.f32.mrb[0].mxu0
        %v5116 = vadd.f32 %v4896, %v5115
        %v5117 = vpop.f32.mrb[0].mxu0
        %5118 = vmatprep.mubr.f32.mxu0 0.0
        %5119 = vmatmul.mubr.f32.gmra.mrb[0].mxu0 %v4972
        %v5120 = vpop.f32.mrb[0].mxu0
        %v5121 = vadd.f32 %v4896, %v5120
        %v5122 = vpop.f32.mrb[0].mxu0
        %5123 = vmatprep.mubr.f32.mxu0 0.0
        %5124 = vmatmul.mubr.f32.gmra.mrb[0].mxu0 %v4974
        %v5125 = vpop.f32.mrb[0].mxu0
        %v5126 = vadd.f32 %v4896, %v5125
        %v5127 = vpop.f32.mrb[0].mxu0
        %5128 = vmatprep.mubr.f32.mxu0 0.0
        %5129 = vmatmul.mubr.f32.gmra.mrb[0].mxu0 %v4976
        %v5130 = vpop.f32.mrb[0].mxu0
        %v5131 = vadd.f32 %v4896, %v5130
        %v5132 = vpop.f32.mrb[0].mxu0
        %5133 = vmatprep.mubr.f32.mxu0 0.0
        %5134 = vmatmul.mubr.f32.gmra.mrb[0].mxu0 %v4978
        %v5135 = vpop.f32.mrb[0].mxu0
        %v5136 = vadd.f32 %v4896, %v5135
        %v5137 = vpop.f32.mrb[0].mxu0
        %5138 = vmatprep.mubr.f32.mxu0 0.0
        %5139 = vmatmul.mubr.f32.gmra.mrb[0].mxu0 %v4980
        %v5140 = vpop.f32.mrb[0].mxu0
        %v5141 = vadd.f32 %v4896, %v5140
        %v5142 = vpop.f32.mrb[0].mxu0
        %5143 = vmatprep.mubr.f32.mxu0 0.0
        %5144 = vmatmul.mubr.f32.gmra.mrb[0].mxu0 %v4982
        %v5145 = vpop.f32.mrb[0].mxu0
        %v5146 = vadd.f32 %v4896, %v5145
        %v5147 = vpop.f32.mrb[0].mxu0
        %5148 = vmatprep.mubr.f32.mxu0 0.0
        %5149 = vmatmul.mubr.f32.gmra.mrb[0].mxu0 %v4984
        %v5150 = vpop.f32.mrb[0].mxu0
        %v5151 = vadd.f32 %v4896, %v5150
        %v5152 = vpop.f32.mrb[0].mxu0
        %5153 = vmatprep.mubr.f32.mxu0 0.0
        %5154 = vmatmul.mubr.f32.gmra.mrb[0].mxu0 %v4986
        %v5155 = vpop.f32.mrb[0].mxu0
        %v5156 = vadd.f32 %v4896, %v5155
        %v5157 = vpop.f32.mrb[0].mxu0
        %5158 = vmatprep.mubr.f32.mxu0 0.0
        %5159 = vmatmul.mubr.f32.gmra.mrb[0].mxu0 %v4988
        %v5160 = vpop.f32.mrb[0].mxu0
        %v5161 = vadd.f32 %v4896, %v5160
        %v5162 = vpop.f32.mrb[0].mxu0
        %5163 = vmatprep.mubr.f32.mxu0 0.0
        %5164 = vmatmul.mubr.f32.gmra.mrb[0].mxu0 %v4990
        %v5165 = vpop.f32.mrb[0].mxu0
        %v5166 = vadd.f32 %v4896, %v5165
        %v5167 = vpop.f32.mrb[0].mxu0
        %5168 = vmatprep.mubr.f32.mxu0 0.0
        %5169 = vmatmul.mubr.f32.gmra.mrb[0].mxu0 %v4992
        %v5170 = vpop.f32.mrb[0].mxu0
        %v5171 = vadd.f32 %v4896, %v5170
        %v5172 = vpop.f32.mrb[0].mxu0
        %5173 = vmatprep.mubr.f32.mxu0 0.0
        %5174 = vmatmul.mubr.f32.gmra.mrb[0].mxu0 %v4994
        %v5175 = vpop.f32.mrb[0].mxu0
        %v5176 = vadd.f32 %v4896, %v5175
        %v5177 = vpop.f32.mrb[0].mxu0
        %5178 = vmatprep.mubr.f32.mxu0 0.0
        %5179 = vmatmul.mubr.f32.gmra.mrb[0].mxu0 %v4996
        %v5180 = vpop.f32.mrb[0].mxu0
        %v5181 = vadd.f32 %v4896, %v5180
        %v5182 = vpop.f32.mrb[0].mxu0
        %5183 = vmatprep.mubr.f32.mxu0 0.0
        %5184 = vmatmul.mubr.f32.gmra.mrb[0].mxu0 %v4998
        %v5185 = vpop.f32.mrb[0].mxu0
        %v5186 = vadd.f32 %v4896, %v5185
        %v5187 = vpop.f32.mrb[0].mxu0
        %5188 = vmatprep.mubr.f32.mxu0 0.0
        %5189 = vmatmul.mubr.f32.gmra.mrb[0].mxu0 %v5000
        %v5190 = vpop.f32.mrb[0].mxu0
        %v5191 = vadd.f32 %v4896, %v5190
        %v5192 = vpop.f32.mrb[0].mxu0
        %5193 = vmatprep.mubr.f32.mxu0 0.0
        %5194 = vmatmul.mubr.f32.gmra.mrb[0].mxu0 %v5002
        %v5195 = vpop.f32.mrb[0].mxu0
        %v5196 = vadd.f32 %v4896, %v5195
        %v5197 = vpop.f32.mrb[0].mxu0
        %5198 = vmatprep.mubr.f32.mxu0 0.0
        %5199 = vmatmul.mubr.f32.gmra.mrb[0].mxu0 %v5004
        %v5200 = vpop.f32.mrb[0].mxu0
        %v5201 = vadd.f32 %v4896, %v5200
        %v5202 = vpop.f32.mrb[0].mxu0
        %5203 = vmatprep.mubr.f32.mxu0 0.0
        %5204 = vmatmul.mubr.f32.gmra.mrb[0].mxu0 %v5006
        %v5205 = vpop.f32.mrb[0].mxu0
        %v5206 = vadd.f32 %v4896, %v5205
        %v5207 = vpop.f32.mrb[0].mxu0
        %5208 = vmatprep.mubr.f32.mxu0 0.0
        %5209 = vmatmul.mubr.f32.gmra.mrb[0].mxu0 %v5008
        %v5210 = vpop.f32.mrb[0].mxu0
        %v5211 = vadd.f32 %v4896, %v5210
        %v5212 = vpop.f32.mrb[0].mxu0
        %5213 = vmatprep.mubr.f32.mxu0 0.0
        %5214 = vmatmul.mubr.f32.gmra.mrb[0].mxu0 %v5010
        %v5215 = vpop.f32.mrb[0].mxu0
        %v5216 = vadd.f32 %v4896, %v5215
        %v5217 = vpop.f32.mrb[0].mxu0
        %5218 = vmatprep.mubr.f32.mxu0 0.0
        %5219 = vmatmul.mubr.f32.gmra.mrb[0].mxu0 %v5012
        %v5220 = vpop.f32.mrb[0].mxu0
        %v5221 = vadd.f32 %v4896, %v5220
        %v5222 = vpop.f32.mrb[0].mxu0
        %5223 = vmatprep.mubr.f32.mxu0 0.0
        %5224 = vmatmul.mubr.f32.gmra.mrb[0].mxu0 %v5014
        %v5225 = vpop.f32.mrb[0].mxu0
        %v5226 = vadd.f32 %v4896, %v5225
        %v5227 = vpop.f32.mrb[0].mxu0
        %5228 = vmatprep.mubr.f32.mxu0 0.0
        %5229 = vmatmul.mubr.f32.gmra.mrb[0].mxu0 %v5016
        %v5230 = vpop.f32.mrb[0].mxu0
        %v5231 = vadd.f32 %v4896, %v5230
        %v5232 = vpop.f32.mrb[0].mxu0
        %5233 = vmatprep.mubr.f32.mxu0 0.0
        %5234 = vmatmul.mubr.f32.gmra.mrb[0].mxu0 %v5018
        %v5235 = vpop.f32.mrb[0].mxu0
        %v5236 = vadd.f32 %v4896, %v5235
        %v5237 = vpop.f32.mrb[0].mxu0
        %5238 = vmatprep.mubr.f32.mxu0 0.0
        %5239 = vmatmul.mubr.f32.gmra.mrb[0].mxu0 %v5020
        %v5240 = vpop.f32.mrb[0].mxu0
        %v5241 = vadd.f32 %v4896, %v5240
        %v5242 = vpop.f32.mrb[0].mxu0
        %5243 = vmatprep.mubr.f32.mxu0 0.0
        %5244 = vmatmul.mubr.f32.gmra.mrb[0].mxu0 %v5022
        %v5245 = vpop.f32.mrb[0].mxu0
        %v5246 = vadd.f32 %v4896, %v5245
        %v5247 = vpop.f32.mrb[0].mxu0
        %5248 = vmatprep.mubr.f32.mxu0 0.0
        %5249 = vmatmul.mubr.f32.gmra.mrb[0].mxu0 %v5024
        %v5250 = vpop.f32.mrb[0].mxu0
        %v5251 = vadd.f32 %v4896, %v5250
        %v5252 = vpop.f32.mrb[0].mxu0
        %5253 = vdwg.mxu0
        %5254 = vst.msk [vmem:[%s316] sm:$0xff] %vm4684, %v5096
        %5255 = vst.msk [vmem:[%s316 + $0x8] sm:$0xff] %vm4684, %v5101
        %5256 = vst.msk [vmem:[%s316 + $0x10] sm:$0xff] %vm4684, %v5106
        %5257 = vst.msk [vmem:[%s316 + $0x18] sm:$0xff] %vm4684, %v5111
        %5258 = vst.msk [vmem:[%s316 + $0x20] sm:$0xff] %vm4684, %v5116
        %5259 = vst.msk [vmem:[%s316 + $0x28] sm:$0xff] %vm4684, %v5121
        %5260 = vst.msk [vmem:[%s316 + $0x30] sm:$0xff] %vm4684, %v5126
        %5261 = vst.msk [vmem:[%s316 + $0x38] sm:$0xff] %vm4684, %v5131
        %5262 = vst.msk [vmem:[%s316 + $0x40] sm:$0xff] %vm4684, %v5136
        %5263 = vst.msk [vmem:[%s316 + $0x48] sm:$0xff] %vm4684, %v5141
        %5264 = vst.msk [vmem:[%s316 + $0x50] sm:$0xff] %vm4684, %v5146
        %5265 = vst.msk [vmem:[%s316 + $0x58] sm:$0xff] %vm4684, %v5151
        %5266 = vst.msk [vmem:[%s316 + $0x60] sm:$0xff] %vm4684, %v5156
        %5267 = vst.msk [vmem:[%s316 + $0x68] sm:$0xff] %vm4684, %v5161
        %5268 = vst.msk [vmem:[%s316 + $0x70] sm:$0xff] %vm4684, %v5166
        %5269 = vst.msk [vmem:[%s316 + $0x78] sm:$0xff] %vm4684, %v5171
        %5270 = vst.msk [vmem:[%s316 + $0x80] sm:$0xff] %vm4684, %v5176
        %5271 = vst.msk [vmem:[%s316 + $0x88] sm:$0xff] %vm4684, %v5181
        %5272 = vst.msk [vmem:[%s316 + $0x90] sm:$0xff] %vm4684, %v5186
        %5273 = vst.msk [vmem:[%s316 + $0x98] sm:$0xff] %vm4684, %v5191
        %5274 = vst.msk [vmem:[%s316 + $0xa0] sm:$0xff] %vm4684, %v5196
        %5275 = vst.msk [vmem:[%s316 + $0xa8] sm:$0xff] %vm4684, %v5201
        %5276 = vst.msk [vmem:[%s316 + $0xb0] sm:$0xff] %vm4684, %v5206
        %5277 = vst.msk [vmem:[%s316 + $0xb8] sm:$0xff] %vm4684, %v5211
        %5278 = vst.msk [vmem:[%s316 + $0xc0] sm:$0xff] %vm4684, %v5216
        %5279 = vst.msk [vmem:[%s316 + $0xc8] sm:$0xff] %vm4684, %v5221
        %5280 = vst.msk [vmem:[%s316 + $0xd0] sm:$0xff] %vm4684, %v5226
        %5281 = vst.msk [vmem:[%s316 + $0xd8] sm:$0xff] %vm4684, %v5231
        %5282 = vst.msk [vmem:[%s316 + $0xe0] sm:$0xff] %vm4684, %v5236
        %5283 = vst.msk [vmem:[%s316 + $0xe8] sm:$0xff] %vm4684, %v5241
        %5284 = vst.msk [vmem:[%s316 + $0xf0] sm:$0xff] %vm4684, %v5246
        %5285 = vst.msk [vmem:[%s316 + $0xf8] sm:$0xff] %vm4684, %v5251
        %s5286 = smul.u32 %s25, 2
        %s5287 = sadd.s32 %s5286, %s26
        %s5288 = smul.u32 32, %s5287
        %p5289 = scmp.lt.s32.totalorder %s5288, 127
        %s5290 = scalar_select %p5289, %s5288, 127
        %s5291 = smul.addr %s5290, 8
        %s5292 = scalar_lea.vmem %s4, %s5291
        %s5293 = sand.u32 %s164, 1
        %s5294 = scalar_lea.sflag [#allocation4], %s5293
        %s5295 = sand.u32 %s164, 1
        %s5296 = smul.addr %s5295, 2
        %s5297 = scalar_lea.vmem [#allocation3], %s5296
        %s5298 = smul.u32 %s25, 2
        %s5299 = sadd.s32 %s5298, %s26
        %s5300 = smul.u32 32, %s5299
        %p5301 = scmp.lt.s32.totalorder %s5300, 127
        %s5302 = scalar_select %p5301, %s5300, 127
        %s5303 = smul.addr %s5302, 8
        %s5304 = scalar_lea.vmem %s6, %s5303
        // Predicated region
        $region37: #{tpu_custom_call.1} parent=35 // pred_check
          %p5305 = pneg %p144
        $region38: #{tpu_custom_call.1} parent=35 // pred_check_branch
          %5307 = sbr.rel (%p5305) target = $region40
        $region39: #{tpu_custom_call.1} parent=35 // pred_region
          %s5308 = smul.u32 %s25, 2
          %s5309 = sadd.s32 %s5308, %s26
          %s5310 = smul.u32 32, %s5309
        $region40: #{tpu_custom_call.1} parent=35 // pred_fallthru
          _
        // Predicated region
        $region41: #{tpu_custom_call.1} parent=35 // pred_check
          %p5311 = pneg %p174
        $region42: #{tpu_custom_call.1} parent=35 // pred_check_branch
          %5313 = sbr.rel (%p5311) target = $region44
        $region43: #{tpu_custom_call.1} parent=35 // pred_region
          %s5314 = smul.u32 %s25, 2
          %s5315 = sadd.s32 %s5314, %s26
          %s5317 = ssub.s32 32, 32
          %5318 = vsyncadd %s5294, %s5317
          %s5319 = smul.addr %s5315, 32
          %s5320 = scalar_lea.hbm %s5, %s5319
          %s5322 = sshll.u32 %s5297, 4
          %s5323 = int_to_ptr.vmem [resolvable:$true] %s5322
          %5325 = dma.vmem_to_hbm [thread:$0]  %s5323, 32, %s5320, %s5294
        $region44: #{tpu_custom_call.1} parent=35 // pred_fallthru
          _
        // Predicated region
        $region45: #{tpu_custom_call.1} parent=35 // pred_check
          %p5326 = pneg %p204
        $region46: #{tpu_custom_call.1} parent=35 // pred_check_branch
          %5328 = sbr.rel (%p5326) target = $region48
        $region47: #{tpu_custom_call.1} parent=35 // pred_region
          %s5329 = smul.u32 %s25, 2
          %s5330 = sadd.s32 %s5329, %s26
          %s5331 = smul.u32 32, %s5330
        $region48: #{tpu_custom_call.1} parent=35 // pred_fallthru
          _
      $region36: #{tpu_custom_call.1} parent=5 // pred_fallthru
        _
      %p5332 = scmp.le.s32.totalorder 2, %s16
      // Predicated region
      $region49: #{tpu_custom_call.1} parent=5 // pred_check
        %p5333 = pneg %p5332
      $region50: #{tpu_custom_call.1} parent=5 // pred_check_branch
        %5335 = sbr.rel (%p5333) target = $region52
      $region51: #{tpu_custom_call.1} parent=5 // pred_region
        %s5336 = ssub.s32 %s16, 2
        // Predicated region
        $region53: #{tpu_custom_call.1} parent=51 // pred_check
          %p5337 = pneg %p150
        $region54: #{tpu_custom_call.1} parent=51 // pred_check_branch
          %5339 = sbr.rel (%p5337) target = $region56
        $region55: #{tpu_custom_call.1} parent=51 // pred_region
          %s5340 = smul.u32 %s27, 2
          %s5341 = sadd.s32 %s5340, %s28
          %s5342 = smul.u32 32, %s5341
          %p5343 = scmp.lt.s32.totalorder %s5342, 127
          %s5344 = scalar_select %p5343, %s5342, 127
          %s5345 = smul.addr %s5344, 8
          %s5346 = scalar_lea.vmem %s4, %s5345
        $region56: #{tpu_custom_call.1} parent=51 // pred_fallthru
          _
        // Predicated region
        $region57: #{tpu_custom_call.1} parent=51 // pred_check
          %p5347 = pneg %p180
        $region58: #{tpu_custom_call.1} parent=51 // pred_check_branch
          %5349 = sbr.rel (%p5347) target = $region60
        $region59: #{tpu_custom_call.1} parent=51 // pred_region
          %s5350 = sand.u32 %s165, 1
          %s5351 = scalar_lea.sflag [#allocation4], %s5350
          %s5352 = sand.u32 %s165, 1
          %s5353 = smul.addr %s5352, 2
          %s5354 = scalar_lea.vmem [#allocation3], %s5353
          %5355 = dma.done %s5351, 32
        $region60: #{tpu_custom_call.1} parent=51 // pred_fallthru
          _
        // Predicated region
        $region61: #{tpu_custom_call.1} parent=51 // pred_check
          %p5356 = pneg %p210
        $region62: #{tpu_custom_call.1} parent=51 // pred_check_branch
          %5358 = sbr.rel (%p5356) target = $region64
        $region63: #{tpu_custom_call.1} parent=51 // pred_region
          %s5359 = smul.u32 %s27, 2
          %s5360 = sadd.s32 %s5359, %s28
          %s5361 = smul.u32 32, %s5360
          %p5362 = scmp.lt.s32.totalorder %s5361, 127
          %s5363 = scalar_select %p5362, %s5361, 127
          %s5364 = smul.addr %s5363, 8
          %s5365 = scalar_lea.vmem %s6, %s5364
        $region64: #{tpu_custom_call.1} parent=51 // pred_fallthru
          _
      $region52: #{tpu_custom_call.1} parent=5 // pred_fallthru
        _
    $region6: #{tpu_custom_call.1} parent=1 // loop_footer
      %s20 = sadd.s32 1, %s16
    $region7: #{tpu_custom_call.1} parent=1 // loop_footer_branch
      %15 = sbr.rel target = $region3
    $region8: #{tpu_custom_call.1} parent=1 // loop_exit
      _
    %5366 = vsyncpa [#allocation4], 1
    %s5367 = scalar_lea.sflag [#allocation4], 1
    %5368 = vsyncpa %s5367, 1

</llo_original>
